<compile_context>
chip_gen: v6e
topology: v6e:2x2x1
jax: 0.10.0
libtpu: 0.0.40
codegen_flags: <defaults>
</compile_context>

<pallas_src>
import math
import functools
import numpy as np
import jax
import jax.numpy as jnp
from jax import lax
from jax.experimental import pallas as pl
from jax.experimental.pallas import tpu as pltpu


# ---------------------------------------------------------------------------
# The single fused Pallas kernel (one grid step == imgs_per_step images)
# ---------------------------------------------------------------------------
def _mfa_kernel(x_ref, wbd_ref, bbd_ref, w15_ref, b15_ref,
                aup_ref, adn_ref, w2_ref, b2_ref, w3_ref, b3_ref, o_ref):
    f32 = jnp.float32
    cdt = wbd_ref.dtype                     # matmul operand (compute) dtype (bf16 default)

    # ---- stage 1: c11..c14 + channel concat == one block-diagonal 1x1 conv (+BN+ReLU)
    h0 = jnp.dot(x_ref[...], wbd_ref[...], preferred_element_type=f32)
    h0 = jnp.maximum(h0 + bbd_ref[...], 0.0)                       # (M, W*4oc) f32

    # ---- stage 2: c15 (1x1 conv+BN+ReLU); s1 stays resident in registers/VMEM
    s1 = jnp.dot(h0.astype(cdt), w15_ref[...], preferred_element_type=f32)
    s1 = jnp.maximum(s1 + b15_ref[...], 0.0)                       # (M, W*oc) f32

    a_up = aup_ref[...]                                            # (M, M) 0/1, cdt
    a_dn = adn_ref[...]

    def conv3x3(s_f32, w_ref, b_ref):
        # Vertical taps: two tiny, aligned left matmuls with precomputed shift
        # matrices (zeros at every per-image boundary row -> SAME padding, and
        # correct when several images share one block).  Horizontal taps are
        # block-banded inside the (3*Lout, Lout) weight.  The three dy taps are
        # fused into ONE K = 3*Lout matmul (no misaligned sublane slices, no
        # VMEM scratch round trip).
        s = s_f32.astype(cdt)
        up = jnp.dot(a_up, s, preferred_element_type=f32).astype(cdt)   # row above (exact)
        dn = jnp.dot(a_dn, s, preferred_element_type=f32).astype(cdt)   # row below (exact)
        slab = jnp.concatenate([up, s, dn], axis=1)                     # (M, 3*Lout)
        return jnp.dot(slab, w_ref[...], preferred_element_type=f32) + b_ref[...]

    # ---- stage 3: c2 (3x3 conv+BN), +s1 residual, ReLU
    s2 = jnp.maximum(conv3x3(s1, w2_ref, b2_ref) + s1, 0.0)
    # ---- stage 4: c3 (3x3 conv+BN), +s2+s1 residuals, ReLU
    out = jnp.maximum(conv3x3(s2, w3_ref, b3_ref) + s2 + s1, 0.0)
    o_ref[...] = out.astype(o_ref.dtype)


def _mfa_pallas(xw, wbd, bbd, w15, b15, a_up, a_dn, w2, b2, w3, b3,
                *, B, H, imgs_per_step, single_buffer_weights=True):
    """xw: (B*H, W*Cin_tot); all other args pre-packed host-side (pack_mfa_params)."""
    rows, Lin = xw.shape
    M = imgs_per_step * H
    assert rows == B * H and rows % M == 0, (rows, B, H, M)
    assert M % 8 == 0, "rows per grid step must be a multiple of 8 sublanes"
    assert a_up.shape == (M, M), (a_up.shape, M)
    Lmid = wbd.shape[1]
    Lout = w15.shape[1]
    n_steps = rows // M

    def csp(shape):
        # Constant blocks gain nothing from double buffering; single-buffer them
        # to halve their VMEM footprint (matters on v7x's 64 MiB VMEM).
        if single_buffer_weights:
            return pl.BlockSpec(shape, lambda b: (0, 0), pipeline_mode=pl.Buffered(1))
        return pl.BlockSpec(shape, lambda b: (0, 0))

    # Advisory cost estimate: weight bytes dominate; flops are tiny.
    flops = n_steps * (2 * M * Lin * Lmid + 2 * M * Lmid * Lout
                       + 2 * (4 * M * M * Lout + 6 * M * Lout * Lout))
    bytes_accessed = int(
        sum(int(a.size) * a.dtype.itemsize
            for a in (xw, wbd, bbd, w15, b15, a_up, a_dn, w2, b2, w3, b3))
        + rows * Lout * 4)

    return pl.pallas_call(
        _mfa_kernel,
        out_shape=jax.ShapeDtypeStruct((rows, Lout), jnp.float32),
        grid_spec=pltpu.PrefetchScalarGridSpec(
            num_scalar_prefetch=0,
            grid=(n_steps,),                                   # one step per image block
            in_specs=[
                pl.BlockSpec((M, Lin), lambda b: (b, 0)),      # activations (pipelined)
                csp((Lin, Lmid)),                              # Wbd (c11..c14 block-diag)
                csp((1, Lmid)),                                # bbd
                csp((Lmid, Lout)),                             # W15
                csp((1, Lout)),                                # b15
                csp((M, M)),                                   # vertical shift up
                csp((M, M)),                                   # vertical shift down
                csp((3 * Lout, Lout)),                         # c2 fused-K banded weight
                csp((1, Lout)),                                # b2
                csp((3 * Lout, Lout)),                         # c3 fused-K banded weight
                csp((1, Lout)),                                # b3
            ],
            out_specs=pl.BlockSpec((M, Lout), lambda b: (b, 0)),   # lane-dense (W*oc=128)
        ),
        compiler_params=pltpu.CompilerParams(
            dimension_semantics=("parallel",),       # megacore sharding on v7x
            vmem_limit_bytes=32 * 1024 * 1024,
        ),
        cost_estimate=pl.CostEstimate(flops=flops, transcendentals=0,
                                      bytes_accessed=bytes_accessed),
    )(xw, wbd, bbd, w15, b15, a_up, a_dn, w2, b2, w3, b3)


# ---------------------------------------------------------------------------
# Parameter packing: HOST-SIDE numpy, done ONCE (outside the jit path)
# ---------------------------------------------------------------------------
def _np(x):
    return np.asarray(x, dtype=np.float32)


def _np_block_diag(blocks):
    rows = sum(b.shape[0] for b in blocks)
    cols = sum(b.shape[1] for b in blocks)
    out = np.zeros((rows, cols), np.float32)
    r = c = 0
    for b in blocks:
        out[r:r + b.shape[0], c:c + b.shape[1]] = b
        r += b.shape[0]
        c += b.shape[1]
    return out


def _np_tile_bias(b, W):
    # lane layout is (w, c): bias per channel replicated over the W lane groups
    return np.tile(_np(b), W).reshape(1, -1)


def _np_band(dx, W):
    # ones where w_in == w_out + dx - 1 (SAME zero padding implicit)
    return np.eye(W, k=1 - dx, dtype=np.float32)


def _np_pack3x3(w_hwio, W):
    # horizontal taps -> block-banded (W*oc, W*oc) per dy; stack dy along K.
    w = _np(w_hwio)
    blocks = [sum(np.kron(_np_band(dx, W), w[dy, dx]) for dx in range(3))
              for dy in range(3)]
    return np.concatenate(blocks, axis=0)                  # (3*W*oc, W*oc), rows = dy 0,1,2


def _np_shift_mats(M, H):
    # Vertical-shift matrices with zeros at every per-image boundary row:
    #   (A_up @ s)[r] = s[r-1] (or 0 at the top row of each image)
    #   (A_dn @ s)[r] = s[r+1] (or 0 at the bottom row of each image)
    a_up = np.zeros((M, M), np.float32)
    a_dn = np.zeros((M, M), np.float32)
    for r in range(M):
        if r % H != 0:
            a_up[r, r - 1] = 1.0
        if r % H != H - 1:
            a_dn[r, r + 1] = 1.0
    return a_up, a_dn


def pack_mfa_params(params, *, W, H, imgs_per_step, compute_dtype=jnp.bfloat16):
    """One-time host-side packing.  Weights ship in `compute_dtype` (bf16 default ->
    halves the dominant weight DMA bytes); biases stay f32 for the f32 epilogue."""
    w11, b11 = params['c11']
    w12, b12 = params['c12']
    w13, b13 = params['c13']
    w14, b14 = params['c14']
    w15, b15 = params['c15']
    w2, b2 = params['c2']
    w3, b3 = params['c3']

    eye_w = np.eye(W, dtype=np.float32)

    # c11..c14 + concat == one block-diagonal 1x1 weight (Cin_tot, 4*out_c)
    wbd = _np_block_diag([_np(w).reshape(w.shape[2], w.shape[3])
                          for w in (w11, w12, w13, w14)])
    bbd = np.concatenate([_np(b11), _np(b12), _np(b13), _np(b14)])

    # Replicate the 1x1 weights over the W positions packed into the lane dim.
    # TODO(synk): this kron lane-expansion scales as W^2 in weight bytes; switch to a
    # spatially tiled 9-tap scheme for large W (v7x VMEM is only 64 MiB).
    wbd_big = np.kron(eye_w, wbd)                                        # (W*Cin_tot, W*4oc)
    w15_big = np.kron(eye_w, _np(w15).reshape(w15.shape[2], w15.shape[3]))  # (W*4oc, W*oc)

    w2_big = _np_pack3x3(w2, W)                                          # (3*W*oc, W*oc)
    w3_big = _np_pack3x3(w3, W)

    M = imgs_per_step * H
    a_up, a_dn = _np_shift_mats(M, H)

    cd, f32 = compute_dtype, jnp.float32
    return (jnp.asarray(wbd_big, dtype=cd), jnp.asarray(_np_tile_bias(bbd, W), dtype=f32),
            jnp.asarray(w15_big, dtype=cd), jnp.asarray(_np_tile_bias(b15, W), dtype=f32),
            jnp.asarray(a_up, dtype=cd), jnp.asarray(a_dn, dtype=cd),
            jnp.asarray(w2_big, dtype=cd), jnp.asarray(_np_tile_bias(b2, W), dtype=f32),
            jnp.asarray(w3_big, dtype=cd), jnp.asarray(_np_tile_bias(b3, W), dtype=f32))


def _choose_imgs_per_step(B, H, target_rows=128):
    """Fold images into one grid step targeting ~target_rows MXU rows, while keeping
    >= 2 grid steps when the batch allows it (keeps both v7x TCs busy)."""
    divisors = [k for k in range(1, B + 1) if B % k == 0 and k * H <= target_rows]
    if not divisors:
        return 1
    if B >= 2:
        proper = [k for k in divisors if B // k >= 2]
        if proper:
            return max(proper)
    return max(divisors)


# ---------------------------------------------------------------------------
# Bilinear upsampling, align_corners=True (exact PyTorch semantics), JAX glue
# ---------------------------------------------------------------------------
def _interp_matrix(n_out, n_in):
    i = np.arange(n_out, dtype=np.float64)
    if n_out > 1 and n_in > 1:
        s = i * (n_in - 1) / (n_out - 1)
    else:
        s = np.zeros(n_out, dtype=np.float64)
    i0 = np.clip(np.floor(s).astype(np.int64), 0, n_in - 1)
    i1 = np.clip(i0 + 1, 0, n_in - 1)
    f = s - i0
    U = np.zeros((n_out, n_in), np.float32)
    U[np.arange(n_out), i0] += (1.0 - f).astype(np.float32)
    U[np.arange(n_out), i1] += f.astype(np.float32)
    return U


def upsample_align_corners(x, scale):
    B, H, W, C = x.shape
    Uh = jnp.asarray(_interp_matrix(H * scale, H))
    Uw = jnp.asarray(_interp_matrix(W * scale, W))
    return jnp.einsum('ph,qw,bhwc->bpqc', Uh, Uw, x)


# ---------------------------------------------------------------------------
# Conv2d(bias=False) + BatchNorm2d folded into (w_eff, b_eff) [inference BN]
# ---------------------------------------------------------------------------
def make_conv_bn(key, cin, cout, ksize):
    k1, k2, k3, k4, k5 = jax.random.split(key, 5)
    w = jax.random.normal(k1, (ksize, ksize, cin, cout), jnp.float32)
    w = w * (1.0 / math.sqrt(cin * ksize * ksize))
    gamma = 1.0 + 0.1 * jax.random.normal(k2, (cout,), jnp.float32)
    beta = 0.1 * jax.random.normal(k3, (cout,), jnp.float32)
    mean = 0.1 * jax.random.normal(k4, (cout,), jnp.float32)
    var = jnp.abs(1.0 + 0.1 * jax.random.normal(k5, (cout,), jnp.float32))
    eps = 1e-5
    scale = gamma / jnp.sqrt(var + eps)
    w_eff = w * scale
    b_eff = beta - mean * scale
    return w_eff, b_eff


# ---------------------------------------------------------------------------
# Forward pass (mirrors the PyTorch module; packed weights are jit inputs)
# ---------------------------------------------------------------------------
def mfa_forward(packed, x1, x2, x3, x4, *, imgs_per_step=1, single_buffer_weights=True):
    # Bilinear upsampling chain (tiny low-res inputs, exact align_corners=True)
    x1 = upsample_align_corners(x1, 4)
    x2 = upsample_align_corners(x2, 2)
    x1 = upsample_align_corners(x1, 2)
    x2 = upsample_align_corners(x2, 2)
    x3 = upsample_align_corners(x3, 2)

    B, H, W, _ = x4.shape
    xcat = jnp.concatenate([x1, x2, x3, x4], axis=-1)            # (B, H, W, Cin_tot)
    cin_tot = xcat.shape[-1]
    cdt = packed[0].dtype
    xw = xcat.reshape(B * H, W * cin_tot).astype(cdt)            # lanes = (w, c)

    out2d = _mfa_pallas(xw, *packed, B=B, H=H, imgs_per_step=imgs_per_step,
                        single_buffer_weights=single_buffer_weights)

    Lout = packed[2].shape[1]
    out_c = Lout // W
    return out2d.reshape(B, H, W, out_c)


# ---------------------------------------------------------------------------
# Pure-JAX reference (lax.conv, per-layer) for validation
# ---------------------------------------------------------------------------
def _ref_conv_bn(x, w_hwio, b, relu):
    pad = 'SAME' if w_hwio.shape[0] == 3 else 'VALID'
    y = lax.conv_general_dilated(x, w_hwio, (1, 1), pad,
                                 dimension_numbers=('NHWC', 'HWIO', 'NHWC'))
    y = y + b
    return jnp.maximum(y, 0.0) if relu else y


def ref_forward(params, x1, x2, x3, x4):
    x1 = upsample_align_corners(x1, 4)
    x2 = upsample_align_corners(x2, 2)
    x1 = _ref_conv_bn(upsample_align_corners(x1, 2), *params['c11'], relu=True)
    x2 = _ref_conv_bn(upsample_align_corners(x2, 2), *params['c12'], relu=True)
    x3 = _ref_conv_bn(upsample_align_corners(x3, 2), *params['c13'], relu=True)
    x4 = _ref_conv_bn(x4, *params['c14'], relu=True)
    x = jnp.concatenate([x1, x2, x3, x4], axis=-1)
    x = _ref_conv_bn(x, *params['c15'], relu=True)
    s1 = x
    x = jnp.maximum(_ref_conv_bn(x, *params['c2'], relu=False) + s1, 0.0)
    s2 = x
    x = jnp.maximum(_ref_conv_bn(x, *params['c3'], relu=False) + s2 + s1, 0.0)
    return x


# ---------------------------------------------------------------------------
if __name__ == "__main__":
    in_c = [4, 8, 12, 16]
    out_c = 8
    B = 2
    H = 16          # output spatial size (== x4 spatial size)
    W = H           # W * out_c = 128 lanes -> lane-dense unmasked stores

    key = jax.random.PRNGKey(0)
    k_in, k_par = jax.random.split(key)
    kx = jax.random.split(k_in, 4)
    # NHWC inputs at the multi-scale resolutions implied by the forward pass:
    x1 = jax.random.normal(kx[0], (B, H // 8, W // 8, in_c[0]), jnp.float32)
    x2 = jax.random.normal(kx[1], (B, H // 4, W // 4, in_c[1]), jnp.float32)
    x3 = jax.random.normal(kx[2], (B, H // 2, W // 2, in_c[2]), jnp.float32)
    x4 = jax.random.normal(kx[3], (B, H, W, in_c[3]), jnp.float32)

    pk = jax.random.split(k_par, 7)
    params = {
        'c11': make_conv_bn(pk[0], in_c[0], out_c, 1),
        'c12': make_conv_bn(pk[1], in_c[1], out_c, 1),
        'c13': make_conv_bn(pk[2], in_c[2], out_c, 1),
        'c14': make_conv_bn(pk[3], in_c[3], out_c, 1),
        'c15': make_conv_bn(pk[4], 4 * out_c, out_c, 1),
        'c2':  make_conv_bn(pk[5], out_c, out_c, 3),
        'c3':  make_conv_bn(pk[6], out_c, out_c, 3),
    }

    imgs_per_step = _choose_imgs_per_step(B, H)

    # Pack ONCE on the host (numpy) -- no kron/scatter glue in the jit path.
    packed_bf16 = pack_mfa_params(params, W=W, H=H, imgs_per_step=imgs_per_step,
                                  compute_dtype=jnp.bfloat16)
    packed_f32 = pack_mfa_params(params, W=W, H=H, imgs_per_step=imgs_per_step,
                                 compute_dtype=jnp.float32)

    def build_fwd(single_buffer_weights):
        return jax.jit(functools.partial(mfa_forward, imgs_per_step=imgs_per_step,
                                         single_buffer_weights=single_buffer_weights))

    ref = jax.block_until_ready(ref_forward(params, x1, x2, x3, x4))

    # f32 operand path: exact conv semantics -> tight tolerance.
    fwd = build_fwd(True)
    try:
        out_f32 = jax.block_until_ready(fwd(packed_f32, x1, x2, x3, x4))
    except Exception:
        # Fallback for JAX versions where pl.Buffered(1) on constant weight blocks
        # is not accepted by the TPU pipeline: use default double buffering.
        fwd = build_fwd(False)
        out_f32 = jax.block_until_ready(fwd(packed_f32, x1, x2, x3, x4))

    assert out_f32.shape == (B, H, W, out_c), out_f32.shape
    np.testing.assert_allclose(np.asarray(out_f32), np.asarray(ref), rtol=1e-4, atol=1e-4)

    # bf16 weight/operand path (default: halves the dominant weight-DMA bytes),
    # f32 accumulation + epilogue.  Tolerance-checked against the f32 reference.
    out_bf16 = jax.block_until_ready(fwd(packed_bf16, x1, x2, x3, x4))
    assert out_bf16.shape == (B, H, W, out_c)
    assert bool(jnp.all(jnp.isfinite(out_bf16)))
    np.testing.assert_allclose(np.asarray(out_bf16), np.asarray(ref), rtol=1e-1, atol=1e-1)

    print("KERNEL_OK")
</pallas_src>

<mosaic_0001>
module attributes {stable_mosaic.version = 11 : i64} {
  func.func @_mfa_kernel(%arg0: i32, %arg1: memref<16x640xf32, #tpu.memory_space<vmem>>, %arg2: memref<640x512xf32, #tpu.memory_space<vmem>>, %arg3: memref<1x512xf32, #tpu.memory_space<vmem>>, %arg4: memref<512x128xf32, #tpu.memory_space<vmem>>, %arg5: memref<1x128xf32, #tpu.memory_space<vmem>>, %arg6: memref<16x16xf32, #tpu.memory_space<vmem>>, %arg7: memref<16x16xf32, #tpu.memory_space<vmem>>, %arg8: memref<384x128xf32, #tpu.memory_space<vmem>>, %arg9: memref<1x128xf32, #tpu.memory_space<vmem>>, %arg10: memref<384x128xf32, #tpu.memory_space<vmem>>, %arg11: memref<1x128xf32, #tpu.memory_space<vmem>>, %arg12: memref<16x128xf32, #tpu.memory_space<vmem>>) attributes {dimension_semantics = [#tpu.dimension_semantics<parallel>], iteration_bounds = array<i64: 2>, scalar_prefetch = 0 : i64, scratch_operands = 0 : i64, tpu.core_type = #tpu.core_type<tc>, window_params = [{transform_indices = @transform_0, window_bounds = array<i64: 16, 640>}, {pipeline_mode = #tpu.pipeline_mode<synchronous>, transform_indices = @transform_1, window_bounds = array<i64: 640, 512>}, {pipeline_mode = #tpu.pipeline_mode<synchronous>, transform_indices = @transform_2, window_bounds = array<i64: 1, 512>}, {pipeline_mode = #tpu.pipeline_mode<synchronous>, transform_indices = @transform_3, window_bounds = array<i64: 512, 128>}, {pipeline_mode = #tpu.pipeline_mode<synchronous>, transform_indices = @transform_4, window_bounds = array<i64: 1, 128>}, {pipeline_mode = #tpu.pipeline_mode<synchronous>, transform_indices = @transform_5, window_bounds = array<i64: 16, 16>}, {pipeline_mode = #tpu.pipeline_mode<synchronous>, transform_indices = @transform_6, window_bounds = array<i64: 16, 16>}, {pipeline_mode = #tpu.pipeline_mode<synchronous>, transform_indices = @transform_7, window_bounds = array<i64: 384, 128>}, {pipeline_mode = #tpu.pipeline_mode<synchronous>, transform_indices = @transform_8, window_bounds = array<i64: 1, 128>}, {pipeline_mode = #tpu.pipeline_mode<synchronous>, transform_indices = @transform_9, window_bounds = array<i64: 384, 128>}, {pipeline_mode = #tpu.pipeline_mode<synchronous>, transform_indices = @transform_10, window_bounds = array<i64: 1, 128>}, {transform_indices = @transform_11, window_bounds = array<i64: 16, 128>}]} {
    %c0 = arith.constant 0 : index
    %c0_0 = arith.constant 0 : index
    %0 = vector.load %arg1[%c0, %c0_0] : memref<16x640xf32, #tpu.memory_space<vmem>>, vector<16x640xf32>
    %c0_1 = arith.constant 0 : index
    %c0_2 = arith.constant 0 : index
    %1 = vector.load %arg2[%c0_1, %c0_2] : memref<640x512xf32, #tpu.memory_space<vmem>>, vector<640x512xf32>
    %cst = arith.constant dense<0.000000e+00> : vector<16x512xf32>
    %2 = tpu.matmul %0, %1, %cst {dimension_numbers = #tpu.dot_dimension_numbers<[1], [0], [0], [1], [0, 0, 1, 1], [], []>} : vector<16x640xf32>, vector<640x512xf32>, vector<16x512xf32> -> vector<16x512xf32>
    %c0_3 = arith.constant 0 : index
    %c0_4 = arith.constant 0 : index
    %3 = vector.load %arg3[%c0_3, %c0_4] : memref<1x512xf32, #tpu.memory_space<vmem>>, vector<1x512xf32>
    %4 = vector.broadcast %3 : vector<1x512xf32> to vector<16x512xf32>
    %5 = arith.addf %2, %4 : vector<16x512xf32>
    %cst_5 = arith.constant 0.000000e+00 : f32
    %6 = vector.broadcast %cst_5 : f32 to vector<16x512xf32>
    %7 = arith.maximumf %5, %6 : vector<16x512xf32>
    %c0_6 = arith.constant 0 : index
    %c0_7 = arith.constant 0 : index
    %8 = vector.load %arg4[%c0_6, %c0_7] : memref<512x128xf32, #tpu.memory_space<vmem>>, vector<512x128xf32>
    %cst_8 = arith.constant dense<0.000000e+00> : vector<16x128xf32>
    %9 = tpu.matmul %7, %8, %cst_8 {dimension_numbers = #tpu.dot_dimension_numbers<[1], [0], [0], [1], [0, 0, 1, 1], [], []>} : vector<16x512xf32>, vector<512x128xf32>, vector<16x128xf32> -> vector<16x128xf32>
    %c0_9 = arith.constant 0 : index
    %c0_10 = arith.constant 0 : index
    %10 = vector.load %arg5[%c0_9, %c0_10] : memref<1x128xf32, #tpu.memory_space<vmem>>, vector<1x128xf32>
    %11 = vector.broadcast %10 : vector<1x128xf32> to vector<16x128xf32>
    %12 = arith.addf %9, %11 : vector<16x128xf32>
    %cst_11 = arith.constant 0.000000e+00 : f32
    %13 = vector.broadcast %cst_11 : f32 to vector<16x128xf32>
    %14 = arith.maximumf %12, %13 : vector<16x128xf32>
    %c0_12 = arith.constant 0 : index
    %c0_13 = arith.constant 0 : index
    %15 = vector.load %arg6[%c0_12, %c0_13] : memref<16x16xf32, #tpu.memory_space<vmem>>, vector<16x16xf32>
    %c0_14 = arith.constant 0 : index
    %c0_15 = arith.constant 0 : index
    %16 = vector.load %arg7[%c0_14, %c0_15] : memref<16x16xf32, #tpu.memory_space<vmem>>, vector<16x16xf32>
    %cst_16 = arith.constant dense<0.000000e+00> : vector<16x128xf32>
    %17 = tpu.matmul %15, %14, %cst_16 {dimension_numbers = #tpu.dot_dimension_numbers<[1], [0], [0], [1], [0, 0, 1, 1], [], []>} : vector<16x16xf32>, vector<16x128xf32>, vector<16x128xf32> -> vector<16x128xf32>
    %cst_17 = arith.constant dense<0.000000e+00> : vector<16x128xf32>
    %18 = tpu.matmul %16, %14, %cst_17 {dimension_numbers = #tpu.dot_dimension_numbers<[1], [0], [0], [1], [0, 0, 1, 1], [], []>} : vector<16x16xf32>, vector<16x128xf32>, vector<16x128xf32> -> vector<16x128xf32>
    %19 = tpu.concatenate %17, %14, %18 in 1 : vector<16x128xf32>, vector<16x128xf32>, vector<16x128xf32> -> vector<16x384xf32>
    %c0_18 = arith.constant 0 : index
    %c0_19 = arith.constant 0 : index
    %20 = vector.load %arg8[%c0_18, %c0_19] : memref<384x128xf32, #tpu.memory_space<vmem>>, vector<384x128xf32>
    %cst_20 = arith.constant dense<0.000000e+00> : vector<16x128xf32>
    %21 = tpu.matmul %19, %20, %cst_20 {dimension_numbers = #tpu.dot_dimension_numbers<[1], [0], [0], [1], [0, 0, 1, 1], [], []>} : vector<16x384xf32>, vector<384x128xf32>, vector<16x128xf32> -> vector<16x128xf32>
    %c0_21 = arith.constant 0 : index
    %c0_22 = arith.constant 0 : index
    %22 = vector.load %arg9[%c0_21, %c0_22] : memref<1x128xf32, #tpu.memory_space<vmem>>, vector<1x128xf32>
    %23 = vector.broadcast %22 : vector<1x128xf32> to vector<16x128xf32>
    %24 = arith.addf %21, %23 : vector<16x128xf32>
    %25 = arith.addf %24, %14 : vector<16x128xf32>
    %cst_23 = arith.constant 0.000000e+00 : f32
    %26 = vector.broadcast %cst_23 : f32 to vector<16x128xf32>
    %27 = arith.maximumf %25, %26 : vector<16x128xf32>
    %cst_24 = arith.constant dense<0.000000e+00> : vector<16x128xf32>
    %28 = tpu.matmul %15, %27, %cst_24 {dimension_numbers = #tpu.dot_dimension_numbers<[1], [0], [0], [1], [0, 0, 1, 1], [], []>} : vector<16x16xf32>, vector<16x128xf32>, vector<16x128xf32> -> vector<16x128xf32>
    %cst_25 = arith.constant dense<0.000000e+00> : vector<16x128xf32>
    %29 = tpu.matmul %16, %27, %cst_25 {dimension_numbers = #tpu.dot_dimension_numbers<[1], [0], [0], [1], [0, 0, 1, 1], [], []>} : vector<16x16xf32>, vector<16x128xf32>, vector<16x128xf32> -> vector<16x128xf32>
    %30 = tpu.concatenate %28, %27, %29 in 1 : vector<16x128xf32>, vector<16x128xf32>, vector<16x128xf32> -> vector<16x384xf32>
    %c0_26 = arith.constant 0 : index
    %c0_27 = arith.constant 0 : index
    %31 = vector.load %arg10[%c0_26, %c0_27] : memref<384x128xf32, #tpu.memory_space<vmem>>, vector<384x128xf32>
    %cst_28 = arith.constant dense<0.000000e+00> : vector<16x128xf32>
    %32 = tpu.matmul %30, %31, %cst_28 {dimension_numbers = #tpu.dot_dimension_numbers<[1], [0], [0], [1], [0, 0, 1, 1], [], []>} : vector<16x384xf32>, vector<384x128xf32>, vector<16x128xf32> -> vector<16x128xf32>
    %c0_29 = arith.constant 0 : index
    %c0_30 = arith.constant 0 : index
    %33 = vector.load %arg11[%c0_29, %c0_30] : memref<1x128xf32, #tpu.memory_space<vmem>>, vector<1x128xf32>
    %34 = vector.broadcast %33 : vector<1x128xf32> to vector<16x128xf32>
    %35 = arith.addf %32, %34 : vector<16x128xf32>
    %36 = arith.addf %35, %27 : vector<16x128xf32>
    %37 = arith.addf %36, %14 : vector<16x128xf32>
    %cst_31 = arith.constant 0.000000e+00 : f32
    %38 = vector.broadcast %cst_31 : f32 to vector<16x128xf32>
    %39 = arith.maximumf %37, %38 : vector<16x128xf32>
    %c0_32 = arith.constant 0 : index
    %c0_33 = arith.constant 0 : index
    %40 = vector.load %arg12[%c0_32, %c0_33] : memref<16x128xf32, #tpu.memory_space<vmem>>, vector<16x128xf32>
    tpu.vector_store %arg12[%c0_32, %c0_33], %39 {strides = array<i32>} : memref<16x128xf32, #tpu.memory_space<vmem>>, vector<16x128xf32>,
    return
  }
  func.func @transform_0(%arg0: i32) -> (i32, i32) {
    %c0_i32 = arith.constant 0 : i32
    %c0_i32_0 = arith.constant 0 : i32
    return %arg0, %c0_i32 : i32, i32
  }
  func.func @transform_1(%arg0: i32) -> (i32, i32) {
    %c0_i32 = arith.constant 0 : i32
    %c0_i32_0 = arith.constant 0 : i32
    %c0_i32_1 = arith.constant 0 : i32
    return %c0_i32, %c0_i32_0 : i32, i32
  }
  func.func @transform_2(%arg0: i32) -> (i32, i32) {
    %c0_i32 = arith.constant 0 : i32
    %c0_i32_0 = arith.constant 0 : i32
    %c0_i32_1 = arith.constant 0 : i32
    return %c0_i32, %c0_i32_0 : i32, i32
  }
  func.func @transform_3(%arg0: i32) -> (i32, i32) {
    %c0_i32 = arith.constant 0 : i32
    %c0_i32_0 = arith.constant 0 : i32
    %c0_i32_1 = arith.constant 0 : i32
    return %c0_i32, %c0_i32_0 : i32, i32
  }
  func.func @transform_4(%arg0: i32) -> (i32, i32) {
    %c0_i32 = arith.constant 0 : i32
    %c0_i32_0 = arith.constant 0 : i32
    %c0_i32_1 = arith.constant 0 : i32
    return %c0_i32, %c0_i32_0 : i32, i32
  }
  func.func @transform_5(%arg0: i32) -> (i32, i32) {
    %c0_i32 = arith.constant 0 : i32
    %c0_i32_0 = arith.constant 0 : i32
    %c0_i32_1 = arith.constant 0 : i32
    return %c0_i32, %c0_i32_0 : i32, i32
  }
  func.func @transform_6(%arg0: i32) -> (i32, i32) {
    %c0_i32 = arith.constant 0 : i32
    %c0_i32_0 = arith.constant 0 : i32
    %c0_i32_1 = arith.constant 0 : i32
    return %c0_i32, %c0_i32_0 : i32, i32
  }
  func.func @transform_7(%arg0: i32) -> (i32, i32) {
    %c0_i32 = arith.constant 0 : i32
    %c0_i32_0 = arith.constant 0 : i32
    %c0_i32_1 = arith.constant 0 : i32
    return %c0_i32, %c0_i32_0 : i32, i32
  }
  func.func @transform_8(%arg0: i32) -> (i32, i32) {
    %c0_i32 = arith.constant 0 : i32
    %c0_i32_0 = arith.constant 0 : i32
    %c0_i32_1 = arith.constant 0 : i32
    return %c0_i32, %c0_i32_0 : i32, i32
  }
  func.func @transform_9(%arg0: i32) -> (i32, i32) {
    %c0_i32 = arith.constant 0 : i32
    %c0_i32_0 = arith.constant 0 : i32
    %c0_i32_1 = arith.constant 0 : i32
    return %c0_i32, %c0_i32_0 : i32, i32
  }
  func.func @transform_10(%arg0: i32) -> (i32, i32) {
    %c0_i32 = arith.constant 0 : i32
    %c0_i32_0 = arith.constant 0 : i32
    %c0_i32_1 = arith.constant 0 : i32
    return %c0_i32, %c0_i32_0 : i32, i32
  }
  func.func @transform_11(%arg0: i32) -> (i32, i32) {
    %c0_i32 = arith.constant 0 : i32
    %c0_i32_0 = arith.constant 0 : i32
    return %arg0, %c0_i32 : i32, i32
  }
}

module attributes {stable_mosaic.version = 11 : i64} {
  func.func @_mfa_kernel(%arg0: i32, %arg1: memref<16x640xf32, #tpu.memory_space<vmem>>, %arg2: memref<640x512xf32, #tpu.memory_space<vmem>>, %arg3: memref<1x512xf32, #tpu.memory_space<vmem>>, %arg4: memref<512x128xf32, #tpu.memory_space<vmem>>, %arg5: memref<1x128xf32, #tpu.memory_space<vmem>>, %arg6: memref<16x16xf32, #tpu.memory_space<vmem>>, %arg7: memref<16x16xf32, #tpu.memory_space<vmem>>, %arg8: memref<384x128xf32, #tpu.memory_space<vmem>>, %arg9: memref<1x128xf32, #tpu.memory_space<vmem>>, %arg10: memref<384x128xf32, #tpu.memory_space<vmem>>, %arg11: memref<1x128xf32, #tpu.memory_space<vmem>>, %arg12: memref<16x128xf32, #tpu.memory_space<vmem>>) attributes {dimension_semantics = [#tpu.dimension_semantics<parallel>], iteration_bounds = array<i64: 2>, scalar_prefetch = 0 : i64, scratch_operands = 0 : i64, tpu.core_type = #tpu.core_type<tc>, window_params = [{transform_indices = @transform_0, window_bounds = array<i64: 16, 640>}, {pipeline_mode = #tpu.pipeline_mode<synchronous>, transform_indices = @transform_1, window_bounds = array<i64: 640, 512>}, {pipeline_mode = #tpu.pipeline_mode<synchronous>, transform_indices = @transform_2, window_bounds = array<i64: 1, 512>}, {pipeline_mode = #tpu.pipeline_mode<synchronous>, transform_indices = @transform_3, window_bounds = array<i64: 512, 128>}, {pipeline_mode = #tpu.pipeline_mode<synchronous>, transform_indices = @transform_4, window_bounds = array<i64: 1, 128>}, {pipeline_mode = #tpu.pipeline_mode<synchronous>, transform_indices = @transform_5, window_bounds = array<i64: 16, 16>}, {pipeline_mode = #tpu.pipeline_mode<synchronous>, transform_indices = @transform_6, window_bounds = array<i64: 16, 16>}, {pipeline_mode = #tpu.pipeline_mode<synchronous>, transform_indices = @transform_7, window_bounds = array<i64: 384, 128>}, {pipeline_mode = #tpu.pipeline_mode<synchronous>, transform_indices = @transform_8, window_bounds = array<i64: 1, 128>}, {pipeline_mode = #tpu.pipeline_mode<synchronous>, transform_indices = @transform_9, window_bounds = array<i64: 384, 128>}, {pipeline_mode = #tpu.pipeline_mode<synchronous>, transform_indices = @transform_10, window_bounds = array<i64: 1, 128>}, {transform_indices = @transform_11, window_bounds = array<i64: 16, 128>}]} {
    %c0 = arith.constant 0 : index
    %c0_0 = arith.constant 0 : index
    %0 = vector.load %arg1[%c0, %c0_0] : memref<16x640xf32, #tpu.memory_space<vmem>>, vector<16x640xf32>
    %c0_1 = arith.constant 0 : index
    %c0_2 = arith.constant 0 : index
    %1 = vector.load %arg2[%c0_1, %c0_2] : memref<640x512xf32, #tpu.memory_space<vmem>>, vector<640x512xf32>
    %cst = arith.constant dense<0.000000e+00> : vector<16x512xf32>
    %2 = tpu.matmul %0, %1, %cst {dimension_numbers = #tpu.dot_dimension_numbers<[1], [0], [0], [1], [0, 0, 1, 1], [], []>} : vector<16x640xf32>, vector<640x512xf32>, vector<16x512xf32> -> vector<16x512xf32>
    %c0_3 = arith.constant 0 : index
    %c0_4 = arith.constant 0 : index
    %3 = vector.load %arg3[%c0_3, %c0_4] : memref<1x512xf32, #tpu.memory_space<vmem>>, vector<1x512xf32>
    %4 = vector.broadcast %3 : vector<1x512xf32> to vector<16x512xf32>
    %5 = arith.addf %2, %4 : vector<16x512xf32>
    %cst_5 = arith.constant 0.000000e+00 : f32
    %6 = vector.broadcast %cst_5 : f32 to vector<16x512xf32>
    %7 = arith.maximumf %5, %6 : vector<16x512xf32>
    %c0_6 = arith.constant 0 : index
    %c0_7 = arith.constant 0 : index
    %8 = vector.load %arg4[%c0_6, %c0_7] : memref<512x128xf32, #tpu.memory_space<vmem>>, vector<512x128xf32>
    %cst_8 = arith.constant dense<0.000000e+00> : vector<16x128xf32>
    %9 = tpu.matmul %7, %8, %cst_8 {dimension_numbers = #tpu.dot_dimension_numbers<[1], [0], [0], [1], [0, 0, 1, 1], [], []>} : vector<16x512xf32>, vector<512x128xf32>, vector<16x128xf32> -> vector<16x128xf32>
    %c0_9 = arith.constant 0 : index
    %c0_10 = arith.constant 0 : index
    %10 = vector.load %arg5[%c0_9, %c0_10] : memref<1x128xf32, #tpu.memory_space<vmem>>, vector<1x128xf32>
    %11 = vector.broadcast %10 : vector<1x128xf32> to vector<16x128xf32>
    %12 = arith.addf %9, %11 : vector<16x128xf32>
    %cst_11 = arith.constant 0.000000e+00 : f32
    %13 = vector.broadcast %cst_11 : f32 to vector<16x128xf32>
    %14 = arith.maximumf %12, %13 : vector<16x128xf32>
    %c0_12 = arith.constant 0 : index
    %c0_13 = arith.constant 0 : index
    %15 = vector.load %arg6[%c0_12, %c0_13] : memref<16x16xf32, #tpu.memory_space<vmem>>, vector<16x16xf32>
    %c0_14 = arith.constant 0 : index
    %c0_15 = arith.constant 0 : index
    %16 = vector.load %arg7[%c0_14, %c0_15] : memref<16x16xf32, #tpu.memory_space<vmem>>, vector<16x16xf32>
    %cst_16 = arith.constant dense<0.000000e+00> : vector<16x128xf32>
    %17 = tpu.matmul %15, %14, %cst_16 {dimension_numbers = #tpu.dot_dimension_numbers<[1], [0], [0], [1], [0, 0, 1, 1], [], []>} : vector<16x16xf32>, vector<16x128xf32>, vector<16x128xf32> -> vector<16x128xf32>
    %cst_17 = arith.constant dense<0.000000e+00> : vector<16x128xf32>
    %18 = tpu.matmul %16, %14, %cst_17 {dimension_numbers = #tpu.dot_dimension_numbers<[1], [0], [0], [1], [0, 0, 1, 1], [], []>} : vector<16x16xf32>, vector<16x128xf32>, vector<16x128xf32> -> vector<16x128xf32>
    %19 = tpu.concatenate %17, %14, %18 in 1 : vector<16x128xf32>, vector<16x128xf32>, vector<16x128xf32> -> vector<16x384xf32>
    %c0_18 = arith.constant 0 : index
    %c0_19 = arith.constant 0 : index
    %20 = vector.load %arg8[%c0_18, %c0_19] : memref<384x128xf32, #tpu.memory_space<vmem>>, vector<384x128xf32>
    %cst_20 = arith.constant dense<0.000000e+00> : vector<16x128xf32>
    %21 = tpu.matmul %19, %20, %cst_20 {dimension_numbers = #tpu.dot_dimension_numbers<[1], [0], [0], [1], [0, 0, 1, 1], [], []>} : vector<16x384xf32>, vector<384x128xf32>, vector<16x128xf32> -> vector<16x128xf32>
    %c0_21 = arith.constant 0 : index
    %c0_22 = arith.constant 0 : index
    %22 = vector.load %arg9[%c0_21, %c0_22] : memref<1x128xf32, #tpu.memory_space<vmem>>, vector<1x128xf32>
    %23 = vector.broadcast %22 : vector<1x128xf32> to vector<16x128xf32>
    %24 = arith.addf %21, %23 : vector<16x128xf32>
    %25 = arith.addf %24, %14 : vector<16x128xf32>
    %cst_23 = arith.constant 0.000000e+00 : f32
    %26 = vector.broadcast %cst_23 : f32 to vector<16x128xf32>
    %27 = arith.maximumf %25, %26 : vector<16x128xf32>
    %cst_24 = arith.constant dense<0.000000e+00> : vector<16x128xf32>
    %28 = tpu.matmul %15, %27, %cst_24 {dimension_numbers = #tpu.dot_dimension_numbers<[1], [0], [0], [1], [0, 0, 1, 1], [], []>} : vector<16x16xf32>, vector<16x128xf32>, vector<16x128xf32> -> vector<16x128xf32>
    %cst_25 = arith.constant dense<0.000000e+00> : vector<16x128xf32>
    %29 = tpu.matmul %16, %27, %cst_25 {dimension_numbers = #tpu.dot_dimension_numbers<[1], [0], [0], [1], [0, 0, 1, 1], [], []>} : vector<16x16xf32>, vector<16x128xf32>, vector<16x128xf32> -> vector<16x128xf32>
    %30 = tpu.concatenate %28, %27, %29 in 1 : vector<16x128xf32>, vector<16x128xf32>, vector<16x128xf32> -> vector<16x384xf32>
    %c0_26 = arith.constant 0 : index
    %c0_27 = arith.constant 0 : index
    %31 = vector.load %arg10[%c0_26, %c0_27] : memref<384x128xf32, #tpu.memory_space<vmem>>, vector<384x128xf32>
    %cst_28 = arith.constant dense<0.000000e+00> : vector<16x128xf32>
    %32 = tpu.matmul %30, %31, %cst_28 {dimension_numbers = #tpu.dot_dimension_numbers<[1], [0], [0], [1], [0, 0, 1, 1], [], []>} : vector<16x384xf32>, vector<384x128xf32>, vector<16x128xf32> -> vector<16x128xf32>
    %c0_29 = arith.constant 0 : index
    %c0_30 = arith.constant 0 : index
    %33 = vector.load %arg11[%c0_29, %c0_30] : memref<1x128xf32, #tpu.memory_space<vmem>>, vector<1x128xf32>
    %34 = vector.broadcast %33 : vector<1x128xf32> to vector<16x128xf32>
    %35 = arith.addf %32, %34 : vector<16x128xf32>
    %36 = arith.addf %35, %27 : vector<16x128xf32>
    %37 = arith.addf %36, %14 : vector<16x128xf32>
    %cst_31 = arith.constant 0.000000e+00 : f32
    %38 = vector.broadcast %cst_31 : f32 to vector<16x128xf32>
    %39 = arith.maximumf %37, %38 : vector<16x128xf32>
    %c0_32 = arith.constant 0 : index
    %c0_33 = arith.constant 0 : index
    %40 = vector.load %arg12[%c0_32, %c0_33] : memref<16x128xf32, #tpu.memory_space<vmem>>, vector<16x128xf32>
    tpu.vector_store %arg12[%c0_32, %c0_33], %39 {strides = array<i32>} : memref<16x128xf32, #tpu.memory_space<vmem>>, vector<16x128xf32>,
    return
  }
  func.func @transform_0(%arg0: i32) -> (i32, i32) {
    %c0_i32 = arith.constant 0 : i32
    %c0_i32_0 = arith.constant 0 : i32
    return %arg0, %c0_i32 : i32, i32
  }
  func.func @transform_1(%arg0: i32) -> (i32, i32) {
    %c0_i32 = arith.constant 0 : i32
    %c0_i32_0 = arith.constant 0 : i32
    %c0_i32_1 = arith.constant 0 : i32
    return %c0_i32, %c0_i32_0 : i32, i32
  }
  func.func @transform_2(%arg0: i32) -> (i32, i32) {
    %c0_i32 = arith.constant 0 : i32
    %c0_i32_0 = arith.constant 0 : i32
    %c0_i32_1 = arith.constant 0 : i32
    return %c0_i32, %c0_i32_0 : i32, i32
  }
  func.func @transform_3(%arg0: i32) -> (i32, i32) {
    %c0_i32 = arith.constant 0 : i32
    %c0_i32_0 = arith.constant 0 : i32
    %c0_i32_1 = arith.constant 0 : i32
    return %c0_i32, %c0_i32_0 : i32, i32
  }
  func.func @transform_4(%arg0: i32) -> (i32, i32) {
    %c0_i32 = arith.constant 0 : i32
    %c0_i32_0 = arith.constant 0 : i32
    %c0_i32_1 = arith.constant 0 : i32
    return %c0_i32, %c0_i32_0 : i32, i32
  }
  func.func @transform_5(%arg0: i32) -> (i32, i32) {
    %c0_i32 = arith.constant 0 : i32
    %c0_i32_0 = arith.constant 0 : i32
    %c0_i32_1 = arith.constant 0 : i32
    return %c0_i32, %c0_i32_0 : i32, i32
  }
  func.func @transform_6(%arg0: i32) -> (i32, i32) {
    %c0_i32 = arith.constant 0 : i32
    %c0_i32_0 = arith.constant 0 : i32
    %c0_i32_1 = arith.constant 0 : i32
    return %c0_i32, %c0_i32_0 : i32, i32
  }
  func.func @transform_7(%arg0: i32) -> (i32, i32) {
    %c0_i32 = arith.constant 0 : i32
    %c0_i32_0 = arith.constant 0 : i32
    %c0_i32_1 = arith.constant 0 : i32
    return %c0_i32, %c0_i32_0 : i32, i32
  }
  func.func @transform_8(%arg0: i32) -> (i32, i32) {
    %c0_i32 = arith.constant 0 : i32
    %c0_i32_0 = arith.constant 0 : i32
    %c0_i32_1 = arith.constant 0 : i32
    return %c0_i32, %c0_i32_0 : i32, i32
  }
  func.func @transform_9(%arg0: i32) -> (i32, i32) {
    %c0_i32 = arith.constant 0 : i32
    %c0_i32_0 = arith.constant 0 : i32
    %c0_i32_1 = arith.constant 0 : i32
    return %c0_i32, %c0_i32_0 : i32, i32
  }
  func.func @transform_10(%arg0: i32) -> (i32, i32) {
    %c0_i32 = arith.constant 0 : i32
    %c0_i32_0 = arith.constant 0 : i32
    %c0_i32_1 = arith.constant 0 : i32
    return %c0_i32, %c0_i32_0 : i32, i32
  }
  func.func @transform_11(%arg0: i32) -> (i32, i32) {
    %c0_i32 = arith.constant 0 : i32
    %c0_i32_0 = arith.constant 0 : i32
    return %arg0, %c0_i32 : i32, i32
  }
}

</mosaic_0001>

<llo_original>
// kernel: mfa_forward.1
$region0: #{mfa_forward.1}
  #allocation0 [shape = 'u32[]', space=smem, size = 0x4, offset = 0x4, fixed_abs, tag = 'smem constant byte address 0x4 - core index']
  #allocation1 [shape = 'u32[144,128]{1,0:T(1,128)}', space=vmem, size = 0x12000, scoped, tag = 'internal scratch']
  %s0 = inlined_call_operand.vmem [shape: f32[32,640], index: 0, kind: input, shape index: {}]
  %s1 = inlined_call_operand.vmem [shape: f32[640,512], index: 1, kind: input, shape index: {}]
  %s2 = inlined_call_operand.vmem [shape: f32[1,512], index: 2, kind: input, shape index: {}]
  %s3 = inlined_call_operand.vmem [shape: f32[512,128], index: 3, kind: input, shape index: {}]
  %s4 = inlined_call_operand.vmem [shape: f32[1,128], index: 4, kind: input, shape index: {}]
  %s5 = inlined_call_operand.vmem [shape: f32[16,16], index: 5, kind: input, shape index: {}]
  %s6 = inlined_call_operand.vmem [shape: f32[16,16], index: 6, kind: input, shape index: {}]
  %s7 = inlined_call_operand.vmem [shape: f32[384,128], index: 7, kind: input, shape index: {}]
  %s8 = inlined_call_operand.vmem [shape: f32[1,128], index: 8, kind: input, shape index: {}]
  %s9 = inlined_call_operand.vmem [shape: f32[384,128], index: 9, kind: input, shape index: {}]
  %s10 = inlined_call_operand.vmem [shape: f32[1,128], index: 10, kind: input, shape index: {}]
  %s11 = inlined_call_operand.vmem [shape: f32[32,128], index: 11, kind: output, shape index: {}]
  %s12 = sld [smem:[#allocation0]]
  $region77: #{mfa_forward.1} parent=0
    _
  %s14 = ssub.s32 1, %s12
  %s15 = scalar_select 0, %s14, %s12
  loop: start=0, step=1, limit=4
  $region2: #{mfa_forward.1} parent=0 // loop_pre_header
    _
  $region3: #{mfa_forward.1} parent=0 // loop_header
    %s17 = sphi 0, %s21
    %p18 = scmp.ge.s32.totalorder %s17, 4
    %s27 = sphi 0, %s29
    %s30 = sphi 0, %s27
    %s31 = sphi 0, %s30
    %s47 = sphi 0, %s31
    %s51 = sphi 0, %s51
    %s53 = sphi 0, %s51
    %s54 = sphi 0, %s53
    %s68 = sphi 0, %s54
    %s72 = sphi 0, %s72
    %s74 = sphi 0, %s72
    %s75 = sphi 0, %s74
    %s89 = sphi 0, %s75
    %s93 = sphi 0, %s93
    %s95 = sphi 0, %s93
    %s96 = sphi 0, %s95
    %s110 = sphi 0, %s96
    %s114 = sphi 0, %s114
    %s116 = sphi 0, %s114
    %s117 = sphi 0, %s116
    %s131 = sphi 0, %s117
    %s135 = sphi 0, %s135
    %s137 = sphi 0, %s135
    %s138 = sphi 0, %s137
    %s152 = sphi 0, %s138
    %s156 = sphi 0, %s156
    %s158 = sphi 0, %s156
    %s159 = sphi 0, %s158
    %s173 = sphi 0, %s159
    %s177 = sphi 0, %s177
    %s179 = sphi 0, %s177
    %s180 = sphi 0, %s179
    %s194 = sphi 0, %s180
    %s198 = sphi 0, %s198
    %s200 = sphi 0, %s198
    %s201 = sphi 0, %s200
    %s215 = sphi 0, %s201
    %s219 = sphi 0, %s219
    %s221 = sphi 0, %s219
    %s222 = sphi 0, %s221
    %s236 = sphi 0, %s222
    %s240 = sphi 0, %s240
    %s242 = sphi 0, %s240
    %s243 = sphi 0, %s242
    %s257 = sphi 0, %s243
    %s263 = sphi 0, %s265
    %s266 = sphi 0, %s263
    %s267 = sphi 0, %s266
    %s283 = sphi 0, %s267
  $region4: #{mfa_forward.1} parent=0 // loop_header_branch
    %20 = sbr.rel (%p18) target = $region8
  $region5: #{mfa_forward.1} parent=0 // loop_body
    %s22 = ssub.s32 %s17, 1
    %s23 = ssub.s32 %s17, 2
    %s24 = sadd.s32 %s17, 1
    %s25 = ssub.s32 %s17, %s24
    %p26 = scmp.eq.s32.totalorder %s25, 0
    %s28 = sadd.s32 %s27, 1
    %s29 = scalar_select %p26, %s27, %s28
    %p32 = pneg %p26
    %p33 = scmp.eq.s32.totalorder %s17, 1
    %p34 = por %p32, %p33
    %p35 = scmp.ne.s32.totalorder %s27, %s30
    %p36 = scmp.eq.s32.totalorder %s17, 0
    %p37 = por %p35, %p36
    %p38 = scmp.ne.s32.totalorder %s27, %s30
    %p39 = scmp.eq.s32.totalorder %s22, 1
    %p40 = por %p38, %p39
    %p41 = scmp.ne.s32.totalorder %s30, %s31
    %p42 = scmp.eq.s32.totalorder %s22, 0
    %p43 = por %p41, %p42
    %p44 = scmp.ne.s32.totalorder %s30, %s31
    %p45 = scmp.eq.s32.totalorder %s23, 1
    %p46 = por %p44, %p45
    %p48 = scmp.ne.s32.totalorder %s31, %s47
    %p49 = scmp.eq.s32.totalorder %s23, 0
    %p50 = por %p48, %p49
    %s52 = sadd.s32 %s51, 1
    %p55 = scmp.eq.s32.totalorder %s17, 1
    %p56 = scmp.ne.s32.totalorder %s51, %s53
    %p57 = scmp.eq.s32.totalorder %s17, 0
    %p58 = por %p56, %p57
    %p59 = scmp.ne.s32.totalorder %s51, %s53
    %p60 = scmp.eq.s32.totalorder %s22, 1
    %p61 = por %p59, %p60
    %p62 = scmp.ne.s32.totalorder %s53, %s54
    %p63 = scmp.eq.s32.totalorder %s22, 0
    %p64 = por %p62, %p63
    %p65 = scmp.ne.s32.totalorder %s53, %s54
    %p66 = scmp.eq.s32.totalorder %s23, 1
    %p67 = por %p65, %p66
    %p69 = scmp.ne.s32.totalorder %s54, %s68
    %p70 = scmp.eq.s32.totalorder %s23, 0
    %p71 = por %p69, %p70
    %s73 = sadd.s32 %s72, 1
    %p76 = scmp.eq.s32.totalorder %s17, 1
    %p77 = scmp.ne.s32.totalorder %s72, %s74
    %p78 = scmp.eq.s32.totalorder %s17, 0
    %p79 = por %p77, %p78
    %p80 = scmp.ne.s32.totalorder %s72, %s74
    %p81 = scmp.eq.s32.totalorder %s22, 1
    %p82 = por %p80, %p81
    %p83 = scmp.ne.s32.totalorder %s74, %s75
    %p84 = scmp.eq.s32.totalorder %s22, 0
    %p85 = por %p83, %p84
    %p86 = scmp.ne.s32.totalorder %s74, %s75
    %p87 = scmp.eq.s32.totalorder %s23, 1
    %p88 = por %p86, %p87
    %p90 = scmp.ne.s32.totalorder %s75, %s89
    %p91 = scmp.eq.s32.totalorder %s23, 0
    %p92 = por %p90, %p91
    %s94 = sadd.s32 %s93, 1
    %p97 = scmp.eq.s32.totalorder %s17, 1
    %p98 = scmp.ne.s32.totalorder %s93, %s95
    %p99 = scmp.eq.s32.totalorder %s17, 0
    %p100 = por %p98, %p99
    %p101 = scmp.ne.s32.totalorder %s93, %s95
    %p102 = scmp.eq.s32.totalorder %s22, 1
    %p103 = por %p101, %p102
    %p104 = scmp.ne.s32.totalorder %s95, %s96
    %p105 = scmp.eq.s32.totalorder %s22, 0
    %p106 = por %p104, %p105
    %p107 = scmp.ne.s32.totalorder %s95, %s96
    %p108 = scmp.eq.s32.totalorder %s23, 1
    %p109 = por %p107, %p108
    %p111 = scmp.ne.s32.totalorder %s96, %s110
    %p112 = scmp.eq.s32.totalorder %s23, 0
    %p113 = por %p111, %p112
    %s115 = sadd.s32 %s114, 1
    %p118 = scmp.eq.s32.totalorder %s17, 1
    %p119 = scmp.ne.s32.totalorder %s114, %s116
    %p120 = scmp.eq.s32.totalorder %s17, 0
    %p121 = por %p119, %p120
    %p122 = scmp.ne.s32.totalorder %s114, %s116
    %p123 = scmp.eq.s32.totalorder %s22, 1
    %p124 = por %p122, %p123
    %p125 = scmp.ne.s32.totalorder %s116, %s117
    %p126 = scmp.eq.s32.totalorder %s22, 0
    %p127 = por %p125, %p126
    %p128 = scmp.ne.s32.totalorder %s116, %s117
    %p129 = scmp.eq.s32.totalorder %s23, 1
    %p130 = por %p128, %p129
    %p132 = scmp.ne.s32.totalorder %s117, %s131
    %p133 = scmp.eq.s32.totalorder %s23, 0
    %p134 = por %p132, %p133
    %s136 = sadd.s32 %s135, 1
    %p139 = scmp.eq.s32.totalorder %s17, 1
    %p140 = scmp.ne.s32.totalorder %s135, %s137
    %p141 = scmp.eq.s32.totalorder %s17, 0
    %p142 = por %p140, %p141
    %p143 = scmp.ne.s32.totalorder %s135, %s137
    %p144 = scmp.eq.s32.totalorder %s22, 1
    %p145 = por %p143, %p144
    %p146 = scmp.ne.s32.totalorder %s137, %s138
    %p147 = scmp.eq.s32.totalorder %s22, 0
    %p148 = por %p146, %p147
    %p149 = scmp.ne.s32.totalorder %s137, %s138
    %p150 = scmp.eq.s32.totalorder %s23, 1
    %p151 = por %p149, %p150
    %p153 = scmp.ne.s32.totalorder %s138, %s152
    %p154 = scmp.eq.s32.totalorder %s23, 0
    %p155 = por %p153, %p154
    %s157 = sadd.s32 %s156, 1
    %p160 = scmp.eq.s32.totalorder %s17, 1
    %p161 = scmp.ne.s32.totalorder %s156, %s158
    %p162 = scmp.eq.s32.totalorder %s17, 0
    %p163 = por %p161, %p162
    %p164 = scmp.ne.s32.totalorder %s156, %s158
    %p165 = scmp.eq.s32.totalorder %s22, 1
    %p166 = por %p164, %p165
    %p167 = scmp.ne.s32.totalorder %s158, %s159
    %p168 = scmp.eq.s32.totalorder %s22, 0
    %p169 = por %p167, %p168
    %p170 = scmp.ne.s32.totalorder %s158, %s159
    %p171 = scmp.eq.s32.totalorder %s23, 1
    %p172 = por %p170, %p171
    %p174 = scmp.ne.s32.totalorder %s159, %s173
    %p175 = scmp.eq.s32.totalorder %s23, 0
    %p176 = por %p174, %p175
    %s178 = sadd.s32 %s177, 1
    %p181 = scmp.eq.s32.totalorder %s17, 1
    %p182 = scmp.ne.s32.totalorder %s177, %s179
    %p183 = scmp.eq.s32.totalorder %s17, 0
    %p184 = por %p182, %p183
    %p185 = scmp.ne.s32.totalorder %s177, %s179
    %p186 = scmp.eq.s32.totalorder %s22, 1
    %p187 = por %p185, %p186
    %p188 = scmp.ne.s32.totalorder %s179, %s180
    %p189 = scmp.eq.s32.totalorder %s22, 0
    %p190 = por %p188, %p189
    %p191 = scmp.ne.s32.totalorder %s179, %s180
    %p192 = scmp.eq.s32.totalorder %s23, 1
    %p193 = por %p191, %p192
    %p195 = scmp.ne.s32.totalorder %s180, %s194
    %p196 = scmp.eq.s32.totalorder %s23, 0
    %p197 = por %p195, %p196
    %s199 = sadd.s32 %s198, 1
    %p202 = scmp.eq.s32.totalorder %s17, 1
    %p203 = scmp.ne.s32.totalorder %s198, %s200
    %p204 = scmp.eq.s32.totalorder %s17, 0
    %p205 = por %p203, %p204
    %p206 = scmp.ne.s32.totalorder %s198, %s200
    %p207 = scmp.eq.s32.totalorder %s22, 1
    %p208 = por %p206, %p207
    %p209 = scmp.ne.s32.totalorder %s200, %s201
    %p210 = scmp.eq.s32.totalorder %s22, 0
    %p211 = por %p209, %p210
    %p212 = scmp.ne.s32.totalorder %s200, %s201
    %p213 = scmp.eq.s32.totalorder %s23, 1
    %p214 = por %p212, %p213
    %p216 = scmp.ne.s32.totalorder %s201, %s215
    %p217 = scmp.eq.s32.totalorder %s23, 0
    %p218 = por %p216, %p217
    %s220 = sadd.s32 %s219, 1
    %p223 = scmp.eq.s32.totalorder %s17, 1
    %p224 = scmp.ne.s32.totalorder %s219, %s221
    %p225 = scmp.eq.s32.totalorder %s17, 0
    %p226 = por %p224, %p225
    %p227 = scmp.ne.s32.totalorder %s219, %s221
    %p228 = scmp.eq.s32.totalorder %s22, 1
    %p229 = por %p227, %p228
    %p230 = scmp.ne.s32.totalorder %s221, %s222
    %p231 = scmp.eq.s32.totalorder %s22, 0
    %p232 = por %p230, %p231
    %p233 = scmp.ne.s32.totalorder %s221, %s222
    %p234 = scmp.eq.s32.totalorder %s23, 1
    %p235 = por %p233, %p234
    %p237 = scmp.ne.s32.totalorder %s222, %s236
    %p238 = scmp.eq.s32.totalorder %s23, 0
    %p239 = por %p237, %p238
    %s241 = sadd.s32 %s240, 1
    %p244 = scmp.eq.s32.totalorder %s17, 1
    %p245 = scmp.ne.s32.totalorder %s240, %s242
    %p246 = scmp.eq.s32.totalorder %s17, 0
    %p247 = por %p245, %p246
    %p248 = scmp.ne.s32.totalorder %s240, %s242
    %p249 = scmp.eq.s32.totalorder %s22, 1
    %p250 = por %p248, %p249
    %p251 = scmp.ne.s32.totalorder %s242, %s243
    %p252 = scmp.eq.s32.totalorder %s22, 0
    %p253 = por %p251, %p252
    %p254 = scmp.ne.s32.totalorder %s242, %s243
    %p255 = scmp.eq.s32.totalorder %s23, 1
    %p256 = por %p254, %p255
    %p258 = scmp.ne.s32.totalorder %s243, %s257
    %p259 = scmp.eq.s32.totalorder %s23, 0
    %p260 = por %p258, %p259
    %s261 = ssub.s32 %s17, %s24
    %p262 = scmp.eq.s32.totalorder %s261, 0
    %s264 = sadd.s32 %s263, 1
    %s265 = scalar_select %p262, %s263, %s264
    %p268 = pneg %p262
    %p269 = scmp.eq.s32.totalorder %s17, 1
    %p270 = por %p268, %p269
    %p271 = scmp.ne.s32.totalorder %s263, %s266
    %p272 = scmp.eq.s32.totalorder %s17, 0
    %p273 = por %p271, %p272
    %p274 = scmp.ne.s32.totalorder %s263, %s266
    %p275 = scmp.eq.s32.totalorder %s22, 1
    %p276 = por %p274, %p275
    %p277 = scmp.ne.s32.totalorder %s266, %s267
    %p278 = scmp.eq.s32.totalorder %s22, 0
    %p279 = por %p277, %p278
    %p280 = scmp.ne.s32.totalorder %s266, %s267
    %p281 = scmp.eq.s32.totalorder %s23, 1
    %p282 = por %p280, %p281
    %p284 = scmp.ne.s32.totalorder %s267, %s283
    %p285 = scmp.eq.s32.totalorder %s23, 0
    %p286 = por %p284, %p285
    %p287 = scmp.le.s32.totalorder 1, %s17
    %p288 = scmp.lt.s32.totalorder %s17, 3
    %p289 = pnand %p287, %p288
    %p290 = pneg %p289
    // Predicated region
    $region9: #{mfa_forward.1} parent=5 // pred_check
      _
    $region10: #{mfa_forward.1} parent=5 // pred_check_branch
      %292 = sbr.rel (%p289) target = $region12
    $region11: #{mfa_forward.1} parent=5 // pred_region
      %s293 = ssub.s32 %s17, 1
      // Predicated region
      $region13: #{mfa_forward.1} parent=11 // pred_check
        %p294 = pneg %p64
      $region14: #{mfa_forward.1} parent=11 // pred_check_branch
        %296 = sbr.rel (%p294) target = $region16
      $region15: #{mfa_forward.1} parent=11 // pred_region
        _
      $region16: #{mfa_forward.1} parent=11 // pred_fallthru
        _
      // Predicated region
      $region17: #{mfa_forward.1} parent=11 // pred_check
        %p297 = pneg %p85
      $region18: #{mfa_forward.1} parent=11 // pred_check_branch
        %299 = sbr.rel (%p297) target = $region20
      $region19: #{mfa_forward.1} parent=11 // pred_region
        _
      $region20: #{mfa_forward.1} parent=11 // pred_fallthru
        _
      // Predicated region
      $region21: #{mfa_forward.1} parent=11 // pred_check
        %p300 = pneg %p106
      $region22: #{mfa_forward.1} parent=11 // pred_check_branch
        %302 = sbr.rel (%p300) target = $region24
      $region23: #{mfa_forward.1} parent=11 // pred_region
        _
      $region24: #{mfa_forward.1} parent=11 // pred_fallthru
        _
      // Predicated region
      $region25: #{mfa_forward.1} parent=11 // pred_check
        %p303 = pneg %p127
      $region26: #{mfa_forward.1} parent=11 // pred_check_branch
        %305 = sbr.rel (%p303) target = $region28
      $region27: #{mfa_forward.1} parent=11 // pred_region
        _
      $region28: #{mfa_forward.1} parent=11 // pred_fallthru
        _
      // Predicated region
      $region29: #{mfa_forward.1} parent=11 // pred_check
        %p306 = pneg %p148
      $region30: #{mfa_forward.1} parent=11 // pred_check_branch
        %308 = sbr.rel (%p306) target = $region32
      $region31: #{mfa_forward.1} parent=11 // pred_region
        _
      $region32: #{mfa_forward.1} parent=11 // pred_fallthru
        _
      // Predicated region
      $region33: #{mfa_forward.1} parent=11 // pred_check
        %p309 = pneg %p169
      $region34: #{mfa_forward.1} parent=11 // pred_check_branch
        %311 = sbr.rel (%p309) target = $region36
      $region35: #{mfa_forward.1} parent=11 // pred_region
        _
      $region36: #{mfa_forward.1} parent=11 // pred_fallthru
        _
      // Predicated region
      $region37: #{mfa_forward.1} parent=11 // pred_check
        %p312 = pneg %p190
      $region38: #{mfa_forward.1} parent=11 // pred_check_branch
        %314 = sbr.rel (%p312) target = $region40
      $region39: #{mfa_forward.1} parent=11 // pred_region
        _
      $region40: #{mfa_forward.1} parent=11 // pred_fallthru
        _
      // Predicated region
      $region41: #{mfa_forward.1} parent=11 // pred_check
        %p315 = pneg %p211
      $region42: #{mfa_forward.1} parent=11 // pred_check_branch
        %317 = sbr.rel (%p315) target = $region44
      $region43: #{mfa_forward.1} parent=11 // pred_region
        _
      $region44: #{mfa_forward.1} parent=11 // pred_fallthru
        _
      // Predicated region
      $region45: #{mfa_forward.1} parent=11 // pred_check
        %p318 = pneg %p232
      $region46: #{mfa_forward.1} parent=11 // pred_check_branch
        %320 = sbr.rel (%p318) target = $region48
      $region47: #{mfa_forward.1} parent=11 // pred_region
        _
      $region48: #{mfa_forward.1} parent=11 // pred_fallthru
        _
      // Predicated region
      $region49: #{mfa_forward.1} parent=11 // pred_check
        %p321 = pneg %p253
      $region50: #{mfa_forward.1} parent=11 // pred_check_branch
        %323 = sbr.rel (%p321) target = $region52
      $region51: #{mfa_forward.1} parent=11 // pred_region
        _
      $region52: #{mfa_forward.1} parent=11 // pred_fallthru
        _
    $region12: #{mfa_forward.1} parent=5 // pred_fallthru
      _
    %p324 = scmp.lt.s32.totalorder %s17, 2
    // Predicated region
    $region53: #{mfa_forward.1} parent=5 // pred_check
      %p325 = pneg %p324
    $region54: #{mfa_forward.1} parent=5 // pred_check_branch
      %327 = sbr.rel (%p325) target = $region56
    $region55: #{mfa_forward.1} parent=5 // pred_region
      // Predicated region
      $region57: #{mfa_forward.1} parent=55 // pred_check
        %p328 = pneg %p37
      $region58: #{mfa_forward.1} parent=55 // pred_check_branch
        %330 = sbr.rel (%p328) target = $region60
      $region59: #{mfa_forward.1} parent=55 // pred_region
        %s331 = smul.u32 2, %s17
        %p332 = scmp.lt.s32.totalorder %s331, 3
        %s333 = scalar_select %p332, %s331, 3
        %s334 = smul.addr %s333, 5
        %s335 = smul.addr %s334, 8
        %s336 = scalar_lea.vmem %s0, %s335
        %s337 = smul.u32 2, %s17
      $region60: #{mfa_forward.1} parent=55 // pred_fallthru
        _
    $region56: #{mfa_forward.1} parent=5 // pred_fallthru
      _
    %p338 = scmp.le.s32.totalorder 1, %s17
    %p339 = scmp.lt.s32.totalorder %s17, 3
    %p340 = pnand %p338, %p339
    %p341 = pneg %p340
    // Predicated region
    $region61: #{mfa_forward.1} parent=5 // pred_check
      _
    $region62: #{mfa_forward.1} parent=5 // pred_check_branch
      %343 = sbr.rel (%p340) target = $region64
    $region63: #{mfa_forward.1} parent=5 // pred_region
      %s344 = ssub.s32 %s17, 1
      %s345 = smul.u32 2, %s22
      %p346 = scmp.lt.s32.totalorder %s345, 3
      %s347 = scalar_select %p346, %s345, 3
      %s348 = smul.addr %s347, 5
      %s349 = smul.addr %s348, 8
      %s350 = scalar_lea.vmem %s0, %s349
      %p351 = pneg %p43
      %p352 = pneg %p40
      %p353 = pneg %p64
      %p354 = pneg %p61
      %p355 = pneg %p85
      %p356 = pneg %p82
      %p357 = pneg %p106
      %p358 = pneg %p103
      %p359 = pneg %p127
      %p360 = pneg %p124
      %p361 = pneg %p148
      %p362 = pneg %p145
      %p363 = pneg %p169
      %p364 = pneg %p166
      %p365 = pneg %p190
      %p366 = pneg %p187
      %p367 = pneg %p211
      %p368 = pneg %p208
      %p369 = pneg %p232
      %p370 = pneg %p229
      %p371 = pneg %p253
      %p372 = pneg %p250
      %p373 = pneg %p279
      %p374 = pneg %p276
      %s375 = smul.u32 2, %s22
      %p376 = scmp.lt.s32.totalorder %s375, 3
      %s377 = scalar_select %p376, %s375, 3
      %s378 = smul.addr %s377, 8
      %s379 = scalar_lea.vmem %s11, %s378
      %s380 = smul.u32 2, %s22
      %p381 = scmp.lt.s32.totalorder %s380, 3
      %s382 = scalar_select %p381, %s380, 3
      %s383 = smul.addr %s382, 5
      %s384 = smul.addr %s383, 8
      %s385 = scalar_lea.vmem %s0, %s384
      %s386 = smul.u32 2, %s22
      %s387 = smul.u32 2, %s22
      %p388 = scmp.lt.s32.totalorder %s387, 3
      %s389 = scalar_select %p388, %s387, 3
      %s390 = smul.addr %s389, 8
      %s391 = scalar_lea.vmem %s11, %s390
      %s392 = smul.u32 2, %s22
      %v393 = vld [vmem:[%s385] sm:$0xff]
      %v394 = vld [vmem:[%s385 + $0x8] sm:$0xff]
      %v395 = vld [vmem:[%s385 + $0x10] sm:$0xff]
      %v396 = vld [vmem:[%s385 + $0x18] sm:$0xff]
      %v397 = vld [vmem:[%s385 + $0x20] sm:$0xff]
      %v398 = vld [vmem:[%s385 + $0x28] sm:$0xff]
      %v399 = vld [vmem:[%s385 + $0x30] sm:$0xff]
      %v400 = vld [vmem:[%s385 + $0x38] sm:$0xff]
      %v401 = vld [vmem:[%s385 + $0x40] sm:$0xff]
      %v402 = vld [vmem:[%s385 + $0x48] sm:$0xff]
      %v403 = vld [vmem:[%s1] sm:$0xff]
      %v404 = vld [vmem:[%s1 + $0x8] sm:$0xff]
      %v405 = vld [vmem:[%s1 + $0x10] sm:$0xff]
      %v406 = vld [vmem:[%s1 + $0x18] sm:$0xff]
      %v407 = vld [vmem:[%s1 + $0x20] sm:$0xff]
      %v408 = vld [vmem:[%s1 + $0x28] sm:$0xff]
      %v409 = vld [vmem:[%s1 + $0x30] sm:$0xff]
      %v410 = vld [vmem:[%s1 + $0x38] sm:$0xff]
      %v411 = vld [vmem:[%s1 + $0x40] sm:$0xff]
      %v412 = vld [vmem:[%s1 + $0x48] sm:$0xff]
      %v413 = vld [vmem:[%s1 + $0x50] sm:$0xff]
      %v414 = vld [vmem:[%s1 + $0x58] sm:$0xff]
      %v415 = vld [vmem:[%s1 + $0x60] sm:$0xff]
      %v416 = vld [vmem:[%s1 + $0x68] sm:$0xff]
      %v417 = vld [vmem:[%s1 + $0x70] sm:$0xff]
      %v418 = vld [vmem:[%s1 + $0x78] sm:$0xff]
      %v419 = vld [vmem:[%s1 + $0x80] sm:$0xff]
      %v420 = vld [vmem:[%s1 + $0x88] sm:$0xff]
      %v421 = vld [vmem:[%s1 + $0x90] sm:$0xff]
      %v422 = vld [vmem:[%s1 + $0x98] sm:$0xff]
      %v423 = vld [vmem:[%s1 + $0xa0] sm:$0xff]
      %v424 = vld [vmem:[%s1 + $0xa8] sm:$0xff]
      %v425 = vld [vmem:[%s1 + $0xb0] sm:$0xff]
      %v426 = vld [vmem:[%s1 + $0xb8] sm:$0xff]
      %v427 = vld [vmem:[%s1 + $0xc0] sm:$0xff]
      %v428 = vld [vmem:[%s1 + $0xc8] sm:$0xff]
      %v429 = vld [vmem:[%s1 + $0xd0] sm:$0xff]
      %v430 = vld [vmem:[%s1 + $0xd8] sm:$0xff]
      %v431 = vld [vmem:[%s1 + $0xe0] sm:$0xff]
      %v432 = vld [vmem:[%s1 + $0xe8] sm:$0xff]
      %v433 = vld [vmem:[%s1 + $0xf0] sm:$0xff]
      %v434 = vld [vmem:[%s1 + $0xf8] sm:$0xff]
      %v435 = vld [vmem:[%s1 + $0x100] sm:$0xff]
      %v436 = vld [vmem:[%s1 + $0x108] sm:$0xff]
      %v437 = vld [vmem:[%s1 + $0x110] sm:$0xff]
      %v438 = vld [vmem:[%s1 + $0x118] sm:$0xff]
      %v439 = vld [vmem:[%s1 + $0x120] sm:$0xff]
      %v440 = vld [vmem:[%s1 + $0x128] sm:$0xff]
      %v441 = vld [vmem:[%s1 + $0x130] sm:$0xff]
      %v442 = vld [vmem:[%s1 + $0x138] sm:$0xff]
      %v443 = vld [vmem:[%s1 + $0x140] sm:$0xff]
      %v444 = vld [vmem:[%s1 + $0x148] sm:$0xff]
      %v445 = vld [vmem:[%s1 + $0x150] sm:$0xff]
      %v446 = vld [vmem:[%s1 + $0x158] sm:$0xff]
      %v447 = vld [vmem:[%s1 + $0x160] sm:$0xff]
      %v448 = vld [vmem:[%s1 + $0x168] sm:$0xff]
      %v449 = vld [vmem:[%s1 + $0x170] sm:$0xff]
      %v450 = vld [vmem:[%s1 + $0x178] sm:$0xff]
      %v451 = vld [vmem:[%s1 + $0x180] sm:$0xff]
      %v452 = vld [vmem:[%s1 + $0x188] sm:$0xff]
      %v453 = vld [vmem:[%s1 + $0x190] sm:$0xff]
      %v454 = vld [vmem:[%s1 + $0x198] sm:$0xff]
      %v455 = vld [vmem:[%s1 + $0x1a0] sm:$0xff]
      %v456 = vld [vmem:[%s1 + $0x1a8] sm:$0xff]
      %v457 = vld [vmem:[%s1 + $0x1b0] sm:$0xff]
      %v458 = vld [vmem:[%s1 + $0x1b8] sm:$0xff]
      %v459 = vld [vmem:[%s1 + $0x1c0] sm:$0xff]
      %v460 = vld [vmem:[%s1 + $0x1c8] sm:$0xff]
      %v461 = vld [vmem:[%s1 + $0x1d0] sm:$0xff]
      %v462 = vld [vmem:[%s1 + $0x1d8] sm:$0xff]
      %v463 = vld [vmem:[%s1 + $0x1e0] sm:$0xff]
      %v464 = vld [vmem:[%s1 + $0x1e8] sm:$0xff]
      %v465 = vld [vmem:[%s1 + $0x1f0] sm:$0xff]
      %v466 = vld [vmem:[%s1 + $0x1f8] sm:$0xff]
      %v467 = vld [vmem:[%s1 + $0x200] sm:$0xff]
      %v468 = vld [vmem:[%s1 + $0x208] sm:$0xff]
      %v469 = vld [vmem:[%s1 + $0x210] sm:$0xff]
      %v470 = vld [vmem:[%s1 + $0x218] sm:$0xff]
      %v471 = vld [vmem:[%s1 + $0x220] sm:$0xff]
      %v472 = vld [vmem:[%s1 + $0x228] sm:$0xff]
      %v473 = vld [vmem:[%s1 + $0x230] sm:$0xff]
      %v474 = vld [vmem:[%s1 + $0x238] sm:$0xff]
      %v475 = vld [vmem:[%s1 + $0x240] sm:$0xff]
      %v476 = vld [vmem:[%s1 + $0x248] sm:$0xff]
      %v477 = vld [vmem:[%s1 + $0x250] sm:$0xff]
      %v478 = vld [vmem:[%s1 + $0x258] sm:$0xff]
      %v479 = vld [vmem:[%s1 + $0x260] sm:$0xff]
      %v480 = vld [vmem:[%s1 + $0x268] sm:$0xff]
      %v481 = vld [vmem:[%s1 + $0x270] sm:$0xff]
      %v482 = vld [vmem:[%s1 + $0x278] sm:$0xff]
      %v483 = vld [vmem:[%s1 + $0x280] sm:$0xff]
      %v484 = vld [vmem:[%s1 + $0x288] sm:$0xff]
      %v485 = vld [vmem:[%s1 + $0x290] sm:$0xff]
      %v486 = vld [vmem:[%s1 + $0x298] sm:$0xff]
      %v487 = vld [vmem:[%s1 + $0x2a0] sm:$0xff]
      %v488 = vld [vmem:[%s1 + $0x2a8] sm:$0xff]
      %v489 = vld [vmem:[%s1 + $0x2b0] sm:$0xff]
      %v490 = vld [vmem:[%s1 + $0x2b8] sm:$0xff]
      %v491 = vld [vmem:[%s1 + $0x2c0] sm:$0xff]
      %v492 = vld [vmem:[%s1 + $0x2c8] sm:$0xff]
      %v493 = vld [vmem:[%s1 + $0x2d0] sm:$0xff]
      %v494 = vld [vmem:[%s1 + $0x2d8] sm:$0xff]
      %v495 = vld [vmem:[%s1 + $0x2e0] sm:$0xff]
      %v496 = vld [vmem:[%s1 + $0x2e8] sm:$0xff]
      %v497 = vld [vmem:[%s1 + $0x2f0] sm:$0xff]
      %v498 = vld [vmem:[%s1 + $0x2f8] sm:$0xff]
      %v499 = vld [vmem:[%s1 + $0x300] sm:$0xff]
      %v500 = vld [vmem:[%s1 + $0x308] sm:$0xff]
      %v501 = vld [vmem:[%s1 + $0x310] sm:$0xff]
      %v502 = vld [vmem:[%s1 + $0x318] sm:$0xff]
      %v503 = vld [vmem:[%s1 + $0x320] sm:$0xff]
      %v504 = vld [vmem:[%s1 + $0x328] sm:$0xff]
      %v505 = vld [vmem:[%s1 + $0x330] sm:$0xff]
      %v506 = vld [vmem:[%s1 + $0x338] sm:$0xff]
      %v507 = vld [vmem:[%s1 + $0x340] sm:$0xff]
      %v508 = vld [vmem:[%s1 + $0x348] sm:$0xff]
      %v509 = vld [vmem:[%s1 + $0x350] sm:$0xff]
      %v510 = vld [vmem:[%s1 + $0x358] sm:$0xff]
      %v511 = vld [vmem:[%s1 + $0x360] sm:$0xff]
      %v512 = vld [vmem:[%s1 + $0x368] sm:$0xff]
      %v513 = vld [vmem:[%s1 + $0x370] sm:$0xff]
      %v514 = vld [vmem:[%s1 + $0x378] sm:$0xff]
      %v515 = vld [vmem:[%s1 + $0x380] sm:$0xff]
      %v516 = vld [vmem:[%s1 + $0x388] sm:$0xff]
      %v517 = vld [vmem:[%s1 + $0x390] sm:$0xff]
      %v518 = vld [vmem:[%s1 + $0x398] sm:$0xff]
      %v519 = vld [vmem:[%s1 + $0x3a0] sm:$0xff]
      %v520 = vld [vmem:[%s1 + $0x3a8] sm:$0xff]
      %v521 = vld [vmem:[%s1 + $0x3b0] sm:$0xff]
      %v522 = vld [vmem:[%s1 + $0x3b8] sm:$0xff]
      %v523 = vld [vmem:[%s1 + $0x3c0] sm:$0xff]
      %v524 = vld [vmem:[%s1 + $0x3c8] sm:$0xff]
      %v525 = vld [vmem:[%s1 + $0x3d0] sm:$0xff]
      %v526 = vld [vmem:[%s1 + $0x3d8] sm:$0xff]
      %v527 = vld [vmem:[%s1 + $0x3e0] sm:$0xff]
      %v528 = vld [vmem:[%s1 + $0x3e8] sm:$0xff]
      %v529 = vld [vmem:[%s1 + $0x3f0] sm:$0xff]
      %v530 = vld [vmem:[%s1 + $0x3f8] sm:$0xff]
      %v531 = vld [vmem:[%s1 + $0x400] sm:$0xff]
      %v532 = vld [vmem:[%s1 + $0x408] sm:$0xff]
      %v533 = vld [vmem:[%s1 + $0x410] sm:$0xff]
      %v534 = vld [vmem:[%s1 + $0x418] sm:$0xff]
      %v535 = vld [vmem:[%s1 + $0x420] sm:$0xff]
      %v536 = vld [vmem:[%s1 + $0x428] sm:$0xff]
      %v537 = vld [vmem:[%s1 + $0x430] sm:$0xff]
      %v538 = vld [vmem:[%s1 + $0x438] sm:$0xff]
      %v539 = vld [vmem:[%s1 + $0x440] sm:$0xff]
      %v540 = vld [vmem:[%s1 + $0x448] sm:$0xff]
      %v541 = vld [vmem:[%s1 + $0x450] sm:$0xff]
      %v542 = vld [vmem:[%s1 + $0x458] sm:$0xff]
      %v543 = vld [vmem:[%s1 + $0x460] sm:$0xff]
      %v544 = vld [vmem:[%s1 + $0x468] sm:$0xff]
      %v545 = vld [vmem:[%s1 + $0x470] sm:$0xff]
      %v546 = vld [vmem:[%s1 + $0x478] sm:$0xff]
      %v547 = vld [vmem:[%s1 + $0x480] sm:$0xff]
      %v548 = vld [vmem:[%s1 + $0x488] sm:$0xff]
      %v549 = vld [vmem:[%s1 + $0x490] sm:$0xff]
      %v550 = vld [vmem:[%s1 + $0x498] sm:$0xff]
      %v551 = vld [vmem:[%s1 + $0x4a0] sm:$0xff]
      %v552 = vld [vmem:[%s1 + $0x4a8] sm:$0xff]
      %v553 = vld [vmem:[%s1 + $0x4b0] sm:$0xff]
      %v554 = vld [vmem:[%s1 + $0x4b8] sm:$0xff]
      %v555 = vld [vmem:[%s1 + $0x4c0] sm:$0xff]
      %v556 = vld [vmem:[%s1 + $0x4c8] sm:$0xff]
      %v557 = vld [vmem:[%s1 + $0x4d0] sm:$0xff]
      %v558 = vld [vmem:[%s1 + $0x4d8] sm:$0xff]
      %v559 = vld [vmem:[%s1 + $0x4e0] sm:$0xff]
      %v560 = vld [vmem:[%s1 + $0x4e8] sm:$0xff]
      %v561 = vld [vmem:[%s1 + $0x4f0] sm:$0xff]
      %v562 = vld [vmem:[%s1 + $0x4f8] sm:$0xff]
      %v563 = vld [vmem:[%s1 + $0x500] sm:$0xff]
      %v564 = vld [vmem:[%s1 + $0x508] sm:$0xff]
      %v565 = vld [vmem:[%s1 + $0x510] sm:$0xff]
      %v566 = vld [vmem:[%s1 + $0x518] sm:$0xff]
      %v567 = vld [vmem:[%s1 + $0x520] sm:$0xff]
      %v568 = vld [vmem:[%s1 + $0x528] sm:$0xff]
      %v569 = vld [vmem:[%s1 + $0x530] sm:$0xff]
      %v570 = vld [vmem:[%s1 + $0x538] sm:$0xff]
      %v571 = vld [vmem:[%s1 + $0x540] sm:$0xff]
      %v572 = vld [vmem:[%s1 + $0x548] sm:$0xff]
      %v573 = vld [vmem:[%s1 + $0x550] sm:$0xff]
      %v574 = vld [vmem:[%s1 + $0x558] sm:$0xff]
      %v575 = vld [vmem:[%s1 + $0x560] sm:$0xff]
      %v576 = vld [vmem:[%s1 + $0x568] sm:$0xff]
      %v577 = vld [vmem:[%s1 + $0x570] sm:$0xff]
      %v578 = vld [vmem:[%s1 + $0x578] sm:$0xff]
      %v579 = vld [vmem:[%s1 + $0x580] sm:$0xff]
      %v580 = vld [vmem:[%s1 + $0x588] sm:$0xff]
      %v581 = vld [vmem:[%s1 + $0x590] sm:$0xff]
      %v582 = vld [vmem:[%s1 + $0x598] sm:$0xff]
      %v583 = vld [vmem:[%s1 + $0x5a0] sm:$0xff]
      %v584 = vld [vmem:[%s1 + $0x5a8] sm:$0xff]
      %v585 = vld [vmem:[%s1 + $0x5b0] sm:$0xff]
      %v586 = vld [vmem:[%s1 + $0x5b8] sm:$0xff]
      %v587 = vld [vmem:[%s1 + $0x5c0] sm:$0xff]
      %v588 = vld [vmem:[%s1 + $0x5c8] sm:$0xff]
      %v589 = vld [vmem:[%s1 + $0x5d0] sm:$0xff]
      %v590 = vld [vmem:[%s1 + $0x5d8] sm:$0xff]
      %v591 = vld [vmem:[%s1 + $0x5e0] sm:$0xff]
      %v592 = vld [vmem:[%s1 + $0x5e8] sm:$0xff]
      %v593 = vld [vmem:[%s1 + $0x5f0] sm:$0xff]
      %v594 = vld [vmem:[%s1 + $0x5f8] sm:$0xff]
      %v595 = vld [vmem:[%s1 + $0x600] sm:$0xff]
      %v596 = vld [vmem:[%s1 + $0x608] sm:$0xff]
      %v597 = vld [vmem:[%s1 + $0x610] sm:$0xff]
      %v598 = vld [vmem:[%s1 + $0x618] sm:$0xff]
      %v599 = vld [vmem:[%s1 + $0x620] sm:$0xff]
      %v600 = vld [vmem:[%s1 + $0x628] sm:$0xff]
      %v601 = vld [vmem:[%s1 + $0x630] sm:$0xff]
      %v602 = vld [vmem:[%s1 + $0x638] sm:$0xff]
      %v603 = vld [vmem:[%s1 + $0x640] sm:$0xff]
      %v604 = vld [vmem:[%s1 + $0x648] sm:$0xff]
      %v605 = vld [vmem:[%s1 + $0x650] sm:$0xff]
      %v606 = vld [vmem:[%s1 + $0x658] sm:$0xff]
      %v607 = vld [vmem:[%s1 + $0x660] sm:$0xff]
      %v608 = vld [vmem:[%s1 + $0x668] sm:$0xff]
      %v609 = vld [vmem:[%s1 + $0x670] sm:$0xff]
      %v610 = vld [vmem:[%s1 + $0x678] sm:$0xff]
      %v611 = vld [vmem:[%s1 + $0x680] sm:$0xff]
      %v612 = vld [vmem:[%s1 + $0x688] sm:$0xff]
      %v613 = vld [vmem:[%s1 + $0x690] sm:$0xff]
      %v614 = vld [vmem:[%s1 + $0x698] sm:$0xff]
      %v615 = vld [vmem:[%s1 + $0x6a0] sm:$0xff]
      %v616 = vld [vmem:[%s1 + $0x6a8] sm:$0xff]
      %v617 = vld [vmem:[%s1 + $0x6b0] sm:$0xff]
      %v618 = vld [vmem:[%s1 + $0x6b8] sm:$0xff]
      %v619 = vld [vmem:[%s1 + $0x6c0] sm:$0xff]
      %v620 = vld [vmem:[%s1 + $0x6c8] sm:$0xff]
      %v621 = vld [vmem:[%s1 + $0x6d0] sm:$0xff]
      %v622 = vld [vmem:[%s1 + $0x6d8] sm:$0xff]
      %v623 = vld [vmem:[%s1 + $0x6e0] sm:$0xff]
      %v624 = vld [vmem:[%s1 + $0x6e8] sm:$0xff]
      %v625 = vld [vmem:[%s1 + $0x6f0] sm:$0xff]
      %v626 = vld [vmem:[%s1 + $0x6f8] sm:$0xff]
      %v627 = vld [vmem:[%s1 + $0x700] sm:$0xff]
      %v628 = vld [vmem:[%s1 + $0x708] sm:$0xff]
      %v629 = vld [vmem:[%s1 + $0x710] sm:$0xff]
      %v630 = vld [vmem:[%s1 + $0x718] sm:$0xff]
      %v631 = vld [vmem:[%s1 + $0x720] sm:$0xff]
      %v632 = vld [vmem:[%s1 + $0x728] sm:$0xff]
      %v633 = vld [vmem:[%s1 + $0x730] sm:$0xff]
      %v634 = vld [vmem:[%s1 + $0x738] sm:$0xff]
      %v635 = vld [vmem:[%s1 + $0x740] sm:$0xff]
      %v636 = vld [vmem:[%s1 + $0x748] sm:$0xff]
      %v637 = vld [vmem:[%s1 + $0x750] sm:$0xff]
      %v638 = vld [vmem:[%s1 + $0x758] sm:$0xff]
      %v639 = vld [vmem:[%s1 + $0x760] sm:$0xff]
      %v640 = vld [vmem:[%s1 + $0x768] sm:$0xff]
      %v641 = vld [vmem:[%s1 + $0x770] sm:$0xff]
      %v642 = vld [vmem:[%s1 + $0x778] sm:$0xff]
      %v643 = vld [vmem:[%s1 + $0x780] sm:$0xff]
      %v644 = vld [vmem:[%s1 + $0x788] sm:$0xff]
      %v645 = vld [vmem:[%s1 + $0x790] sm:$0xff]
      %v646 = vld [vmem:[%s1 + $0x798] sm:$0xff]
      %v647 = vld [vmem:[%s1 + $0x7a0] sm:$0xff]
      %v648 = vld [vmem:[%s1 + $0x7a8] sm:$0xff]
      %v649 = vld [vmem:[%s1 + $0x7b0] sm:$0xff]
      %v650 = vld [vmem:[%s1 + $0x7b8] sm:$0xff]
      %v651 = vld [vmem:[%s1 + $0x7c0] sm:$0xff]
      %v652 = vld [vmem:[%s1 + $0x7c8] sm:$0xff]
      %v653 = vld [vmem:[%s1 + $0x7d0] sm:$0xff]
      %v654 = vld [vmem:[%s1 + $0x7d8] sm:$0xff]
      %v655 = vld [vmem:[%s1 + $0x7e0] sm:$0xff]
      %v656 = vld [vmem:[%s1 + $0x7e8] sm:$0xff]
      %v657 = vld [vmem:[%s1 + $0x7f0] sm:$0xff]
      %v658 = vld [vmem:[%s1 + $0x7f8] sm:$0xff]
      %v659 = vld [vmem:[%s1 + $0x800] sm:$0xff]
      %v660 = vld [vmem:[%s1 + $0x808] sm:$0xff]
      %v661 = vld [vmem:[%s1 + $0x810] sm:$0xff]
      %v662 = vld [vmem:[%s1 + $0x818] sm:$0xff]
      %v663 = vld [vmem:[%s1 + $0x820] sm:$0xff]
      %v664 = vld [vmem:[%s1 + $0x828] sm:$0xff]
      %v665 = vld [vmem:[%s1 + $0x830] sm:$0xff]
      %v666 = vld [vmem:[%s1 + $0x838] sm:$0xff]
      %v667 = vld [vmem:[%s1 + $0x840] sm:$0xff]
      %v668 = vld [vmem:[%s1 + $0x848] sm:$0xff]
      %v669 = vld [vmem:[%s1 + $0x850] sm:$0xff]
      %v670 = vld [vmem:[%s1 + $0x858] sm:$0xff]
      %v671 = vld [vmem:[%s1 + $0x860] sm:$0xff]
      %v672 = vld [vmem:[%s1 + $0x868] sm:$0xff]
      %v673 = vld [vmem:[%s1 + $0x870] sm:$0xff]
      %v674 = vld [vmem:[%s1 + $0x878] sm:$0xff]
      %v675 = vld [vmem:[%s1 + $0x880] sm:$0xff]
      %v676 = vld [vmem:[%s1 + $0x888] sm:$0xff]
      %v677 = vld [vmem:[%s1 + $0x890] sm:$0xff]
      %v678 = vld [vmem:[%s1 + $0x898] sm:$0xff]
      %v679 = vld [vmem:[%s1 + $0x8a0] sm:$0xff]
      %v680 = vld [vmem:[%s1 + $0x8a8] sm:$0xff]
      %v681 = vld [vmem:[%s1 + $0x8b0] sm:$0xff]
      %v682 = vld [vmem:[%s1 + $0x8b8] sm:$0xff]
      %v683 = vld [vmem:[%s1 + $0x8c0] sm:$0xff]
      %v684 = vld [vmem:[%s1 + $0x8c8] sm:$0xff]
      %v685 = vld [vmem:[%s1 + $0x8d0] sm:$0xff]
      %v686 = vld [vmem:[%s1 + $0x8d8] sm:$0xff]
      %v687 = vld [vmem:[%s1 + $0x8e0] sm:$0xff]
      %v688 = vld [vmem:[%s1 + $0x8e8] sm:$0xff]
      %v689 = vld [vmem:[%s1 + $0x8f0] sm:$0xff]
      %v690 = vld [vmem:[%s1 + $0x8f8] sm:$0xff]
      %v691 = vld [vmem:[%s1 + $0x900] sm:$0xff]
      %v692 = vld [vmem:[%s1 + $0x908] sm:$0xff]
      %v693 = vld [vmem:[%s1 + $0x910] sm:$0xff]
      %v694 = vld [vmem:[%s1 + $0x918] sm:$0xff]
      %v695 = vld [vmem:[%s1 + $0x920] sm:$0xff]
      %v696 = vld [vmem:[%s1 + $0x928] sm:$0xff]
      %v697 = vld [vmem:[%s1 + $0x930] sm:$0xff]
      %v698 = vld [vmem:[%s1 + $0x938] sm:$0xff]
      %v699 = vld [vmem:[%s1 + $0x940] sm:$0xff]
      %v700 = vld [vmem:[%s1 + $0x948] sm:$0xff]
      %v701 = vld [vmem:[%s1 + $0x950] sm:$0xff]
      %v702 = vld [vmem:[%s1 + $0x958] sm:$0xff]
      %v703 = vld [vmem:[%s1 + $0x960] sm:$0xff]
      %v704 = vld [vmem:[%s1 + $0x968] sm:$0xff]
      %v705 = vld [vmem:[%s1 + $0x970] sm:$0xff]
      %v706 = vld [vmem:[%s1 + $0x978] sm:$0xff]
      %v707 = vld [vmem:[%s1 + $0x980] sm:$0xff]
      %v708 = vld [vmem:[%s1 + $0x988] sm:$0xff]
      %v709 = vld [vmem:[%s1 + $0x990] sm:$0xff]
      %v710 = vld [vmem:[%s1 + $0x998] sm:$0xff]
      %v711 = vld [vmem:[%s1 + $0x9a0] sm:$0xff]
      %v712 = vld [vmem:[%s1 + $0x9a8] sm:$0xff]
      %v713 = vld [vmem:[%s1 + $0x9b0] sm:$0xff]
      %v714 = vld [vmem:[%s1 + $0x9b8] sm:$0xff]
      %v715 = vld [vmem:[%s1 + $0x9c0] sm:$0xff]
      %v716 = vld [vmem:[%s1 + $0x9c8] sm:$0xff]
      %v717 = vld [vmem:[%s1 + $0x9d0] sm:$0xff]
      %v718 = vld [vmem:[%s1 + $0x9d8] sm:$0xff]
      %v719 = vld [vmem:[%s1 + $0x9e0] sm:$0xff]
      %v720 = vld [vmem:[%s1 + $0x9e8] sm:$0xff]
      %v721 = vld [vmem:[%s1 + $0x9f0] sm:$0xff]
      %v722 = vld [vmem:[%s1 + $0x9f8] sm:$0xff]
      %v723 = vld [vmem:[%s2] sm:$0xf]
      %v725 = vlaneseq
      %v726 = vshrl.u32 %v725, 7
      %v727 = vsub.s32 0, %v726
      %v728 = vrot.slane %v723, %v727
      %v729 = vlaneseq
      %v730 = vshrl.u32 %v729, 7
      %v731 = vsub.s32 1, %v730
      %v732 = vrot.slane %v723, %v731
      %v733 = vlaneseq
      %v734 = vshrl.u32 %v733, 7
      %v735 = vsub.s32 2, %v734
      %v736 = vrot.slane %v723, %v735
      %v737 = vlaneseq
      %v738 = vshrl.u32 %v737, 7
      %v739 = vsub.s32 3, %v738
      %v740 = vrot.slane %v723, %v739
      %745 = vmatprep.subr.mxu0 %v464
      %746 = vmatpush1.msra.mxu0 %v463
      %747 = vmatprep.subr.mxu0 %v460
      %748 = vmatpush1.msra.mxu0 %v459
      %749 = vmatprep.subr.mxu0 %v456
      %750 = vmatpush1.msra.mxu0 %v455
      %751 = vmatprep.subr.mxu0 %v452
      %752 = vmatpush1.msra.mxu0 %v451
      %753 = vmatprep.subr.mxu0 %v448
      %754 = vmatpush1.msra.mxu0 %v447
      %755 = vmatprep.subr.mxu0 %v444
      %756 = vmatpush1.msra.mxu0 %v443
      %757 = vmatprep.subr.mxu0 %v440
      %758 = vmatpush1.msra.mxu0 %v439
      %759 = vmatprep.subr.mxu0 %v436
      %760 = vmatpush1.msra.mxu0 %v435
      %761 = vmatprep.subr.mxu0 %v432
      %762 = vmatpush1.msra.mxu0 %v431
      %763 = vmatprep.subr.mxu0 %v428
      %764 = vmatpush1.msra.mxu0 %v427
      %765 = vmatprep.subr.mxu0 %v424
      %766 = vmatpush1.msra.mxu0 %v423
      %767 = vmatprep.subr.mxu0 %v420
      %768 = vmatpush1.msra.mxu0 %v419
      %769 = vmatprep.subr.mxu0 %v416
      %770 = vmatpush1.msra.mxu0 %v415
      %771 = vmatprep.subr.mxu0 %v412
      %772 = vmatpush1.msra.mxu0 %v411
      %773 = vmatprep.subr.mxu0 %v408
      %774 = vmatpush1.msra.mxu0 %v407
      %775 = vmatprep.subr.mxu0 %v404
      %776 = vmatpush1.msra.mxu0 %v403
      %777 = vmatprep.subr.mxu0 %v528
      %778 = vmatpush2.msra.mxu0 %v527
      %779 = vmatprep.subr.mxu0 %v524
      %780 = vmatpush2.msra.mxu0 %v523
      %781 = vmatprep.subr.mxu0 %v520
      %782 = vmatpush2.msra.mxu0 %v519
      %783 = vmatprep.subr.mxu0 %v516
      %784 = vmatpush2.msra.mxu0 %v515
      %785 = vmatprep.subr.mxu0 %v512
      %786 = vmatpush2.msra.mxu0 %v511
      %787 = vmatprep.subr.mxu0 %v508
      %788 = vmatpush2.msra.mxu0 %v507
      %789 = vmatprep.subr.mxu0 %v504
      %790 = vmatpush2.msra.mxu0 %v503
      %791 = vmatprep.subr.mxu0 %v500
      %792 = vmatpush2.msra.mxu0 %v499
      %793 = vmatprep.subr.mxu0 %v496
      %794 = vmatpush2.msra.mxu0 %v495
      %795 = vmatprep.subr.mxu0 %v492
      %796 = vmatpush2.msra.mxu0 %v491
      %797 = vmatprep.subr.mxu0 %v488
      %798 = vmatpush2.msra.mxu0 %v487
      %799 = vmatprep.subr.mxu0 %v484
      %800 = vmatpush2.msra.mxu0 %v483
      %801 = vmatprep.subr.mxu0 %v480
      %802 = vmatpush2.msra.mxu0 %v479
      %803 = vmatprep.subr.mxu0 %v476
      %804 = vmatpush2.msra.mxu0 %v475
      %805 = vmatprep.subr.mxu0 %v472
      %806 = vmatpush2.msra.mxu0 %v471
      %807 = vmatprep.subr.mxu0 %v468
      %808 = vmatpush2.msra.mxu0 %v467
      %809 = vmatprep.mubr.f32.mxu0 %v394
      %810 = vmatmul.mubr.f32.gmra.mxu0 %v393
      %v811 = vpop.f32.mrf.mxu0
      %v812 = vadd.f32 %v728, %v811
      %v813 = vpop.f32.mrf.mxu0
      %v814 = vadd.f32 %v732, %v813
      %815 = vmatprep.mubr.f32.mxu0 %v399
      %816 = vmatmul.mubr.f32.gmra.mxu0 %v398
      %v817 = vpop.f32.mrf.mxu0
      %v818 = vadd.f32 %v728, %v817
      %v819 = vpop.f32.mrf.mxu0
      %v820 = vadd.f32 %v732, %v819
      %821 = vdwg.mxu0
      %822 = vmatprep.subr.mxu0 %v592
      %823 = vmatpush1.msra.mxu0 %v591
      %824 = vmatprep.subr.mxu0 %v588
      %825 = vmatpush1.msra.mxu0 %v587
      %826 = vmatprep.subr.mxu0 %v584
      %827 = vmatpush1.msra.mxu0 %v583
      %828 = vmatprep.subr.mxu0 %v580
      %829 = vmatpush1.msra.mxu0 %v579
      %830 = vmatprep.subr.mxu0 %v576
      %831 = vmatpush1.msra.mxu0 %v575
      %832 = vmatprep.subr.mxu0 %v572
      %833 = vmatpush1.msra.mxu0 %v571
      %834 = vmatprep.subr.mxu0 %v568
      %835 = vmatpush1.msra.mxu0 %v567
      %836 = vmatprep.subr.mxu0 %v564
      %837 = vmatpush1.msra.mxu0 %v563
      %838 = vmatprep.subr.mxu0 %v560
      %839 = vmatpush1.msra.mxu0 %v559
      %840 = vmatprep.subr.mxu0 %v556
      %841 = vmatpush1.msra.mxu0 %v555
      %842 = vmatprep.subr.mxu0 %v552
      %843 = vmatpush1.msra.mxu0 %v551
      %844 = vmatprep.subr.mxu0 %v548
      %845 = vmatpush1.msra.mxu0 %v547
      %846 = vmatprep.subr.mxu0 %v544
      %847 = vmatpush1.msra.mxu0 %v543
      %848 = vmatprep.subr.mxu0 %v540
      %849 = vmatpush1.msra.mxu0 %v539
      %850 = vmatprep.subr.mxu0 %v536
      %851 = vmatpush1.msra.mxu0 %v535
      %852 = vmatprep.subr.mxu0 %v532
      %853 = vmatpush1.msra.mxu0 %v531
      %854 = vmatprep.subr.mxu0 %v656
      %855 = vmatpush2.msra.mxu0 %v655
      %856 = vmatprep.subr.mxu0 %v652
      %857 = vmatpush2.msra.mxu0 %v651
      %858 = vmatprep.subr.mxu0 %v648
      %859 = vmatpush2.msra.mxu0 %v647
      %860 = vmatprep.subr.mxu0 %v644
      %861 = vmatpush2.msra.mxu0 %v643
      %862 = vmatprep.subr.mxu0 %v640
      %863 = vmatpush2.msra.mxu0 %v639
      %864 = vmatprep.subr.mxu0 %v636
      %865 = vmatpush2.msra.mxu0 %v635
      %866 = vmatprep.subr.mxu0 %v632
      %867 = vmatpush2.msra.mxu0 %v631
      %868 = vmatprep.subr.mxu0 %v628
      %869 = vmatpush2.msra.mxu0 %v627
      %870 = vmatprep.subr.mxu0 %v624
      %871 = vmatpush2.msra.mxu0 %v623
      %872 = vmatprep.subr.mxu0 %v620
      %873 = vmatpush2.msra.mxu0 %v619
      %874 = vmatprep.subr.mxu0 %v616
      %875 = vmatpush2.msra.mxu0 %v615
      %876 = vmatprep.subr.mxu0 %v612
      %877 = vmatpush2.msra.mxu0 %v611
      %878 = vmatprep.subr.mxu0 %v608
      %879 = vmatpush2.msra.mxu0 %v607
      %880 = vmatprep.subr.mxu0 %v604
      %881 = vmatpush2.msra.mxu0 %v603
      %882 = vmatprep.subr.mxu0 %v600
      %883 = vmatpush2.msra.mxu0 %v599
      %884 = vmatprep.subr.mxu0 %v596
      %885 = vmatpush2.msra.mxu0 %v595
      %886 = vmatprep.mubr.f32.mxu0 %v396
      %887 = vmatmul.mubr.f32.gmra.mxu0 %v395
      %v888 = vpop.f32.mrf.mxu0
      %v889 = vadd.f32 %v812, %v888
      %v890 = vpop.f32.mrf.mxu0
      %v891 = vadd.f32 %v814, %v890
      %892 = vmatprep.mubr.f32.mxu0 %v401
      %893 = vmatmul.mubr.f32.gmra.mxu0 %v400
      %v894 = vpop.f32.mrf.mxu0
      %v895 = vadd.f32 %v818, %v894
      %v896 = vpop.f32.mrf.mxu0
      %v897 = vadd.f32 %v820, %v896
      %898 = vdwg.mxu0
      %899 = vmatprep.subr.mxu0 %v720
      %900 = vmatpush1.msra.mxu0 %v719
      %901 = vmatprep.subr.mxu0 %v716
      %902 = vmatpush1.msra.mxu0 %v715
      %903 = vmatprep.subr.mxu0 %v712
      %904 = vmatpush1.msra.mxu0 %v711
      %905 = vmatprep.subr.mxu0 %v708
      %906 = vmatpush1.msra.mxu0 %v707
      %907 = vmatprep.subr.mxu0 %v704
      %908 = vmatpush1.msra.mxu0 %v703
      %909 = vmatprep.subr.mxu0 %v700
      %910 = vmatpush1.msra.mxu0 %v699
      %911 = vmatprep.subr.mxu0 %v696
      %912 = vmatpush1.msra.mxu0 %v695
      %913 = vmatprep.subr.mxu0 %v692
      %914 = vmatpush1.msra.mxu0 %v691
      %915 = vmatprep.subr.mxu0 %v688
      %916 = vmatpush1.msra.mxu0 %v687
      %917 = vmatprep.subr.mxu0 %v684
      %918 = vmatpush1.msra.mxu0 %v683
      %919 = vmatprep.subr.mxu0 %v680
      %920 = vmatpush1.msra.mxu0 %v679
      %921 = vmatprep.subr.mxu0 %v676
      %922 = vmatpush1.msra.mxu0 %v675
      %923 = vmatprep.subr.mxu0 %v672
      %924 = vmatpush1.msra.mxu0 %v671
      %925 = vmatprep.subr.mxu0 %v668
      %926 = vmatpush1.msra.mxu0 %v667
      %927 = vmatprep.subr.mxu0 %v664
      %928 = vmatpush1.msra.mxu0 %v663
      %929 = vmatprep.subr.mxu0 %v660
      %930 = vmatpush1.msra.mxu0 %v659
      %931 = vmatprep.subr.mxu0 0.0
      %932 = vmatpush2.msra.mxu0 0.0
      %933 = vmatprep.subr.mxu0 0.0
      %934 = vmatpush2.msra.mxu0 0.0
      %935 = vmatprep.subr.mxu0 0.0
      %936 = vmatpush2.msra.mxu0 0.0
      %937 = vmatprep.subr.mxu0 0.0
      %938 = vmatpush2.msra.mxu0 0.0
      %939 = vmatprep.subr.mxu0 0.0
      %940 = vmatpush2.msra.mxu0 0.0
      %941 = vmatprep.subr.mxu0 0.0
      %942 = vmatpush2.msra.mxu0 0.0
      %943 = vmatprep.subr.mxu0 0.0
      %944 = vmatpush2.msra.mxu0 0.0
      %945 = vmatprep.subr.mxu0 0.0
      %946 = vmatpush2.msra.mxu0 0.0
      %947 = vmatprep.subr.mxu0 0.0
      %948 = vmatpush2.msra.mxu0 0.0
      %949 = vmatprep.subr.mxu0 0.0
      %950 = vmatpush2.msra.mxu0 0.0
      %951 = vmatprep.subr.mxu0 0.0
      %952 = vmatpush2.msra.mxu0 0.0
      %953 = vmatprep.subr.mxu0 0.0
      %954 = vmatpush2.msra.mxu0 0.0
      %955 = vmatprep.subr.mxu0 0.0
      %956 = vmatpush2.msra.mxu0 0.0
      %957 = vmatprep.subr.mxu0 0.0
      %958 = vmatpush2.msra.mxu0 0.0
      %959 = vmatprep.subr.mxu0 0.0
      %960 = vmatpush2.msra.mxu0 0.0
      %961 = vmatprep.subr.mxu0 0.0
      %962 = vmatpush2.msra.mxu0 0.0
      %963 = vmatprep.mubr.f32.mxu0 0.0
      %964 = vmatmul.mubr.f32.gmra.mxu0 %v397
      %v965 = vpop.f32.mrf.mxu0
      %v966 = vadd.f32 %v889, %v965
      %v967 = vpop.f32.mrf.mxu0
      %v968 = vadd.f32 %v891, %v967
      %969 = vmatprep.mubr.f32.mxu0 0.0
      %970 = vmatmul.mubr.f32.gmra.mxu0 %v402
      %v971 = vpop.f32.mrf.mxu0
      %v972 = vadd.f32 %v895, %v971
      %v973 = vpop.f32.mrf.mxu0
      %v974 = vadd.f32 %v897, %v973
      %975 = vdwg.mxu0
      %976 = vmatprep.subr.mxu0 %v466
      %977 = vmatpush1.msra.mxu0 %v465
      %978 = vmatprep.subr.mxu0 %v462
      %979 = vmatpush1.msra.mxu0 %v461
      %980 = vmatprep.subr.mxu0 %v458
      %981 = vmatpush1.msra.mxu0 %v457
      %982 = vmatprep.subr.mxu0 %v454
      %983 = vmatpush1.msra.mxu0 %v453
      %984 = vmatprep.subr.mxu0 %v450
      %985 = vmatpush1.msra.mxu0 %v449
      %986 = vmatprep.subr.mxu0 %v446
      %987 = vmatpush1.msra.mxu0 %v445
      %988 = vmatprep.subr.mxu0 %v442
      %989 = vmatpush1.msra.mxu0 %v441
      %990 = vmatprep.subr.mxu0 %v438
      %991 = vmatpush1.msra.mxu0 %v437
      %992 = vmatprep.subr.mxu0 %v434
      %993 = vmatpush1.msra.mxu0 %v433
      %994 = vmatprep.subr.mxu0 %v430
      %995 = vmatpush1.msra.mxu0 %v429
      %996 = vmatprep.subr.mxu0 %v426
      %997 = vmatpush1.msra.mxu0 %v425
      %998 = vmatprep.subr.mxu0 %v422
      %999 = vmatpush1.msra.mxu0 %v421
      %1000 = vmatprep.subr.mxu0 %v418
      %1001 = vmatpush1.msra.mxu0 %v417
      %1002 = vmatprep.subr.mxu0 %v414
      %1003 = vmatpush1.msra.mxu0 %v413
      %1004 = vmatprep.subr.mxu0 %v410
      %1005 = vmatpush1.msra.mxu0 %v409
      %1006 = vmatprep.subr.mxu0 %v406
      %1007 = vmatpush1.msra.mxu0 %v405
      %1008 = vmatprep.subr.mxu0 %v530
      %1009 = vmatpush2.msra.mxu0 %v529
      %1010 = vmatprep.subr.mxu0 %v526
      %1011 = vmatpush2.msra.mxu0 %v525
      %1012 = vmatprep.subr.mxu0 %v522
      %1013 = vmatpush2.msra.mxu0 %v521
      %1014 = vmatprep.subr.mxu0 %v518
      %1015 = vmatpush2.msra.mxu0 %v517
      %1016 = vmatprep.subr.mxu0 %v514
      %1017 = vmatpush2.msra.mxu0 %v513
      %1018 = vmatprep.subr.mxu0 %v510
      %1019 = vmatpush2.msra.mxu0 %v509
      %1020 = vmatprep.subr.mxu0 %v506
      %1021 = vmatpush2.msra.mxu0 %v505
      %1022 = vmatprep.subr.mxu0 %v502
      %1023 = vmatpush2.msra.mxu0 %v501
      %1024 = vmatprep.subr.mxu0 %v498
      %1025 = vmatpush2.msra.mxu0 %v497
      %1026 = vmatprep.subr.mxu0 %v494
      %1027 = vmatpush2.msra.mxu0 %v493
      %1028 = vmatprep.subr.mxu0 %v490
      %1029 = vmatpush2.msra.mxu0 %v489
      %1030 = vmatprep.subr.mxu0 %v486
      %1031 = vmatpush2.msra.mxu0 %v485
      %1032 = vmatprep.subr.mxu0 %v482
      %1033 = vmatpush2.msra.mxu0 %v481
      %1034 = vmatprep.subr.mxu0 %v478
      %1035 = vmatpush2.msra.mxu0 %v477
      %1036 = vmatprep.subr.mxu0 %v474
      %1037 = vmatpush2.msra.mxu0 %v473
      %1038 = vmatprep.subr.mxu0 %v470
      %1039 = vmatpush2.msra.mxu0 %v469
      %1040 = vmatprep.mubr.f32.mxu0 %v394
      %1041 = vmatmul.mubr.f32.gmra.mxu0 %v393
      %v1042 = vpop.f32.mrf.mxu0
      %v1043 = vadd.f32 %v736, %v1042
      %v1044 = vpop.f32.mrf.mxu0
      %v1045 = vadd.f32 %v740, %v1044
      %1046 = vmatprep.mubr.f32.mxu0 %v399
      %1047 = vmatmul.mubr.f32.gmra.mxu0 %v398
      %v1048 = vpop.f32.mrf.mxu0
      %v1049 = vadd.f32 %v736, %v1048
      %v1050 = vpop.f32.mrf.mxu0
      %v1051 = vadd.f32 %v740, %v1050
      %1052 = vdwg.mxu0
      %1053 = vmatprep.subr.mxu0 %v594
      %1054 = vmatpush1.msra.mxu0 %v593
      %1055 = vmatprep.subr.mxu0 %v590
      %1056 = vmatpush1.msra.mxu0 %v589
      %1057 = vmatprep.subr.mxu0 %v586
      %1058 = vmatpush1.msra.mxu0 %v585
      %1059 = vmatprep.subr.mxu0 %v582
      %1060 = vmatpush1.msra.mxu0 %v581
      %1061 = vmatprep.subr.mxu0 %v578
      %1062 = vmatpush1.msra.mxu0 %v577
      %1063 = vmatprep.subr.mxu0 %v574
      %1064 = vmatpush1.msra.mxu0 %v573
      %1065 = vmatprep.subr.mxu0 %v570
      %1066 = vmatpush1.msra.mxu0 %v569
      %1067 = vmatprep.subr.mxu0 %v566
      %1068 = vmatpush1.msra.mxu0 %v565
      %1069 = vmatprep.subr.mxu0 %v562
      %1070 = vmatpush1.msra.mxu0 %v561
      %1071 = vmatprep.subr.mxu0 %v558
      %1072 = vmatpush1.msra.mxu0 %v557
      %1073 = vmatprep.subr.mxu0 %v554
      %1074 = vmatpush1.msra.mxu0 %v553
      %1075 = vmatprep.subr.mxu0 %v550
      %1076 = vmatpush1.msra.mxu0 %v549
      %1077 = vmatprep.subr.mxu0 %v546
      %1078 = vmatpush1.msra.mxu0 %v545
      %1079 = vmatprep.subr.mxu0 %v542
      %1080 = vmatpush1.msra.mxu0 %v541
      %1081 = vmatprep.subr.mxu0 %v538
      %1082 = vmatpush1.msra.mxu0 %v537
      %1083 = vmatprep.subr.mxu0 %v534
      %1084 = vmatpush1.msra.mxu0 %v533
      %1085 = vmatprep.subr.mxu0 %v658
      %1086 = vmatpush2.msra.mxu0 %v657
      %1087 = vmatprep.subr.mxu0 %v654
      %1088 = vmatpush2.msra.mxu0 %v653
      %1089 = vmatprep.subr.mxu0 %v650
      %1090 = vmatpush2.msra.mxu0 %v649
      %1091 = vmatprep.subr.mxu0 %v646
      %1092 = vmatpush2.msra.mxu0 %v645
      %1093 = vmatprep.subr.mxu0 %v642
      %1094 = vmatpush2.msra.mxu0 %v641
      %1095 = vmatprep.subr.mxu0 %v638
      %1096 = vmatpush2.msra.mxu0 %v637
      %1097 = vmatprep.subr.mxu0 %v634
      %1098 = vmatpush2.msra.mxu0 %v633
      %1099 = vmatprep.subr.mxu0 %v630
      %1100 = vmatpush2.msra.mxu0 %v629
      %1101 = vmatprep.subr.mxu0 %v626
      %1102 = vmatpush2.msra.mxu0 %v625
      %1103 = vmatprep.subr.mxu0 %v622
      %1104 = vmatpush2.msra.mxu0 %v621
      %1105 = vmatprep.subr.mxu0 %v618
      %1106 = vmatpush2.msra.mxu0 %v617
      %1107 = vmatprep.subr.mxu0 %v614
      %1108 = vmatpush2.msra.mxu0 %v613
      %1109 = vmatprep.subr.mxu0 %v610
      %1110 = vmatpush2.msra.mxu0 %v609
      %1111 = vmatprep.subr.mxu0 %v606
      %1112 = vmatpush2.msra.mxu0 %v605
      %1113 = vmatprep.subr.mxu0 %v602
      %1114 = vmatpush2.msra.mxu0 %v601
      %1115 = vmatprep.subr.mxu0 %v598
      %1116 = vmatpush2.msra.mxu0 %v597
      %1117 = vmatprep.mubr.f32.mxu0 %v396
      %1118 = vmatmul.mubr.f32.gmra.mxu0 %v395
      %v1119 = vpop.f32.mrf.mxu0
      %v1120 = vadd.f32 %v1043, %v1119
      %v1121 = vpop.f32.mrf.mxu0
      %v1122 = vadd.f32 %v1045, %v1121
      %1123 = vmatprep.mubr.f32.mxu0 %v401
      %1124 = vmatmul.mubr.f32.gmra.mxu0 %v400
      %v1125 = vpop.f32.mrf.mxu0
      %v1126 = vadd.f32 %v1049, %v1125
      %v1127 = vpop.f32.mrf.mxu0
      %v1128 = vadd.f32 %v1051, %v1127
      %1129 = vdwg.mxu0
      %1130 = vmatprep.subr.mxu0 %v722
      %1131 = vmatpush1.msra.mxu0 %v721
      %1132 = vmatprep.subr.mxu0 %v718
      %1133 = vmatpush1.msra.mxu0 %v717
      %1134 = vmatprep.subr.mxu0 %v714
      %1135 = vmatpush1.msra.mxu0 %v713
      %1136 = vmatprep.subr.mxu0 %v710
      %1137 = vmatpush1.msra.mxu0 %v709
      %1138 = vmatprep.subr.mxu0 %v706
      %1139 = vmatpush1.msra.mxu0 %v705
      %1140 = vmatprep.subr.mxu0 %v702
      %1141 = vmatpush1.msra.mxu0 %v701
      %1142 = vmatprep.subr.mxu0 %v698
      %1143 = vmatpush1.msra.mxu0 %v697
      %1144 = vmatprep.subr.mxu0 %v694
      %1145 = vmatpush1.msra.mxu0 %v693
      %1146 = vmatprep.subr.mxu0 %v690
      %1147 = vmatpush1.msra.mxu0 %v689
      %1148 = vmatprep.subr.mxu0 %v686
      %1149 = vmatpush1.msra.mxu0 %v685
      %1150 = vmatprep.subr.mxu0 %v682
      %1151 = vmatpush1.msra.mxu0 %v681
      %1152 = vmatprep.subr.mxu0 %v678
      %1153 = vmatpush1.msra.mxu0 %v677
      %1154 = vmatprep.subr.mxu0 %v674
      %1155 = vmatpush1.msra.mxu0 %v673
      %1156 = vmatprep.subr.mxu0 %v670
      %1157 = vmatpush1.msra.mxu0 %v669
      %1158 = vmatprep.subr.mxu0 %v666
      %1159 = vmatpush1.msra.mxu0 %v665
      %1160 = vmatprep.subr.mxu0 %v662
      %1161 = vmatpush1.msra.mxu0 %v661
      %1162 = vmatprep.subr.mxu0 0.0
      %1163 = vmatpush2.msra.mxu0 0.0
      %1164 = vmatprep.subr.mxu0 0.0
      %1165 = vmatpush2.msra.mxu0 0.0
      %1166 = vmatprep.subr.mxu0 0.0
      %1167 = vmatpush2.msra.mxu0 0.0
      %1168 = vmatprep.subr.mxu0 0.0
      %1169 = vmatpush2.msra.mxu0 0.0
      %1170 = vmatprep.subr.mxu0 0.0
      %1171 = vmatpush2.msra.mxu0 0.0
      %1172 = vmatprep.subr.mxu0 0.0
      %1173 = vmatpush2.msra.mxu0 0.0
      %1174 = vmatprep.subr.mxu0 0.0
      %1175 = vmatpush2.msra.mxu0 0.0
      %1176 = vmatprep.subr.mxu0 0.0
      %1177 = vmatpush2.msra.mxu0 0.0
      %1178 = vmatprep.subr.mxu0 0.0
      %1179 = vmatpush2.msra.mxu0 0.0
      %1180 = vmatprep.subr.mxu0 0.0
      %1181 = vmatpush2.msra.mxu0 0.0
      %1182 = vmatprep.subr.mxu0 0.0
      %1183 = vmatpush2.msra.mxu0 0.0
      %1184 = vmatprep.subr.mxu0 0.0
      %1185 = vmatpush2.msra.mxu0 0.0
      %1186 = vmatprep.subr.mxu0 0.0
      %1187 = vmatpush2.msra.mxu0 0.0
      %1188 = vmatprep.subr.mxu0 0.0
      %1189 = vmatpush2.msra.mxu0 0.0
      %1190 = vmatprep.subr.mxu0 0.0
      %1191 = vmatpush2.msra.mxu0 0.0
      %1192 = vmatprep.subr.mxu0 0.0
      %1193 = vmatpush2.msra.mxu0 0.0
      %1194 = vmatprep.mubr.f32.mxu0 0.0
      %1195 = vmatmul.mubr.f32.gmra.mxu0 %v397
      %v1196 = vpop.f32.mrf.mxu0
      %v1197 = vadd.f32 %v1120, %v1196
      %v1198 = vpop.f32.mrf.mxu0
      %v1199 = vadd.f32 %v1122, %v1198
      %1200 = vmatprep.mubr.f32.mxu0 0.0
      %1201 = vmatmul.mubr.f32.gmra.mxu0 %v402
      %v1202 = vpop.f32.mrf.mxu0
      %v1203 = vadd.f32 %v1126, %v1202
      %v1204 = vpop.f32.mrf.mxu0
      %v1205 = vadd.f32 %v1128, %v1204
      %1206 = vdwg.mxu0
      %v1207 = vmax.f32 %v966, 0.0
      %v1208 = vmax.f32 %v968, 0.0
      %v1209 = vmax.f32 %v1197, 0.0
      %v1210 = vmax.f32 %v1199, 0.0
      %v1211 = vmax.f32 %v972, 0.0
      %v1212 = vmax.f32 %v974, 0.0
      %v1213 = vmax.f32 %v1203, 0.0
      %v1214 = vmax.f32 %v1205, 0.0
      %v1215 = vld [vmem:[%s3] sm:$0xff]
      %v1216 = vld [vmem:[%s3 + $0x8] sm:$0xff]
      %v1217 = vld [vmem:[%s3 + $0x10] sm:$0xff]
      %v1218 = vld [vmem:[%s3 + $0x18] sm:$0xff]
      %v1219 = vld [vmem:[%s3 + $0x20] sm:$0xff]
      %v1220 = vld [vmem:[%s3 + $0x28] sm:$0xff]
      %v1221 = vld [vmem:[%s3 + $0x30] sm:$0xff]
      %v1222 = vld [vmem:[%s3 + $0x38] sm:$0xff]
      %v1223 = vld [vmem:[%s3 + $0x40] sm:$0xff]
      %v1224 = vld [vmem:[%s3 + $0x48] sm:$0xff]
      %v1225 = vld [vmem:[%s3 + $0x50] sm:$0xff]
      %v1226 = vld [vmem:[%s3 + $0x58] sm:$0xff]
      %v1227 = vld [vmem:[%s3 + $0x60] sm:$0xff]
      %v1228 = vld [vmem:[%s3 + $0x68] sm:$0xff]
      %v1229 = vld [vmem:[%s3 + $0x70] sm:$0xff]
      %v1230 = vld [vmem:[%s3 + $0x78] sm:$0xff]
      %v1231 = vld [vmem:[%s3 + $0x80] sm:$0xff]
      %v1232 = vld [vmem:[%s3 + $0x88] sm:$0xff]
      %v1233 = vld [vmem:[%s3 + $0x90] sm:$0xff]
      %v1234 = vld [vmem:[%s3 + $0x98] sm:$0xff]
      %v1235 = vld [vmem:[%s3 + $0xa0] sm:$0xff]
      %v1236 = vld [vmem:[%s3 + $0xa8] sm:$0xff]
      %v1237 = vld [vmem:[%s3 + $0xb0] sm:$0xff]
      %v1238 = vld [vmem:[%s3 + $0xb8] sm:$0xff]
      %v1239 = vld [vmem:[%s3 + $0xc0] sm:$0xff]
      %v1240 = vld [vmem:[%s3 + $0xc8] sm:$0xff]
      %v1241 = vld [vmem:[%s3 + $0xd0] sm:$0xff]
      %v1242 = vld [vmem:[%s3 + $0xd8] sm:$0xff]
      %v1243 = vld [vmem:[%s3 + $0xe0] sm:$0xff]
      %v1244 = vld [vmem:[%s3 + $0xe8] sm:$0xff]
      %v1245 = vld [vmem:[%s3 + $0xf0] sm:$0xff]
      %v1246 = vld [vmem:[%s3 + $0xf8] sm:$0xff]
      %v1247 = vld [vmem:[%s3 + $0x100] sm:$0xff]
      %v1248 = vld [vmem:[%s3 + $0x108] sm:$0xff]
      %v1249 = vld [vmem:[%s3 + $0x110] sm:$0xff]
      %v1250 = vld [vmem:[%s3 + $0x118] sm:$0xff]
      %v1251 = vld [vmem:[%s3 + $0x120] sm:$0xff]
      %v1252 = vld [vmem:[%s3 + $0x128] sm:$0xff]
      %v1253 = vld [vmem:[%s3 + $0x130] sm:$0xff]
      %v1254 = vld [vmem:[%s3 + $0x138] sm:$0xff]
      %v1255 = vld [vmem:[%s3 + $0x140] sm:$0xff]
      %v1256 = vld [vmem:[%s3 + $0x148] sm:$0xff]
      %v1257 = vld [vmem:[%s3 + $0x150] sm:$0xff]
      %v1258 = vld [vmem:[%s3 + $0x158] sm:$0xff]
      %v1259 = vld [vmem:[%s3 + $0x160] sm:$0xff]
      %v1260 = vld [vmem:[%s3 + $0x168] sm:$0xff]
      %v1261 = vld [vmem:[%s3 + $0x170] sm:$0xff]
      %v1262 = vld [vmem:[%s3 + $0x178] sm:$0xff]
      %v1263 = vld [vmem:[%s3 + $0x180] sm:$0xff]
      %v1264 = vld [vmem:[%s3 + $0x188] sm:$0xff]
      %v1265 = vld [vmem:[%s3 + $0x190] sm:$0xff]
      %v1266 = vld [vmem:[%s3 + $0x198] sm:$0xff]
      %v1267 = vld [vmem:[%s3 + $0x1a0] sm:$0xff]
      %v1268 = vld [vmem:[%s3 + $0x1a8] sm:$0xff]
      %v1269 = vld [vmem:[%s3 + $0x1b0] sm:$0xff]
      %v1270 = vld [vmem:[%s3 + $0x1b8] sm:$0xff]
      %v1271 = vld [vmem:[%s3 + $0x1c0] sm:$0xff]
      %v1272 = vld [vmem:[%s3 + $0x1c8] sm:$0xff]
      %v1273 = vld [vmem:[%s3 + $0x1d0] sm:$0xff]
      %v1274 = vld [vmem:[%s3 + $0x1d8] sm:$0xff]
      %v1275 = vld [vmem:[%s3 + $0x1e0] sm:$0xff]
      %v1276 = vld [vmem:[%s3 + $0x1e8] sm:$0xff]
      %v1277 = vld [vmem:[%s3 + $0x1f0] sm:$0xff]
      %v1278 = vld [vmem:[%s3 + $0x1f8] sm:$0xff]
      %v1279 = vld [vmem:[%s4] sm:$0x1]
      %v1281 = vlaneseq
      %v1282 = vshrl.u32 %v1281, 7
      %v1283 = vsub.s32 0, %v1282
      %v1284 = vrot.slane %v1279, %v1283
      %1286 = vmatprep.subr.mxu0 0.0
      %1287 = vmatpush1.msra.mxu0 %v1230
      %1288 = vmatprep.subr.mxu0 0.0
      %1289 = vmatpush1.msra.mxu0 %v1229
      %1290 = vmatprep.subr.mxu0 0.0
      %1291 = vmatpush1.msra.mxu0 %v1228
      %1292 = vmatprep.subr.mxu0 0.0
      %1293 = vmatpush1.msra.mxu0 %v1227
      %1294 = vmatprep.subr.mxu0 0.0
      %1295 = vmatpush1.msra.mxu0 %v1226
      %1296 = vmatprep.subr.mxu0 0.0
      %1297 = vmatpush1.msra.mxu0 %v1225
      %1298 = vmatprep.subr.mxu0 0.0
      %1299 = vmatpush1.msra.mxu0 %v1224
      %1300 = vmatprep.subr.mxu0 0.0
      %1301 = vmatpush1.msra.mxu0 %v1223
      %1302 = vmatprep.subr.mxu0 0.0
      %1303 = vmatpush1.msra.mxu0 %v1222
      %1304 = vmatprep.subr.mxu0 0.0
      %1305 = vmatpush1.msra.mxu0 %v1221
      %1306 = vmatprep.subr.mxu0 0.0
      %1307 = vmatpush1.msra.mxu0 %v1220
      %1308 = vmatprep.subr.mxu0 0.0
      %1309 = vmatpush1.msra.mxu0 %v1219
      %1310 = vmatprep.subr.mxu0 0.0
      %1311 = vmatpush1.msra.mxu0 %v1218
      %1312 = vmatprep.subr.mxu0 0.0
      %1313 = vmatpush1.msra.mxu0 %v1217
      %1314 = vmatprep.subr.mxu0 0.0
      %1315 = vmatpush1.msra.mxu0 %v1216
      %1316 = vmatprep.subr.mxu0 0.0
      %1317 = vmatpush1.msra.mxu0 %v1215
      %1318 = vmatprep.subr.mxu0 0.0
      %1319 = vmatpush2.msra.mxu0 %v1246
      %1320 = vmatprep.subr.mxu0 0.0
      %1321 = vmatpush2.msra.mxu0 %v1245
      %1322 = vmatprep.subr.mxu0 0.0
      %1323 = vmatpush2.msra.mxu0 %v1244
      %1324 = vmatprep.subr.mxu0 0.0
      %1325 = vmatpush2.msra.mxu0 %v1243
      %1326 = vmatprep.subr.mxu0 0.0
      %1327 = vmatpush2.msra.mxu0 %v1242
      %1328 = vmatprep.subr.mxu0 0.0
      %1329 = vmatpush2.msra.mxu0 %v1241
      %1330 = vmatprep.subr.mxu0 0.0
      %1331 = vmatpush2.msra.mxu0 %v1240
      %1332 = vmatprep.subr.mxu0 0.0
      %1333 = vmatpush2.msra.mxu0 %v1239
      %1334 = vmatprep.subr.mxu0 0.0
      %1335 = vmatpush2.msra.mxu0 %v1238
      %1336 = vmatprep.subr.mxu0 0.0
      %1337 = vmatpush2.msra.mxu0 %v1237
      %1338 = vmatprep.subr.mxu0 0.0
      %1339 = vmatpush2.msra.mxu0 %v1236
      %1340 = vmatprep.subr.mxu0 0.0
      %1341 = vmatpush2.msra.mxu0 %v1235
      %1342 = vmatprep.subr.mxu0 0.0
      %1343 = vmatpush2.msra.mxu0 %v1234
      %1344 = vmatprep.subr.mxu0 0.0
      %1345 = vmatpush2.msra.mxu0 %v1233
      %1346 = vmatprep.subr.mxu0 0.0
      %1347 = vmatpush2.msra.mxu0 %v1232
      %1348 = vmatprep.subr.mxu0 0.0
      %1349 = vmatpush2.msra.mxu0 %v1231
      %1350 = vmatprep.mubr.f32.mxu0 %v1208
      %1351 = vmatmul.mubr.f32.gmra.mxu0 %v1207
      %v1352 = vpop.f32.mrf.mxu0
      %v1353 = vadd.f32 %v1284, %v1352
      %v1354 = vpop.f32.mrf.mxu0
      %1355 = vmatprep.mubr.f32.mxu0 %v1212
      %1356 = vmatmul.mubr.f32.gmra.mxu0 %v1211
      %v1357 = vpop.f32.mrf.mxu0
      %v1358 = vadd.f32 %v1284, %v1357
      %v1359 = vpop.f32.mrf.mxu0
      %1360 = vdwg.mxu0
      %1361 = vmatprep.subr.mxu0 0.0
      %1362 = vmatpush1.msra.mxu0 %v1262
      %1363 = vmatprep.subr.mxu0 0.0
      %1364 = vmatpush1.msra.mxu0 %v1261
      %1365 = vmatprep.subr.mxu0 0.0
      %1366 = vmatpush1.msra.mxu0 %v1260
      %1367 = vmatprep.subr.mxu0 0.0
      %1368 = vmatpush1.msra.mxu0 %v1259
      %1369 = vmatprep.subr.mxu0 0.0
      %1370 = vmatpush1.msra.mxu0 %v1258
      %1371 = vmatprep.subr.mxu0 0.0
      %1372 = vmatpush1.msra.mxu0 %v1257
      %1373 = vmatprep.subr.mxu0 0.0
      %1374 = vmatpush1.msra.mxu0 %v1256
      %1375 = vmatprep.subr.mxu0 0.0
      %1376 = vmatpush1.msra.mxu0 %v1255
      %1377 = vmatprep.subr.mxu0 0.0
      %1378 = vmatpush1.msra.mxu0 %v1254
      %1379 = vmatprep.subr.mxu0 0.0
      %1380 = vmatpush1.msra.mxu0 %v1253
      %1381 = vmatprep.subr.mxu0 0.0
      %1382 = vmatpush1.msra.mxu0 %v1252
      %1383 = vmatprep.subr.mxu0 0.0
      %1384 = vmatpush1.msra.mxu0 %v1251
      %1385 = vmatprep.subr.mxu0 0.0
      %1386 = vmatpush1.msra.mxu0 %v1250
      %1387 = vmatprep.subr.mxu0 0.0
      %1388 = vmatpush1.msra.mxu0 %v1249
      %1389 = vmatprep.subr.mxu0 0.0
      %1390 = vmatpush1.msra.mxu0 %v1248
      %1391 = vmatprep.subr.mxu0 0.0
      %1392 = vmatpush1.msra.mxu0 %v1247
      %1393 = vmatprep.subr.mxu0 0.0
      %1394 = vmatpush2.msra.mxu0 %v1278
      %1395 = vmatprep.subr.mxu0 0.0
      %1396 = vmatpush2.msra.mxu0 %v1277
      %1397 = vmatprep.subr.mxu0 0.0
      %1398 = vmatpush2.msra.mxu0 %v1276
      %1399 = vmatprep.subr.mxu0 0.0
      %1400 = vmatpush2.msra.mxu0 %v1275
      %1401 = vmatprep.subr.mxu0 0.0
      %1402 = vmatpush2.msra.mxu0 %v1274
      %1403 = vmatprep.subr.mxu0 0.0
      %1404 = vmatpush2.msra.mxu0 %v1273
      %1405 = vmatprep.subr.mxu0 0.0
      %1406 = vmatpush2.msra.mxu0 %v1272
      %1407 = vmatprep.subr.mxu0 0.0
      %1408 = vmatpush2.msra.mxu0 %v1271
      %1409 = vmatprep.subr.mxu0 0.0
      %1410 = vmatpush2.msra.mxu0 %v1270
      %1411 = vmatprep.subr.mxu0 0.0
      %1412 = vmatpush2.msra.mxu0 %v1269
      %1413 = vmatprep.subr.mxu0 0.0
      %1414 = vmatpush2.msra.mxu0 %v1268
      %1415 = vmatprep.subr.mxu0 0.0
      %1416 = vmatpush2.msra.mxu0 %v1267
      %1417 = vmatprep.subr.mxu0 0.0
      %1418 = vmatpush2.msra.mxu0 %v1266
      %1419 = vmatprep.subr.mxu0 0.0
      %1420 = vmatpush2.msra.mxu0 %v1265
      %1421 = vmatprep.subr.mxu0 0.0
      %1422 = vmatpush2.msra.mxu0 %v1264
      %1423 = vmatprep.subr.mxu0 0.0
      %1424 = vmatpush2.msra.mxu0 %v1263
      %1425 = vmatprep.mubr.f32.mxu0 %v1210
      %1426 = vmatmul.mubr.f32.gmra.mxu0 %v1209
      %v1427 = vpop.f32.mrf.mxu0
      %v1428 = vadd.f32 %v1353, %v1427
      %v1429 = vpop.f32.mrf.mxu0
      %1430 = vmatprep.mubr.f32.mxu0 %v1214
      %1431 = vmatmul.mubr.f32.gmra.mxu0 %v1213
      %v1432 = vpop.f32.mrf.mxu0
      %v1433 = vadd.f32 %v1358, %v1432
      %v1434 = vpop.f32.mrf.mxu0
      %1435 = vdwg.mxu0
      %v1436 = vmax.f32 %v1428, 0.0
      %v1437 = vmax.f32 %v1433, 0.0
      %v1438 = vld [vmem:[%s5] sm:$0xff]
      %v1439 = vld [vmem:[%s5 + $0x8] sm:$0xff]
      %v1440 = vld [vmem:[%s6] sm:$0xff]
      %v1441 = vld [vmem:[%s6 + $0x8] sm:$0xff]
      %vm1442 = vcmask 130048
      %v1444 = vsel %vm1442, %v1438, 0
      %v1447 = vsel %vm1442, %v1439, 0
      %1449 = vmatprep.subr.mxu0 0.0
      %1450 = vmatpush1.msra.mxu0 0.0
      %1451 = vmatprep.subr.mxu0 0.0
      %1452 = vmatpush1.msra.mxu0 0.0
      %1453 = vmatprep.subr.mxu0 0.0
      %1454 = vmatpush1.msra.mxu0 0.0
      %1455 = vmatprep.subr.mxu0 0.0
      %1456 = vmatpush1.msra.mxu0 0.0
      %1457 = vmatprep.subr.mxu0 0.0
      %1458 = vmatpush1.msra.mxu0 0.0
      %1459 = vmatprep.subr.mxu0 0.0
      %1460 = vmatpush1.msra.mxu0 0.0
      %1461 = vmatprep.subr.mxu0 0.0
      %1462 = vmatpush1.msra.mxu0 0.0
      %1463 = vmatprep.subr.mxu0 0.0
      %1464 = vmatpush1.msra.mxu0 0.0
      %1465 = vmatprep.subr.mxu0 0.0
      %1466 = vmatpush1.msra.mxu0 0.0
      %1467 = vmatprep.subr.mxu0 0.0
      %1468 = vmatpush1.msra.mxu0 0.0
      %1469 = vmatprep.subr.mxu0 0.0
      %1470 = vmatpush1.msra.mxu0 0.0
      %1471 = vmatprep.subr.mxu0 0.0
      %1472 = vmatpush1.msra.mxu0 0.0
      %1473 = vmatprep.subr.mxu0 0.0
      %1474 = vmatpush1.msra.mxu0 0.0
      %1475 = vmatprep.subr.mxu0 0.0
      %1476 = vmatpush1.msra.mxu0 0.0
      %1477 = vmatprep.subr.mxu0 0.0
      %1478 = vmatpush1.msra.mxu0 %v1437
      %1479 = vmatprep.subr.mxu0 0.0
      %1480 = vmatpush1.msra.mxu0 %v1436
      %1481 = vmatprep.subr.mxu0 0.0
      %1482 = vmatpush2.msra.mxu0 0.0
      %1483 = vmatprep.subr.mxu0 0.0
      %1484 = vmatpush2.msra.mxu0 0.0
      %1485 = vmatprep.subr.mxu0 0.0
      %1486 = vmatpush2.msra.mxu0 0.0
      %1487 = vmatprep.subr.mxu0 0.0
      %1488 = vmatpush2.msra.mxu0 0.0
      %1489 = vmatprep.subr.mxu0 0.0
      %1490 = vmatpush2.msra.mxu0 0.0
      %1491 = vmatprep.subr.mxu0 0.0
      %1492 = vmatpush2.msra.mxu0 0.0
      %1493 = vmatprep.subr.mxu0 0.0
      %1494 = vmatpush2.msra.mxu0 0.0
      %1495 = vmatprep.subr.mxu0 0.0
      %1496 = vmatpush2.msra.mxu0 0.0
      %1497 = vmatprep.subr.mxu0 0.0
      %1498 = vmatpush2.msra.mxu0 0.0
      %1499 = vmatprep.subr.mxu0 0.0
      %1500 = vmatpush2.msra.mxu0 0.0
      %1501 = vmatprep.subr.mxu0 0.0
      %1502 = vmatpush2.msra.mxu0 0.0
      %1503 = vmatprep.subr.mxu0 0.0
      %1504 = vmatpush2.msra.mxu0 0.0
      %1505 = vmatprep.subr.mxu0 0.0
      %1506 = vmatpush2.msra.mxu0 0.0
      %1507 = vmatprep.subr.mxu0 0.0
      %1508 = vmatpush2.msra.mxu0 0.0
      %1509 = vmatprep.subr.mxu0 0.0
      %1510 = vmatpush2.msra.mxu0 0.0
      %1511 = vmatprep.subr.mxu0 0.0
      %1512 = vmatpush2.msra.mxu0 0.0
      %1513 = vmatprep.mubr.f32.mxu0 0.0
      %1514 = vmatmul.mubr.f32.gmra.mxu0 %v1444
      %v1515 = vpop.f32.mrf.mxu0
      %v1516 = vadd.f32 0.0, %v1515
      %v1517 = vpop.f32.mrf.mxu0
      %1518 = vmatprep.mubr.f32.mxu0 0.0
      %1519 = vmatmul.mubr.f32.gmra.mxu0 %v1447
      %v1520 = vpop.f32.mrf.mxu0
      %v1521 = vadd.f32 0.0, %v1520
      %v1522 = vpop.f32.mrf.mxu0
      %1523 = vdwg.mxu0
      %v1525 = vsel %vm1442, %v1440, 0
      %v1528 = vsel %vm1442, %v1441, 0
      %1530 = vmatprep.subr.mxu0 0.0
      %1531 = vmatpush1.msra.mxu0 0.0
      %1532 = vmatprep.subr.mxu0 0.0
      %1533 = vmatpush1.msra.mxu0 0.0
      %1534 = vmatprep.subr.mxu0 0.0
      %1535 = vmatpush1.msra.mxu0 0.0
      %1536 = vmatprep.subr.mxu0 0.0
      %1537 = vmatpush1.msra.mxu0 0.0
      %1538 = vmatprep.subr.mxu0 0.0
      %1539 = vmatpush1.msra.mxu0 0.0
      %1540 = vmatprep.subr.mxu0 0.0
      %1541 = vmatpush1.msra.mxu0 0.0
      %1542 = vmatprep.subr.mxu0 0.0
      %1543 = vmatpush1.msra.mxu0 0.0
      %1544 = vmatprep.subr.mxu0 0.0
      %1545 = vmatpush1.msra.mxu0 0.0
      %1546 = vmatprep.subr.mxu0 0.0
      %1547 = vmatpush1.msra.mxu0 0.0
      %1548 = vmatprep.subr.mxu0 0.0
      %1549 = vmatpush1.msra.mxu0 0.0
      %1550 = vmatprep.subr.mxu0 0.0
      %1551 = vmatpush1.msra.mxu0 0.0
      %1552 = vmatprep.subr.mxu0 0.0
      %1553 = vmatpush1.msra.mxu0 0.0
      %1554 = vmatprep.subr.mxu0 0.0
      %1555 = vmatpush1.msra.mxu0 0.0
      %1556 = vmatprep.subr.mxu0 0.0
      %1557 = vmatpush1.msra.mxu0 0.0
      %1558 = vmatprep.subr.mxu0 0.0
      %1559 = vmatpush1.msra.mxu0 %v1437
      %1560 = vmatprep.subr.mxu0 0.0
      %1561 = vmatpush1.msra.mxu0 %v1436
      %1562 = vmatprep.subr.mxu0 0.0
      %1563 = vmatpush2.msra.mxu0 0.0
      %1564 = vmatprep.subr.mxu0 0.0
      %1565 = vmatpush2.msra.mxu0 0.0
      %1566 = vmatprep.subr.mxu0 0.0
      %1567 = vmatpush2.msra.mxu0 0.0
      %1568 = vmatprep.subr.mxu0 0.0
      %1569 = vmatpush2.msra.mxu0 0.0
      %1570 = vmatprep.subr.mxu0 0.0
      %1571 = vmatpush2.msra.mxu0 0.0
      %1572 = vmatprep.subr.mxu0 0.0
      %1573 = vmatpush2.msra.mxu0 0.0
      %1574 = vmatprep.subr.mxu0 0.0
      %1575 = vmatpush2.msra.mxu0 0.0
      %1576 = vmatprep.subr.mxu0 0.0
      %1577 = vmatpush2.msra.mxu0 0.0
      %1578 = vmatprep.subr.mxu0 0.0
      %1579 = vmatpush2.msra.mxu0 0.0
      %1580 = vmatprep.subr.mxu0 0.0
      %1581 = vmatpush2.msra.mxu0 0.0
      %1582 = vmatprep.subr.mxu0 0.0
      %1583 = vmatpush2.msra.mxu0 0.0
      %1584 = vmatprep.subr.mxu0 0.0
      %1585 = vmatpush2.msra.mxu0 0.0
      %1586 = vmatprep.subr.mxu0 0.0
      %1587 = vmatpush2.msra.mxu0 0.0
      %1588 = vmatprep.subr.mxu0 0.0
      %1589 = vmatpush2.msra.mxu0 0.0
      %1590 = vmatprep.subr.mxu0 0.0
      %1591 = vmatpush2.msra.mxu0 0.0
      %1592 = vmatprep.subr.mxu0 0.0
      %1593 = vmatpush2.msra.mxu0 0.0
      %1594 = vmatprep.mubr.f32.mxu0 0.0
      %1595 = vmatmul.mubr.f32.gmra.mxu0 %v1525
      %v1596 = vpop.f32.mrf.mxu0
      %v1597 = vadd.f32 0.0, %v1596
      %v1598 = vpop.f32.mrf.mxu0
      %1599 = vmatprep.mubr.f32.mxu0 0.0
      %1600 = vmatmul.mubr.f32.gmra.mxu0 %v1528
      %v1601 = vpop.f32.mrf.mxu0
      %v1602 = vadd.f32 0.0, %v1601
      %v1603 = vpop.f32.mrf.mxu0
      %1604 = vdwg.mxu0
      %v1605 = vld [vmem:[%s7] sm:$0xff]
      %v1606 = vld [vmem:[%s7 + $0x8] sm:$0xff]
      %v1607 = vld [vmem:[%s7 + $0x10] sm:$0xff]
      %v1608 = vld [vmem:[%s7 + $0x18] sm:$0xff]
      %v1609 = vld [vmem:[%s7 + $0x20] sm:$0xff]
      %v1610 = vld [vmem:[%s7 + $0x28] sm:$0xff]
      %v1611 = vld [vmem:[%s7 + $0x30] sm:$0xff]
      %v1612 = vld [vmem:[%s7 + $0x38] sm:$0xff]
      %v1613 = vld [vmem:[%s7 + $0x40] sm:$0xff]
      %v1614 = vld [vmem:[%s7 + $0x48] sm:$0xff]
      %v1615 = vld [vmem:[%s7 + $0x50] sm:$0xff]
      %v1616 = vld [vmem:[%s7 + $0x58] sm:$0xff]
      %v1617 = vld [vmem:[%s7 + $0x60] sm:$0xff]
      %v1618 = vld [vmem:[%s7 + $0x68] sm:$0xff]
      %v1619 = vld [vmem:[%s7 + $0x70] sm:$0xff]
      %v1620 = vld [vmem:[%s7 + $0x78] sm:$0xff]
      %v1621 = vld [vmem:[%s7 + $0x80] sm:$0xff]
      %v1622 = vld [vmem:[%s7 + $0x88] sm:$0xff]
      %v1623 = vld [vmem:[%s7 + $0x90] sm:$0xff]
      %v1624 = vld [vmem:[%s7 + $0x98] sm:$0xff]
      %v1625 = vld [vmem:[%s7 + $0xa0] sm:$0xff]
      %v1626 = vld [vmem:[%s7 + $0xa8] sm:$0xff]
      %v1627 = vld [vmem:[%s7 + $0xb0] sm:$0xff]
      %v1628 = vld [vmem:[%s7 + $0xb8] sm:$0xff]
      %v1629 = vld [vmem:[%s7 + $0xc0] sm:$0xff]
      %v1630 = vld [vmem:[%s7 + $0xc8] sm:$0xff]
      %v1631 = vld [vmem:[%s7 + $0xd0] sm:$0xff]
      %v1632 = vld [vmem:[%s7 + $0xd8] sm:$0xff]
      %v1633 = vld [vmem:[%s7 + $0xe0] sm:$0xff]
      %v1634 = vld [vmem:[%s7 + $0xe8] sm:$0xff]
      %v1635 = vld [vmem:[%s7 + $0xf0] sm:$0xff]
      %v1636 = vld [vmem:[%s7 + $0xf8] sm:$0xff]
      %v1637 = vld [vmem:[%s7 + $0x100] sm:$0xff]
      %v1638 = vld [vmem:[%s7 + $0x108] sm:$0xff]
      %v1639 = vld [vmem:[%s7 + $0x110] sm:$0xff]
      %v1640 = vld [vmem:[%s7 + $0x118] sm:$0xff]
      %v1641 = vld [vmem:[%s7 + $0x120] sm:$0xff]
      %v1642 = vld [vmem:[%s7 + $0x128] sm:$0xff]
      %v1643 = vld [vmem:[%s7 + $0x130] sm:$0xff]
      %v1644 = vld [vmem:[%s7 + $0x138] sm:$0xff]
      %v1645 = vld [vmem:[%s7 + $0x140] sm:$0xff]
      %v1646 = vld [vmem:[%s7 + $0x148] sm:$0xff]
      %v1647 = vld [vmem:[%s7 + $0x150] sm:$0xff]
      %v1648 = vld [vmem:[%s7 + $0x158] sm:$0xff]
      %v1649 = vld [vmem:[%s7 + $0x160] sm:$0xff]
      %v1650 = vld [vmem:[%s7 + $0x168] sm:$0xff]
      %v1651 = vld [vmem:[%s7 + $0x170] sm:$0xff]
      %v1652 = vld [vmem:[%s7 + $0x178] sm:$0xff]
      %v1653 = vld [vmem:[%s8] sm:$0x1]
      %v1655 = vlaneseq
      %v1656 = vshrl.u32 %v1655, 7
      %v1657 = vsub.s32 0, %v1656
      %v1658 = vrot.slane %v1653, %v1657
      %1660 = vmatprep.subr.mxu0 0.0
      %1661 = vmatpush1.msra.mxu0 %v1620
      %1662 = vmatprep.subr.mxu0 0.0
      %1663 = vmatpush1.msra.mxu0 %v1619
      %1664 = vmatprep.subr.mxu0 0.0
      %1665 = vmatpush1.msra.mxu0 %v1618
      %1666 = vmatprep.subr.mxu0 0.0
      %1667 = vmatpush1.msra.mxu0 %v1617
      %1668 = vmatprep.subr.mxu0 0.0
      %1669 = vmatpush1.msra.mxu0 %v1616
      %1670 = vmatprep.subr.mxu0 0.0
      %1671 = vmatpush1.msra.mxu0 %v1615
      %1672 = vmatprep.subr.mxu0 0.0
      %1673 = vmatpush1.msra.mxu0 %v1614
      %1674 = vmatprep.subr.mxu0 0.0
      %1675 = vmatpush1.msra.mxu0 %v1613
      %1676 = vmatprep.subr.mxu0 0.0
      %1677 = vmatpush1.msra.mxu0 %v1612
      %1678 = vmatprep.subr.mxu0 0.0
      %1679 = vmatpush1.msra.mxu0 %v1611
      %1680 = vmatprep.subr.mxu0 0.0
      %1681 = vmatpush1.msra.mxu0 %v1610
      %1682 = vmatprep.subr.mxu0 0.0
      %1683 = vmatpush1.msra.mxu0 %v1609
      %1684 = vmatprep.subr.mxu0 0.0
      %1685 = vmatpush1.msra.mxu0 %v1608
      %1686 = vmatprep.subr.mxu0 0.0
      %1687 = vmatpush1.msra.mxu0 %v1607
      %1688 = vmatprep.subr.mxu0 0.0
      %1689 = vmatpush1.msra.mxu0 %v1606
      %1690 = vmatprep.subr.mxu0 0.0
      %1691 = vmatpush1.msra.mxu0 %v1605
      %1692 = vmatprep.subr.mxu0 0.0
      %1693 = vmatpush2.msra.mxu0 %v1636
      %1694 = vmatprep.subr.mxu0 0.0
      %1695 = vmatpush2.msra.mxu0 %v1635
      %1696 = vmatprep.subr.mxu0 0.0
      %1697 = vmatpush2.msra.mxu0 %v1634
      %1698 = vmatprep.subr.mxu0 0.0
      %1699 = vmatpush2.msra.mxu0 %v1633
      %1700 = vmatprep.subr.mxu0 0.0
      %1701 = vmatpush2.msra.mxu0 %v1632
      %1702 = vmatprep.subr.mxu0 0.0
      %1703 = vmatpush2.msra.mxu0 %v1631
      %1704 = vmatprep.subr.mxu0 0.0
      %1705 = vmatpush2.msra.mxu0 %v1630
      %1706 = vmatprep.subr.mxu0 0.0
      %1707 = vmatpush2.msra.mxu0 %v1629
      %1708 = vmatprep.subr.mxu0 0.0
      %1709 = vmatpush2.msra.mxu0 %v1628
      %1710 = vmatprep.subr.mxu0 0.0
      %1711 = vmatpush2.msra.mxu0 %v1627
      %1712 = vmatprep.subr.mxu0 0.0
      %1713 = vmatpush2.msra.mxu0 %v1626
      %1714 = vmatprep.subr.mxu0 0.0
      %1715 = vmatpush2.msra.mxu0 %v1625
      %1716 = vmatprep.subr.mxu0 0.0
      %1717 = vmatpush2.msra.mxu0 %v1624
      %1718 = vmatprep.subr.mxu0 0.0
      %1719 = vmatpush2.msra.mxu0 %v1623
      %1720 = vmatprep.subr.mxu0 0.0
      %1721 = vmatpush2.msra.mxu0 %v1622
      %1722 = vmatprep.subr.mxu0 0.0
      %1723 = vmatpush2.msra.mxu0 %v1621
      %1724 = vmatprep.mubr.f32.mxu0 %v1436
      %1725 = vmatmul.mubr.f32.gmra.mxu0 %v1516
      %v1726 = vpop.f32.mrf.mxu0
      %v1727 = vadd.f32 %v1658, %v1726
      %v1728 = vpop.f32.mrf.mxu0
      %1729 = vmatprep.mubr.f32.mxu0 %v1437
      %1730 = vmatmul.mubr.f32.gmra.mxu0 %v1521
      %v1731 = vpop.f32.mrf.mxu0
      %v1732 = vadd.f32 %v1658, %v1731
      %v1733 = vpop.f32.mrf.mxu0
      %1734 = vdwg.mxu0
      %1735 = vmatprep.subr.mxu0 0.0
      %1736 = vmatpush1.msra.mxu0 %v1652
      %1737 = vmatprep.subr.mxu0 0.0
      %1738 = vmatpush1.msra.mxu0 %v1651
      %1739 = vmatprep.subr.mxu0 0.0
      %1740 = vmatpush1.msra.mxu0 %v1650
      %1741 = vmatprep.subr.mxu0 0.0
      %1742 = vmatpush1.msra.mxu0 %v1649
      %1743 = vmatprep.subr.mxu0 0.0
      %1744 = vmatpush1.msra.mxu0 %v1648
      %1745 = vmatprep.subr.mxu0 0.0
      %1746 = vmatpush1.msra.mxu0 %v1647
      %1747 = vmatprep.subr.mxu0 0.0
      %1748 = vmatpush1.msra.mxu0 %v1646
      %1749 = vmatprep.subr.mxu0 0.0
      %1750 = vmatpush1.msra.mxu0 %v1645
      %1751 = vmatprep.subr.mxu0 0.0
      %1752 = vmatpush1.msra.mxu0 %v1644
      %1753 = vmatprep.subr.mxu0 0.0
      %1754 = vmatpush1.msra.mxu0 %v1643
      %1755 = vmatprep.subr.mxu0 0.0
      %1756 = vmatpush1.msra.mxu0 %v1642
      %1757 = vmatprep.subr.mxu0 0.0
      %1758 = vmatpush1.msra.mxu0 %v1641
      %1759 = vmatprep.subr.mxu0 0.0
      %1760 = vmatpush1.msra.mxu0 %v1640
      %1761 = vmatprep.subr.mxu0 0.0
      %1762 = vmatpush1.msra.mxu0 %v1639
      %1763 = vmatprep.subr.mxu0 0.0
      %1764 = vmatpush1.msra.mxu0 %v1638
      %1765 = vmatprep.subr.mxu0 0.0
      %1766 = vmatpush1.msra.mxu0 %v1637
      %1767 = vmatprep.subr.mxu0 0.0
      %1768 = vmatpush2.msra.mxu0 0.0
      %1769 = vmatprep.subr.mxu0 0.0
      %1770 = vmatpush2.msra.mxu0 0.0
      %1771 = vmatprep.subr.mxu0 0.0
      %1772 = vmatpush2.msra.mxu0 0.0
      %1773 = vmatprep.subr.mxu0 0.0
      %1774 = vmatpush2.msra.mxu0 0.0
      %1775 = vmatprep.subr.mxu0 0.0
      %1776 = vmatpush2.msra.mxu0 0.0
      %1777 = vmatprep.subr.mxu0 0.0
      %1778 = vmatpush2.msra.mxu0 0.0
      %1779 = vmatprep.subr.mxu0 0.0
      %1780 = vmatpush2.msra.mxu0 0.0
      %1781 = vmatprep.subr.mxu0 0.0
      %1782 = vmatpush2.msra.mxu0 0.0
      %1783 = vmatprep.subr.mxu0 0.0
      %1784 = vmatpush2.msra.mxu0 0.0
      %1785 = vmatprep.subr.mxu0 0.0
      %1786 = vmatpush2.msra.mxu0 0.0
      %1787 = vmatprep.subr.mxu0 0.0
      %1788 = vmatpush2.msra.mxu0 0.0
      %1789 = vmatprep.subr.mxu0 0.0
      %1790 = vmatpush2.msra.mxu0 0.0
      %1791 = vmatprep.subr.mxu0 0.0
      %1792 = vmatpush2.msra.mxu0 0.0
      %1793 = vmatprep.subr.mxu0 0.0
      %1794 = vmatpush2.msra.mxu0 0.0
      %1795 = vmatprep.subr.mxu0 0.0
      %1796 = vmatpush2.msra.mxu0 0.0
      %1797 = vmatprep.subr.mxu0 0.0
      %1798 = vmatpush2.msra.mxu0 0.0
      %1799 = vmatprep.mubr.f32.mxu0 0.0
      %1800 = vmatmul.mubr.f32.gmra.mxu0 %v1597
      %v1801 = vpop.f32.mrf.mxu0
      %v1802 = vadd.f32 %v1727, %v1801
      %v1803 = vpop.f32.mrf.mxu0
      %1804 = vmatprep.mubr.f32.mxu0 0.0
      %1805 = vmatmul.mubr.f32.gmra.mxu0 %v1602
      %v1806 = vpop.f32.mrf.mxu0
      %v1807 = vadd.f32 %v1732, %v1806
      %v1808 = vpop.f32.mrf.mxu0
      %1809 = vdwg.mxu0
      %v1810 = vadd.f32 %v1802, %v1436
      %v1811 = vadd.f32 %v1807, %v1437
      %v1812 = vmax.f32 %v1810, 0.0
      %v1813 = vmax.f32 %v1811, 0.0
      %1814 = vmatprep.subr.mxu0 0.0
      %1815 = vmatpush1.msra.mxu0 0.0
      %1816 = vmatprep.subr.mxu0 0.0
      %1817 = vmatpush1.msra.mxu0 0.0
      %1818 = vmatprep.subr.mxu0 0.0
      %1819 = vmatpush1.msra.mxu0 0.0
      %1820 = vmatprep.subr.mxu0 0.0
      %1821 = vmatpush1.msra.mxu0 0.0
      %1822 = vmatprep.subr.mxu0 0.0
      %1823 = vmatpush1.msra.mxu0 0.0
      %1824 = vmatprep.subr.mxu0 0.0
      %1825 = vmatpush1.msra.mxu0 0.0
      %1826 = vmatprep.subr.mxu0 0.0
      %1827 = vmatpush1.msra.mxu0 0.0
      %1828 = vmatprep.subr.mxu0 0.0
      %1829 = vmatpush1.msra.mxu0 0.0
      %1830 = vmatprep.subr.mxu0 0.0
      %1831 = vmatpush1.msra.mxu0 0.0
      %1832 = vmatprep.subr.mxu0 0.0
      %1833 = vmatpush1.msra.mxu0 0.0
      %1834 = vmatprep.subr.mxu0 0.0
      %1835 = vmatpush1.msra.mxu0 0.0
      %1836 = vmatprep.subr.mxu0 0.0
      %1837 = vmatpush1.msra.mxu0 0.0
      %1838 = vmatprep.subr.mxu0 0.0
      %1839 = vmatpush1.msra.mxu0 0.0
      %1840 = vmatprep.subr.mxu0 0.0
      %1841 = vmatpush1.msra.mxu0 0.0
      %1842 = vmatprep.subr.mxu0 0.0
      %1843 = vmatpush1.msra.mxu0 %v1813
      %1844 = vmatprep.subr.mxu0 0.0
      %1845 = vmatpush1.msra.mxu0 %v1812
      %1846 = vmatprep.subr.mxu0 0.0
      %1847 = vmatpush2.msra.mxu0 0.0
      %1848 = vmatprep.subr.mxu0 0.0
      %1849 = vmatpush2.msra.mxu0 0.0
      %1850 = vmatprep.subr.mxu0 0.0
      %1851 = vmatpush2.msra.mxu0 0.0
      %1852 = vmatprep.subr.mxu0 0.0
      %1853 = vmatpush2.msra.mxu0 0.0
      %1854 = vmatprep.subr.mxu0 0.0
      %1855 = vmatpush2.msra.mxu0 0.0
      %1856 = vmatprep.subr.mxu0 0.0
      %1857 = vmatpush2.msra.mxu0 0.0
      %1858 = vmatprep.subr.mxu0 0.0
      %1859 = vmatpush2.msra.mxu0 0.0
      %1860 = vmatprep.subr.mxu0 0.0
      %1861 = vmatpush2.msra.mxu0 0.0
      %1862 = vmatprep.subr.mxu0 0.0
      %1863 = vmatpush2.msra.mxu0 0.0
      %1864 = vmatprep.subr.mxu0 0.0
      %1865 = vmatpush2.msra.mxu0 0.0
      %1866 = vmatprep.subr.mxu0 0.0
      %1867 = vmatpush2.msra.mxu0 0.0
      %1868 = vmatprep.subr.mxu0 0.0
      %1869 = vmatpush2.msra.mxu0 0.0
      %1870 = vmatprep.subr.mxu0 0.0
      %1871 = vmatpush2.msra.mxu0 0.0
      %1872 = vmatprep.subr.mxu0 0.0
      %1873 = vmatpush2.msra.mxu0 0.0
      %1874 = vmatprep.subr.mxu0 0.0
      %1875 = vmatpush2.msra.mxu0 0.0
      %1876 = vmatprep.subr.mxu0 0.0
      %1877 = vmatpush2.msra.mxu0 0.0
      %1878 = vmatprep.mubr.f32.mxu0 0.0
      %1879 = vmatmul.mubr.f32.gmra.mxu0 %v1444
      %v1880 = vpop.f32.mrf.mxu0
      %v1881 = vadd.f32 0.0, %v1880
      %v1882 = vpop.f32.mrf.mxu0
      %1883 = vmatprep.mubr.f32.mxu0 0.0
      %1884 = vmatmul.mubr.f32.gmra.mxu0 %v1447
      %v1885 = vpop.f32.mrf.mxu0
      %v1886 = vadd.f32 0.0, %v1885
      %v1887 = vpop.f32.mrf.mxu0
      %1888 = vdwg.mxu0
      %1889 = vmatprep.subr.mxu0 0.0
      %1890 = vmatpush1.msra.mxu0 0.0
      %1891 = vmatprep.subr.mxu0 0.0
      %1892 = vmatpush1.msra.mxu0 0.0
      %1893 = vmatprep.subr.mxu0 0.0
      %1894 = vmatpush1.msra.mxu0 0.0
      %1895 = vmatprep.subr.mxu0 0.0
      %1896 = vmatpush1.msra.mxu0 0.0
      %1897 = vmatprep.subr.mxu0 0.0
      %1898 = vmatpush1.msra.mxu0 0.0
      %1899 = vmatprep.subr.mxu0 0.0
      %1900 = vmatpush1.msra.mxu0 0.0
      %1901 = vmatprep.subr.mxu0 0.0
      %1902 = vmatpush1.msra.mxu0 0.0
      %1903 = vmatprep.subr.mxu0 0.0
      %1904 = vmatpush1.msra.mxu0 0.0
      %1905 = vmatprep.subr.mxu0 0.0
      %1906 = vmatpush1.msra.mxu0 0.0
      %1907 = vmatprep.subr.mxu0 0.0
      %1908 = vmatpush1.msra.mxu0 0.0
      %1909 = vmatprep.subr.mxu0 0.0
      %1910 = vmatpush1.msra.mxu0 0.0
      %1911 = vmatprep.subr.mxu0 0.0
      %1912 = vmatpush1.msra.mxu0 0.0
      %1913 = vmatprep.subr.mxu0 0.0
      %1914 = vmatpush1.msra.mxu0 0.0
      %1915 = vmatprep.subr.mxu0 0.0
      %1916 = vmatpush1.msra.mxu0 0.0
      %1917 = vmatprep.subr.mxu0 0.0
      %1918 = vmatpush1.msra.mxu0 %v1813
      %1919 = vmatprep.subr.mxu0 0.0
      %1920 = vmatpush1.msra.mxu0 %v1812
      %1921 = vmatprep.subr.mxu0 0.0
      %1922 = vmatpush2.msra.mxu0 0.0
      %1923 = vmatprep.subr.mxu0 0.0
      %1924 = vmatpush2.msra.mxu0 0.0
      %1925 = vmatprep.subr.mxu0 0.0
      %1926 = vmatpush2.msra.mxu0 0.0
      %1927 = vmatprep.subr.mxu0 0.0
      %1928 = vmatpush2.msra.mxu0 0.0
      %1929 = vmatprep.subr.mxu0 0.0
      %1930 = vmatpush2.msra.mxu0 0.0
      %1931 = vmatprep.subr.mxu0 0.0
      %1932 = vmatpush2.msra.mxu0 0.0
      %1933 = vmatprep.subr.mxu0 0.0
      %1934 = vmatpush2.msra.mxu0 0.0
      %1935 = vmatprep.subr.mxu0 0.0
      %1936 = vmatpush2.msra.mxu0 0.0
      %1937 = vmatprep.subr.mxu0 0.0
      %1938 = vmatpush2.msra.mxu0 0.0
      %1939 = vmatprep.subr.mxu0 0.0
      %1940 = vmatpush2.msra.mxu0 0.0
      %1941 = vmatprep.subr.mxu0 0.0
      %1942 = vmatpush2.msra.mxu0 0.0
      %1943 = vmatprep.subr.mxu0 0.0
      %1944 = vmatpush2.msra.mxu0 0.0
      %1945 = vmatprep.subr.mxu0 0.0
      %1946 = vmatpush2.msra.mxu0 0.0
      %1947 = vmatprep.subr.mxu0 0.0
      %1948 = vmatpush2.msra.mxu0 0.0
      %1949 = vmatprep.subr.mxu0 0.0
      %1950 = vmatpush2.msra.mxu0 0.0
      %1951 = vmatprep.subr.mxu0 0.0
      %1952 = vmatpush2.msra.mxu0 0.0
      %1953 = vmatprep.mubr.f32.mxu0 0.0
      %1954 = vmatmul.mubr.f32.gmra.mxu0 %v1525
      %v1955 = vpop.f32.mrf.mxu0
      %v1956 = vadd.f32 0.0, %v1955
      %v1957 = vpop.f32.mrf.mxu0
      %1958 = vmatprep.mubr.f32.mxu0 0.0
      %1959 = vmatmul.mubr.f32.gmra.mxu0 %v1528
      %v1960 = vpop.f32.mrf.mxu0
      %v1961 = vadd.f32 0.0, %v1960
      %v1962 = vpop.f32.mrf.mxu0
      %1963 = vdwg.mxu0
      %v1964 = vld [vmem:[%s9] sm:$0xff]
      %v1965 = vld [vmem:[%s9 + $0x8] sm:$0xff]
      %v1966 = vld [vmem:[%s9 + $0x10] sm:$0xff]
      %v1967 = vld [vmem:[%s9 + $0x18] sm:$0xff]
      %v1968 = vld [vmem:[%s9 + $0x20] sm:$0xff]
      %v1969 = vld [vmem:[%s9 + $0x28] sm:$0xff]
      %v1970 = vld [vmem:[%s9 + $0x30] sm:$0xff]
      %v1971 = vld [vmem:[%s9 + $0x38] sm:$0xff]
      %v1972 = vld [vmem:[%s9 + $0x40] sm:$0xff]
      %v1973 = vld [vmem:[%s9 + $0x48] sm:$0xff]
      %v1974 = vld [vmem:[%s9 + $0x50] sm:$0xff]
      %v1975 = vld [vmem:[%s9 + $0x58] sm:$0xff]
      %v1976 = vld [vmem:[%s9 + $0x60] sm:$0xff]
      %v1977 = vld [vmem:[%s9 + $0x68] sm:$0xff]
      %v1978 = vld [vmem:[%s9 + $0x70] sm:$0xff]
      %v1979 = vld [vmem:[%s9 + $0x78] sm:$0xff]
      %v1980 = vld [vmem:[%s9 + $0x80] sm:$0xff]
      %v1981 = vld [vmem:[%s9 + $0x88] sm:$0xff]
      %v1982 = vld [vmem:[%s9 + $0x90] sm:$0xff]
      %v1983 = vld [vmem:[%s9 + $0x98] sm:$0xff]
      %v1984 = vld [vmem:[%s9 + $0xa0] sm:$0xff]
      %v1985 = vld [vmem:[%s9 + $0xa8] sm:$0xff]
      %v1986 = vld [vmem:[%s9 + $0xb0] sm:$0xff]
      %v1987 = vld [vmem:[%s9 + $0xb8] sm:$0xff]
      %v1988 = vld [vmem:[%s9 + $0xc0] sm:$0xff]
      %v1989 = vld [vmem:[%s9 + $0xc8] sm:$0xff]
      %v1990 = vld [vmem:[%s9 + $0xd0] sm:$0xff]
      %v1991 = vld [vmem:[%s9 + $0xd8] sm:$0xff]
      %v1992 = vld [vmem:[%s9 + $0xe0] sm:$0xff]
      %v1993 = vld [vmem:[%s9 + $0xe8] sm:$0xff]
      %v1994 = vld [vmem:[%s9 + $0xf0] sm:$0xff]
      %v1995 = vld [vmem:[%s9 + $0xf8] sm:$0xff]
      %v1996 = vld [vmem:[%s9 + $0x100] sm:$0xff]
      %v1997 = vld [vmem:[%s9 + $0x108] sm:$0xff]
      %v1998 = vld [vmem:[%s9 + $0x110] sm:$0xff]
      %v1999 = vld [vmem:[%s9 + $0x118] sm:$0xff]
      %v2000 = vld [vmem:[%s9 + $0x120] sm:$0xff]
      %v2001 = vld [vmem:[%s9 + $0x128] sm:$0xff]
      %v2002 = vld [vmem:[%s9 + $0x130] sm:$0xff]
      %v2003 = vld [vmem:[%s9 + $0x138] sm:$0xff]
      %v2004 = vld [vmem:[%s9 + $0x140] sm:$0xff]
      %v2005 = vld [vmem:[%s9 + $0x148] sm:$0xff]
      %v2006 = vld [vmem:[%s9 + $0x150] sm:$0xff]
      %v2007 = vld [vmem:[%s9 + $0x158] sm:$0xff]
      %v2008 = vld [vmem:[%s9 + $0x160] sm:$0xff]
      %v2009 = vld [vmem:[%s9 + $0x168] sm:$0xff]
      %v2010 = vld [vmem:[%s9 + $0x170] sm:$0xff]
      %v2011 = vld [vmem:[%s9 + $0x178] sm:$0xff]
      %v2012 = vld [vmem:[%s10] sm:$0x1]
      %v2014 = vlaneseq
      %v2015 = vshrl.u32 %v2014, 7
      %v2016 = vsub.s32 0, %v2015
      %v2017 = vrot.slane %v2012, %v2016
      %2019 = vmatprep.subr.mxu0 0.0
      %2020 = vmatpush1.msra.mxu0 %v1979
      %2021 = vmatprep.subr.mxu0 0.0
      %2022 = vmatpush1.msra.mxu0 %v1978
      %2023 = vmatprep.subr.mxu0 0.0
      %2024 = vmatpush1.msra.mxu0 %v1977
      %2025 = vmatprep.subr.mxu0 0.0
      %2026 = vmatpush1.msra.mxu0 %v1976
      %2027 = vmatprep.subr.mxu0 0.0
      %2028 = vmatpush1.msra.mxu0 %v1975
      %2029 = vmatprep.subr.mxu0 0.0
      %2030 = vmatpush1.msra.mxu0 %v1974
      %2031 = vmatprep.subr.mxu0 0.0
      %2032 = vmatpush1.msra.mxu0 %v1973
      %2033 = vmatprep.subr.mxu0 0.0
      %2034 = vmatpush1.msra.mxu0 %v1972
      %2035 = vmatprep.subr.mxu0 0.0
      %2036 = vmatpush1.msra.mxu0 %v1971
      %2037 = vmatprep.subr.mxu0 0.0
      %2038 = vmatpush1.msra.mxu0 %v1970
      %2039 = vmatprep.subr.mxu0 0.0
      %2040 = vmatpush1.msra.mxu0 %v1969
      %2041 = vmatprep.subr.mxu0 0.0
      %2042 = vmatpush1.msra.mxu0 %v1968
      %2043 = vmatprep.subr.mxu0 0.0
      %2044 = vmatpush1.msra.mxu0 %v1967
      %2045 = vmatprep.subr.mxu0 0.0
      %2046 = vmatpush1.msra.mxu0 %v1966
      %2047 = vmatprep.subr.mxu0 0.0
      %2048 = vmatpush1.msra.mxu0 %v1965
      %2049 = vmatprep.subr.mxu0 0.0
      %2050 = vmatpush1.msra.mxu0 %v1964
      %2051 = vmatprep.subr.mxu0 0.0
      %2052 = vmatpush2.msra.mxu0 %v1995
      %2053 = vmatprep.subr.mxu0 0.0
      %2054 = vmatpush2.msra.mxu0 %v1994
      %2055 = vmatprep.subr.mxu0 0.0
      %2056 = vmatpush2.msra.mxu0 %v1993
      %2057 = vmatprep.subr.mxu0 0.0
      %2058 = vmatpush2.msra.mxu0 %v1992
      %2059 = vmatprep.subr.mxu0 0.0
      %2060 = vmatpush2.msra.mxu0 %v1991
      %2061 = vmatprep.subr.mxu0 0.0
      %2062 = vmatpush2.msra.mxu0 %v1990
      %2063 = vmatprep.subr.mxu0 0.0
      %2064 = vmatpush2.msra.mxu0 %v1989
      %2065 = vmatprep.subr.mxu0 0.0
      %2066 = vmatpush2.msra.mxu0 %v1988
      %2067 = vmatprep.subr.mxu0 0.0
      %2068 = vmatpush2.msra.mxu0 %v1987
      %2069 = vmatprep.subr.mxu0 0.0
      %2070 = vmatpush2.msra.mxu0 %v1986
      %2071 = vmatprep.subr.mxu0 0.0
      %2072 = vmatpush2.msra.mxu0 %v1985
      %2073 = vmatprep.subr.mxu0 0.0
      %2074 = vmatpush2.msra.mxu0 %v1984
      %2075 = vmatprep.subr.mxu0 0.0
      %2076 = vmatpush2.msra.mxu0 %v1983
      %2077 = vmatprep.subr.mxu0 0.0
      %2078 = vmatpush2.msra.mxu0 %v1982
      %2079 = vmatprep.subr.mxu0 0.0
      %2080 = vmatpush2.msra.mxu0 %v1981
      %2081 = vmatprep.subr.mxu0 0.0
      %2082 = vmatpush2.msra.mxu0 %v1980
      %2083 = vmatprep.mubr.f32.mxu0 %v1812
      %2084 = vmatmul.mubr.f32.gmra.mxu0 %v1881
      %v2085 = vpop.f32.mrf.mxu0
      %v2086 = vadd.f32 %v2017, %v2085
      %v2087 = vpop.f32.mrf.mxu0
      %2088 = vmatprep.mubr.f32.mxu0 %v1813
      %2089 = vmatmul.mubr.f32.gmra.mxu0 %v1886
      %v2090 = vpop.f32.mrf.mxu0
      %v2091 = vadd.f32 %v2017, %v2090
      %v2092 = vpop.f32.mrf.mxu0
      %2093 = vdwg.mxu0
      %2094 = vmatprep.subr.mxu0 0.0
      %2095 = vmatpush1.msra.mxu0 %v2011
      %2096 = vmatprep.subr.mxu0 0.0
      %2097 = vmatpush1.msra.mxu0 %v2010
      %2098 = vmatprep.subr.mxu0 0.0
      %2099 = vmatpush1.msra.mxu0 %v2009
      %2100 = vmatprep.subr.mxu0 0.0
      %2101 = vmatpush1.msra.mxu0 %v2008
      %2102 = vmatprep.subr.mxu0 0.0
      %2103 = vmatpush1.msra.mxu0 %v2007
      %2104 = vmatprep.subr.mxu0 0.0
      %2105 = vmatpush1.msra.mxu0 %v2006
      %2106 = vmatprep.subr.mxu0 0.0
      %2107 = vmatpush1.msra.mxu0 %v2005
      %2108 = vmatprep.subr.mxu0 0.0
      %2109 = vmatpush1.msra.mxu0 %v2004
      %2110 = vmatprep.subr.mxu0 0.0
      %2111 = vmatpush1.msra.mxu0 %v2003
      %2112 = vmatprep.subr.mxu0 0.0
      %2113 = vmatpush1.msra.mxu0 %v2002
      %2114 = vmatprep.subr.mxu0 0.0
      %2115 = vmatpush1.msra.mxu0 %v2001
      %2116 = vmatprep.subr.mxu0 0.0
      %2117 = vmatpush1.msra.mxu0 %v2000
      %2118 = vmatprep.subr.mxu0 0.0
      %2119 = vmatpush1.msra.mxu0 %v1999
      %2120 = vmatprep.subr.mxu0 0.0
      %2121 = vmatpush1.msra.mxu0 %v1998
      %2122 = vmatprep.subr.mxu0 0.0
      %2123 = vmatpush1.msra.mxu0 %v1997
      %2124 = vmatprep.subr.mxu0 0.0
      %2125 = vmatpush1.msra.mxu0 %v1996
      %2126 = vmatprep.subr.mxu0 0.0
      %2127 = vmatpush2.msra.mxu0 0.0
      %2128 = vmatprep.subr.mxu0 0.0
      %2129 = vmatpush2.msra.mxu0 0.0
      %2130 = vmatprep.subr.mxu0 0.0
      %2131 = vmatpush2.msra.mxu0 0.0
      %2132 = vmatprep.subr.mxu0 0.0
      %2133 = vmatpush2.msra.mxu0 0.0
      %2134 = vmatprep.subr.mxu0 0.0
      %2135 = vmatpush2.msra.mxu0 0.0
      %2136 = vmatprep.subr.mxu0 0.0
      %2137 = vmatpush2.msra.mxu0 0.0
      %2138 = vmatprep.subr.mxu0 0.0
      %2139 = vmatpush2.msra.mxu0 0.0
      %2140 = vmatprep.subr.mxu0 0.0
      %2141 = vmatpush2.msra.mxu0 0.0
      %2142 = vmatprep.subr.mxu0 0.0
      %2143 = vmatpush2.msra.mxu0 0.0
      %2144 = vmatprep.subr.mxu0 0.0
      %2145 = vmatpush2.msra.mxu0 0.0
      %2146 = vmatprep.subr.mxu0 0.0
      %2147 = vmatpush2.msra.mxu0 0.0
      %2148 = vmatprep.subr.mxu0 0.0
      %2149 = vmatpush2.msra.mxu0 0.0
      %2150 = vmatprep.subr.mxu0 0.0
      %2151 = vmatpush2.msra.mxu0 0.0
      %2152 = vmatprep.subr.mxu0 0.0
      %2153 = vmatpush2.msra.mxu0 0.0
      %2154 = vmatprep.subr.mxu0 0.0
      %2155 = vmatpush2.msra.mxu0 0.0
      %2156 = vmatprep.subr.mxu0 0.0
      %2157 = vmatpush2.msra.mxu0 0.0
      %2158 = vmatprep.mubr.f32.mxu0 0.0
      %2159 = vmatmul.mubr.f32.gmra.mxu0 %v1956
      %v2160 = vpop.f32.mrf.mxu0
      %v2161 = vadd.f32 %v2086, %v2160
      %v2162 = vpop.f32.mrf.mxu0
      %2163 = vmatprep.mubr.f32.mxu0 0.0
      %2164 = vmatmul.mubr.f32.gmra.mxu0 %v1961
      %v2165 = vpop.f32.mrf.mxu0
      %v2166 = vadd.f32 %v2091, %v2165
      %v2167 = vpop.f32.mrf.mxu0
      %2168 = vdwg.mxu0
      %v2169 = vadd.f32 %v2161, %v1812
      %v2170 = vadd.f32 %v2166, %v1813
      %v2171 = vadd.f32 %v2169, %v1436
      %v2172 = vadd.f32 %v2170, %v1437
      %v2173 = vmax.f32 %v2171, 0.0
      %v2174 = vmax.f32 %v2172, 0.0
      %2175 = vst [vmem:[%s391] sm:$0xff] %v2173
      %2176 = vst [vmem:[%s391 + $0x8] sm:$0xff] %v2174
      %s2177 = smul.u32 2, %s22
      %p2178 = scmp.lt.s32.totalorder %s2177, 3
      %s2179 = scalar_select %p2178, %s2177, 3
      %s2180 = smul.addr %s2179, 8
      %s2181 = scalar_lea.vmem %s11, %s2180
      // Predicated region
      $region65: #{mfa_forward.1} parent=63 // pred_check
        %p2182 = pneg %p276
      $region66: #{mfa_forward.1} parent=63 // pred_check_branch
        %2184 = sbr.rel (%p2182) target = $region68
      $region67: #{mfa_forward.1} parent=63 // pred_region
        %s2185 = smul.u32 2, %s22
      $region68: #{mfa_forward.1} parent=63 // pred_fallthru
        _
    $region64: #{mfa_forward.1} parent=5 // pred_fallthru
      _
    %p2186 = scmp.le.s32.totalorder 2, %s17
    // Predicated region
    $region69: #{mfa_forward.1} parent=5 // pred_check
      %p2187 = pneg %p2186
    $region70: #{mfa_forward.1} parent=5 // pred_check_branch
      %2189 = sbr.rel (%p2187) target = $region72
    $region71: #{mfa_forward.1} parent=5 // pred_region
      %s2190 = ssub.s32 %s17, 2
      // Predicated region
      $region73: #{mfa_forward.1} parent=71 // pred_check
        %p2191 = pneg %p282
      $region74: #{mfa_forward.1} parent=71 // pred_check_branch
        %2193 = sbr.rel (%p2191) target = $region76
      $region75: #{mfa_forward.1} parent=71 // pred_region
        %s2194 = smul.u32 2, %s23
        %p2195 = scmp.lt.s32.totalorder %s2194, 3
        %s2196 = scalar_select %p2195, %s2194, 3
        %s2197 = smul.addr %s2196, 8
        %s2198 = scalar_lea.vmem %s11, %s2197
      $region76: #{mfa_forward.1} parent=71 // pred_fallthru
        _
    $region72: #{mfa_forward.1} parent=5 // pred_fallthru
      _
  $region6: #{mfa_forward.1} parent=0 // loop_footer
    %s21 = sadd.s32 1, %s17
  $region7: #{mfa_forward.1} parent=0 // loop_footer_branch
    %16 = sbr.rel target = $region3
  $region8: #{mfa_forward.1} parent=0 // loop_exit
    _

// kernel: mfa_forward.1
$region0: #{mfa_forward.1}
  #allocation0 [shape = 'u32[]', space=smem, size = 0x4, offset = 0x4, fixed_abs, tag = 'smem constant byte address 0x4 - core index']
  #allocation1 [shape = 'u32[144,128]{1,0:T(1,128)}', space=vmem, size = 0x12000, scoped, tag = 'internal scratch']
  %s0 = inlined_call_operand.vmem [shape: f32[32,640], index: 0, kind: input, shape index: {}]
  %s1 = inlined_call_operand.vmem [shape: f32[640,512], index: 1, kind: input, shape index: {}]
  %s2 = inlined_call_operand.vmem [shape: f32[1,512], index: 2, kind: input, shape index: {}]
  %s3 = inlined_call_operand.vmem [shape: f32[512,128], index: 3, kind: input, shape index: {}]
  %s4 = inlined_call_operand.vmem [shape: f32[1,128], index: 4, kind: input, shape index: {}]
  %s5 = inlined_call_operand.vmem [shape: f32[16,16], index: 5, kind: input, shape index: {}]
  %s6 = inlined_call_operand.vmem [shape: f32[16,16], index: 6, kind: input, shape index: {}]
  %s7 = inlined_call_operand.vmem [shape: f32[384,128], index: 7, kind: input, shape index: {}]
  %s8 = inlined_call_operand.vmem [shape: f32[1,128], index: 8, kind: input, shape index: {}]
  %s9 = inlined_call_operand.vmem [shape: f32[384,128], index: 9, kind: input, shape index: {}]
  %s10 = inlined_call_operand.vmem [shape: f32[1,128], index: 10, kind: input, shape index: {}]
  %s11 = inlined_call_operand.vmem [shape: f32[32,128], index: 11, kind: output, shape index: {}]
  %s12 = sld [smem:[#allocation0]]
  $region77: #{mfa_forward.1} parent=0
    _
  %s14 = ssub.s32 1, %s12
  %s15 = scalar_select 0, %s14, %s12
  loop: start=0, step=1, limit=4
  $region2: #{mfa_forward.1} parent=0 // loop_pre_header
    _
  $region3: #{mfa_forward.1} parent=0 // loop_header
    %s17 = sphi 0, %s21
    %p18 = scmp.ge.s32.totalorder %s17, 4
    %s27 = sphi 0, %s29
    %s30 = sphi 0, %s27
    %s31 = sphi 0, %s30
    %s47 = sphi 0, %s31
    %s51 = sphi 0, %s51
    %s53 = sphi 0, %s51
    %s54 = sphi 0, %s53
    %s68 = sphi 0, %s54
    %s72 = sphi 0, %s72
    %s74 = sphi 0, %s72
    %s75 = sphi 0, %s74
    %s89 = sphi 0, %s75
    %s93 = sphi 0, %s93
    %s95 = sphi 0, %s93
    %s96 = sphi 0, %s95
    %s110 = sphi 0, %s96
    %s114 = sphi 0, %s114
    %s116 = sphi 0, %s114
    %s117 = sphi 0, %s116
    %s131 = sphi 0, %s117
    %s135 = sphi 0, %s135
    %s137 = sphi 0, %s135
    %s138 = sphi 0, %s137
    %s152 = sphi 0, %s138
    %s156 = sphi 0, %s156
    %s158 = sphi 0, %s156
    %s159 = sphi 0, %s158
    %s173 = sphi 0, %s159
    %s177 = sphi 0, %s177
    %s179 = sphi 0, %s177
    %s180 = sphi 0, %s179
    %s194 = sphi 0, %s180
    %s198 = sphi 0, %s198
    %s200 = sphi 0, %s198
    %s201 = sphi 0, %s200
    %s215 = sphi 0, %s201
    %s219 = sphi 0, %s219
    %s221 = sphi 0, %s219
    %s222 = sphi 0, %s221
    %s236 = sphi 0, %s222
    %s240 = sphi 0, %s240
    %s242 = sphi 0, %s240
    %s243 = sphi 0, %s242
    %s257 = sphi 0, %s243
    %s263 = sphi 0, %s265
    %s266 = sphi 0, %s263
    %s267 = sphi 0, %s266
    %s283 = sphi 0, %s267
  $region4: #{mfa_forward.1} parent=0 // loop_header_branch
    %20 = sbr.rel (%p18) target = $region8
  $region5: #{mfa_forward.1} parent=0 // loop_body
    %s22 = ssub.s32 %s17, 1
    %s23 = ssub.s32 %s17, 2
    %s24 = sadd.s32 %s17, 1
    %s25 = ssub.s32 %s17, %s24
    %p26 = scmp.eq.s32.totalorder %s25, 0
    %s28 = sadd.s32 %s27, 1
    %s29 = scalar_select %p26, %s27, %s28
    %p32 = pneg %p26
    %p33 = scmp.eq.s32.totalorder %s17, 1
    %p34 = por %p32, %p33
    %p35 = scmp.ne.s32.totalorder %s27, %s30
    %p36 = scmp.eq.s32.totalorder %s17, 0
    %p37 = por %p35, %p36
    %p38 = scmp.ne.s32.totalorder %s27, %s30
    %p39 = scmp.eq.s32.totalorder %s22, 1
    %p40 = por %p38, %p39
    %p41 = scmp.ne.s32.totalorder %s30, %s31
    %p42 = scmp.eq.s32.totalorder %s22, 0
    %p43 = por %p41, %p42
    %p44 = scmp.ne.s32.totalorder %s30, %s31
    %p45 = scmp.eq.s32.totalorder %s23, 1
    %p46 = por %p44, %p45
    %p48 = scmp.ne.s32.totalorder %s31, %s47
    %p49 = scmp.eq.s32.totalorder %s23, 0
    %p50 = por %p48, %p49
    %s52 = sadd.s32 %s51, 1
    %p55 = scmp.eq.s32.totalorder %s17, 1
    %p56 = scmp.ne.s32.totalorder %s51, %s53
    %p57 = scmp.eq.s32.totalorder %s17, 0
    %p58 = por %p56, %p57
    %p59 = scmp.ne.s32.totalorder %s51, %s53
    %p60 = scmp.eq.s32.totalorder %s22, 1
    %p61 = por %p59, %p60
    %p62 = scmp.ne.s32.totalorder %s53, %s54
    %p63 = scmp.eq.s32.totalorder %s22, 0
    %p64 = por %p62, %p63
    %p65 = scmp.ne.s32.totalorder %s53, %s54
    %p66 = scmp.eq.s32.totalorder %s23, 1
    %p67 = por %p65, %p66
    %p69 = scmp.ne.s32.totalorder %s54, %s68
    %p70 = scmp.eq.s32.totalorder %s23, 0
    %p71 = por %p69, %p70
    %s73 = sadd.s32 %s72, 1
    %p76 = scmp.eq.s32.totalorder %s17, 1
    %p77 = scmp.ne.s32.totalorder %s72, %s74
    %p78 = scmp.eq.s32.totalorder %s17, 0
    %p79 = por %p77, %p78
    %p80 = scmp.ne.s32.totalorder %s72, %s74
    %p81 = scmp.eq.s32.totalorder %s22, 1
    %p82 = por %p80, %p81
    %p83 = scmp.ne.s32.totalorder %s74, %s75
    %p84 = scmp.eq.s32.totalorder %s22, 0
    %p85 = por %p83, %p84
    %p86 = scmp.ne.s32.totalorder %s74, %s75
    %p87 = scmp.eq.s32.totalorder %s23, 1
    %p88 = por %p86, %p87
    %p90 = scmp.ne.s32.totalorder %s75, %s89
    %p91 = scmp.eq.s32.totalorder %s23, 0
    %p92 = por %p90, %p91
    %s94 = sadd.s32 %s93, 1
    %p97 = scmp.eq.s32.totalorder %s17, 1
    %p98 = scmp.ne.s32.totalorder %s93, %s95
    %p99 = scmp.eq.s32.totalorder %s17, 0
    %p100 = por %p98, %p99
    %p101 = scmp.ne.s32.totalorder %s93, %s95
    %p102 = scmp.eq.s32.totalorder %s22, 1
    %p103 = por %p101, %p102
    %p104 = scmp.ne.s32.totalorder %s95, %s96
    %p105 = scmp.eq.s32.totalorder %s22, 0
    %p106 = por %p104, %p105
    %p107 = scmp.ne.s32.totalorder %s95, %s96
    %p108 = scmp.eq.s32.totalorder %s23, 1
    %p109 = por %p107, %p108
    %p111 = scmp.ne.s32.totalorder %s96, %s110
    %p112 = scmp.eq.s32.totalorder %s23, 0
    %p113 = por %p111, %p112
    %s115 = sadd.s32 %s114, 1
    %p118 = scmp.eq.s32.totalorder %s17, 1
    %p119 = scmp.ne.s32.totalorder %s114, %s116
    %p120 = scmp.eq.s32.totalorder %s17, 0
    %p121 = por %p119, %p120
    %p122 = scmp.ne.s32.totalorder %s114, %s116
    %p123 = scmp.eq.s32.totalorder %s22, 1
    %p124 = por %p122, %p123
    %p125 = scmp.ne.s32.totalorder %s116, %s117
    %p126 = scmp.eq.s32.totalorder %s22, 0
    %p127 = por %p125, %p126
    %p128 = scmp.ne.s32.totalorder %s116, %s117
    %p129 = scmp.eq.s32.totalorder %s23, 1
    %p130 = por %p128, %p129
    %p132 = scmp.ne.s32.totalorder %s117, %s131
    %p133 = scmp.eq.s32.totalorder %s23, 0
    %p134 = por %p132, %p133
    %s136 = sadd.s32 %s135, 1
    %p139 = scmp.eq.s32.totalorder %s17, 1
    %p140 = scmp.ne.s32.totalorder %s135, %s137
    %p141 = scmp.eq.s32.totalorder %s17, 0
    %p142 = por %p140, %p141
    %p143 = scmp.ne.s32.totalorder %s135, %s137
    %p144 = scmp.eq.s32.totalorder %s22, 1
    %p145 = por %p143, %p144
    %p146 = scmp.ne.s32.totalorder %s137, %s138
    %p147 = scmp.eq.s32.totalorder %s22, 0
    %p148 = por %p146, %p147
    %p149 = scmp.ne.s32.totalorder %s137, %s138
    %p150 = scmp.eq.s32.totalorder %s23, 1
    %p151 = por %p149, %p150
    %p153 = scmp.ne.s32.totalorder %s138, %s152
    %p154 = scmp.eq.s32.totalorder %s23, 0
    %p155 = por %p153, %p154
    %s157 = sadd.s32 %s156, 1
    %p160 = scmp.eq.s32.totalorder %s17, 1
    %p161 = scmp.ne.s32.totalorder %s156, %s158
    %p162 = scmp.eq.s32.totalorder %s17, 0
    %p163 = por %p161, %p162
    %p164 = scmp.ne.s32.totalorder %s156, %s158
    %p165 = scmp.eq.s32.totalorder %s22, 1
    %p166 = por %p164, %p165
    %p167 = scmp.ne.s32.totalorder %s158, %s159
    %p168 = scmp.eq.s32.totalorder %s22, 0
    %p169 = por %p167, %p168
    %p170 = scmp.ne.s32.totalorder %s158, %s159
    %p171 = scmp.eq.s32.totalorder %s23, 1
    %p172 = por %p170, %p171
    %p174 = scmp.ne.s32.totalorder %s159, %s173
    %p175 = scmp.eq.s32.totalorder %s23, 0
    %p176 = por %p174, %p175
    %s178 = sadd.s32 %s177, 1
    %p181 = scmp.eq.s32.totalorder %s17, 1
    %p182 = scmp.ne.s32.totalorder %s177, %s179
    %p183 = scmp.eq.s32.totalorder %s17, 0
    %p184 = por %p182, %p183
    %p185 = scmp.ne.s32.totalorder %s177, %s179
    %p186 = scmp.eq.s32.totalorder %s22, 1
    %p187 = por %p185, %p186
    %p188 = scmp.ne.s32.totalorder %s179, %s180
    %p189 = scmp.eq.s32.totalorder %s22, 0
    %p190 = por %p188, %p189
    %p191 = scmp.ne.s32.totalorder %s179, %s180
    %p192 = scmp.eq.s32.totalorder %s23, 1
    %p193 = por %p191, %p192
    %p195 = scmp.ne.s32.totalorder %s180, %s194
    %p196 = scmp.eq.s32.totalorder %s23, 0
    %p197 = por %p195, %p196
    %s199 = sadd.s32 %s198, 1
    %p202 = scmp.eq.s32.totalorder %s17, 1
    %p203 = scmp.ne.s32.totalorder %s198, %s200
    %p204 = scmp.eq.s32.totalorder %s17, 0
    %p205 = por %p203, %p204
    %p206 = scmp.ne.s32.totalorder %s198, %s200
    %p207 = scmp.eq.s32.totalorder %s22, 1
    %p208 = por %p206, %p207
    %p209 = scmp.ne.s32.totalorder %s200, %s201
    %p210 = scmp.eq.s32.totalorder %s22, 0
    %p211 = por %p209, %p210
    %p212 = scmp.ne.s32.totalorder %s200, %s201
    %p213 = scmp.eq.s32.totalorder %s23, 1
    %p214 = por %p212, %p213
    %p216 = scmp.ne.s32.totalorder %s201, %s215
    %p217 = scmp.eq.s32.totalorder %s23, 0
    %p218 = por %p216, %p217
    %s220 = sadd.s32 %s219, 1
    %p223 = scmp.eq.s32.totalorder %s17, 1
    %p224 = scmp.ne.s32.totalorder %s219, %s221
    %p225 = scmp.eq.s32.totalorder %s17, 0
    %p226 = por %p224, %p225
    %p227 = scmp.ne.s32.totalorder %s219, %s221
    %p228 = scmp.eq.s32.totalorder %s22, 1
    %p229 = por %p227, %p228
    %p230 = scmp.ne.s32.totalorder %s221, %s222
    %p231 = scmp.eq.s32.totalorder %s22, 0
    %p232 = por %p230, %p231
    %p233 = scmp.ne.s32.totalorder %s221, %s222
    %p234 = scmp.eq.s32.totalorder %s23, 1
    %p235 = por %p233, %p234
    %p237 = scmp.ne.s32.totalorder %s222, %s236
    %p238 = scmp.eq.s32.totalorder %s23, 0
    %p239 = por %p237, %p238
    %s241 = sadd.s32 %s240, 1
    %p244 = scmp.eq.s32.totalorder %s17, 1
    %p245 = scmp.ne.s32.totalorder %s240, %s242
    %p246 = scmp.eq.s32.totalorder %s17, 0
    %p247 = por %p245, %p246
    %p248 = scmp.ne.s32.totalorder %s240, %s242
    %p249 = scmp.eq.s32.totalorder %s22, 1
    %p250 = por %p248, %p249
    %p251 = scmp.ne.s32.totalorder %s242, %s243
    %p252 = scmp.eq.s32.totalorder %s22, 0
    %p253 = por %p251, %p252
    %p254 = scmp.ne.s32.totalorder %s242, %s243
    %p255 = scmp.eq.s32.totalorder %s23, 1
    %p256 = por %p254, %p255
    %p258 = scmp.ne.s32.totalorder %s243, %s257
    %p259 = scmp.eq.s32.totalorder %s23, 0
    %p260 = por %p258, %p259
    %s261 = ssub.s32 %s17, %s24
    %p262 = scmp.eq.s32.totalorder %s261, 0
    %s264 = sadd.s32 %s263, 1
    %s265 = scalar_select %p262, %s263, %s264
    %p268 = pneg %p262
    %p269 = scmp.eq.s32.totalorder %s17, 1
    %p270 = por %p268, %p269
    %p271 = scmp.ne.s32.totalorder %s263, %s266
    %p272 = scmp.eq.s32.totalorder %s17, 0
    %p273 = por %p271, %p272
    %p274 = scmp.ne.s32.totalorder %s263, %s266
    %p275 = scmp.eq.s32.totalorder %s22, 1
    %p276 = por %p274, %p275
    %p277 = scmp.ne.s32.totalorder %s266, %s267
    %p278 = scmp.eq.s32.totalorder %s22, 0
    %p279 = por %p277, %p278
    %p280 = scmp.ne.s32.totalorder %s266, %s267
    %p281 = scmp.eq.s32.totalorder %s23, 1
    %p282 = por %p280, %p281
    %p284 = scmp.ne.s32.totalorder %s267, %s283
    %p285 = scmp.eq.s32.totalorder %s23, 0
    %p286 = por %p284, %p285
    %p287 = scmp.le.s32.totalorder 1, %s17
    %p288 = scmp.lt.s32.totalorder %s17, 3
    %p289 = pnand %p287, %p288
    %p290 = pneg %p289
    // Predicated region
    $region9: #{mfa_forward.1} parent=5 // pred_check
      _
    $region10: #{mfa_forward.1} parent=5 // pred_check_branch
      %292 = sbr.rel (%p289) target = $region12
    $region11: #{mfa_forward.1} parent=5 // pred_region
      %s293 = ssub.s32 %s17, 1
      // Predicated region
      $region13: #{mfa_forward.1} parent=11 // pred_check
        %p294 = pneg %p64
      $region14: #{mfa_forward.1} parent=11 // pred_check_branch
        %296 = sbr.rel (%p294) target = $region16
      $region15: #{mfa_forward.1} parent=11 // pred_region
        _
      $region16: #{mfa_forward.1} parent=11 // pred_fallthru
        _
      // Predicated region
      $region17: #{mfa_forward.1} parent=11 // pred_check
        %p297 = pneg %p85
      $region18: #{mfa_forward.1} parent=11 // pred_check_branch
        %299 = sbr.rel (%p297) target = $region20
      $region19: #{mfa_forward.1} parent=11 // pred_region
        _
      $region20: #{mfa_forward.1} parent=11 // pred_fallthru
        _
      // Predicated region
      $region21: #{mfa_forward.1} parent=11 // pred_check
        %p300 = pneg %p106
      $region22: #{mfa_forward.1} parent=11 // pred_check_branch
        %302 = sbr.rel (%p300) target = $region24
      $region23: #{mfa_forward.1} parent=11 // pred_region
        _
      $region24: #{mfa_forward.1} parent=11 // pred_fallthru
        _
      // Predicated region
      $region25: #{mfa_forward.1} parent=11 // pred_check
        %p303 = pneg %p127
      $region26: #{mfa_forward.1} parent=11 // pred_check_branch
        %305 = sbr.rel (%p303) target = $region28
      $region27: #{mfa_forward.1} parent=11 // pred_region
        _
      $region28: #{mfa_forward.1} parent=11 // pred_fallthru
        _
      // Predicated region
      $region29: #{mfa_forward.1} parent=11 // pred_check
        %p306 = pneg %p148
      $region30: #{mfa_forward.1} parent=11 // pred_check_branch
        %308 = sbr.rel (%p306) target = $region32
      $region31: #{mfa_forward.1} parent=11 // pred_region
        _
      $region32: #{mfa_forward.1} parent=11 // pred_fallthru
        _
      // Predicated region
      $region33: #{mfa_forward.1} parent=11 // pred_check
        %p309 = pneg %p169
      $region34: #{mfa_forward.1} parent=11 // pred_check_branch
        %311 = sbr.rel (%p309) target = $region36
      $region35: #{mfa_forward.1} parent=11 // pred_region
        _
      $region36: #{mfa_forward.1} parent=11 // pred_fallthru
        _
      // Predicated region
      $region37: #{mfa_forward.1} parent=11 // pred_check
        %p312 = pneg %p190
      $region38: #{mfa_forward.1} parent=11 // pred_check_branch
        %314 = sbr.rel (%p312) target = $region40
      $region39: #{mfa_forward.1} parent=11 // pred_region
        _
      $region40: #{mfa_forward.1} parent=11 // pred_fallthru
        _
      // Predicated region
      $region41: #{mfa_forward.1} parent=11 // pred_check
        %p315 = pneg %p211
      $region42: #{mfa_forward.1} parent=11 // pred_check_branch
        %317 = sbr.rel (%p315) target = $region44
      $region43: #{mfa_forward.1} parent=11 // pred_region
        _
      $region44: #{mfa_forward.1} parent=11 // pred_fallthru
        _
      // Predicated region
      $region45: #{mfa_forward.1} parent=11 // pred_check
        %p318 = pneg %p232
      $region46: #{mfa_forward.1} parent=11 // pred_check_branch
        %320 = sbr.rel (%p318) target = $region48
      $region47: #{mfa_forward.1} parent=11 // pred_region
        _
      $region48: #{mfa_forward.1} parent=11 // pred_fallthru
        _
      // Predicated region
      $region49: #{mfa_forward.1} parent=11 // pred_check
        %p321 = pneg %p253
      $region50: #{mfa_forward.1} parent=11 // pred_check_branch
        %323 = sbr.rel (%p321) target = $region52
      $region51: #{mfa_forward.1} parent=11 // pred_region
        _
      $region52: #{mfa_forward.1} parent=11 // pred_fallthru
        _
    $region12: #{mfa_forward.1} parent=5 // pred_fallthru
      _
    %p324 = scmp.lt.s32.totalorder %s17, 2
    // Predicated region
    $region53: #{mfa_forward.1} parent=5 // pred_check
      %p325 = pneg %p324
    $region54: #{mfa_forward.1} parent=5 // pred_check_branch
      %327 = sbr.rel (%p325) target = $region56
    $region55: #{mfa_forward.1} parent=5 // pred_region
      // Predicated region
      $region57: #{mfa_forward.1} parent=55 // pred_check
        %p328 = pneg %p37
      $region58: #{mfa_forward.1} parent=55 // pred_check_branch
        %330 = sbr.rel (%p328) target = $region60
      $region59: #{mfa_forward.1} parent=55 // pred_region
        %s331 = smul.u32 2, %s17
        %p332 = scmp.lt.s32.totalorder %s331, 3
        %s333 = scalar_select %p332, %s331, 3
        %s334 = smul.addr %s333, 5
        %s335 = smul.addr %s334, 8
        %s336 = scalar_lea.vmem %s0, %s335
        %s337 = smul.u32 2, %s17
      $region60: #{mfa_forward.1} parent=55 // pred_fallthru
        _
    $region56: #{mfa_forward.1} parent=5 // pred_fallthru
      _
    %p338 = scmp.le.s32.totalorder 1, %s17
    %p339 = scmp.lt.s32.totalorder %s17, 3
    %p340 = pnand %p338, %p339
    %p341 = pneg %p340
    // Predicated region
    $region61: #{mfa_forward.1} parent=5 // pred_check
      _
    $region62: #{mfa_forward.1} parent=5 // pred_check_branch
      %343 = sbr.rel (%p340) target = $region64
    $region63: #{mfa_forward.1} parent=5 // pred_region
      %s344 = ssub.s32 %s17, 1
      %s345 = smul.u32 2, %s22
      %p346 = scmp.lt.s32.totalorder %s345, 3
      %s347 = scalar_select %p346, %s345, 3
      %s348 = smul.addr %s347, 5
      %s349 = smul.addr %s348, 8
      %s350 = scalar_lea.vmem %s0, %s349
      %p351 = pneg %p43
      %p352 = pneg %p40
      %p353 = pneg %p64
      %p354 = pneg %p61
      %p355 = pneg %p85
      %p356 = pneg %p82
      %p357 = pneg %p106
      %p358 = pneg %p103
      %p359 = pneg %p127
      %p360 = pneg %p124
      %p361 = pneg %p148
      %p362 = pneg %p145
      %p363 = pneg %p169
      %p364 = pneg %p166
      %p365 = pneg %p190
      %p366 = pneg %p187
      %p367 = pneg %p211
      %p368 = pneg %p208
      %p369 = pneg %p232
      %p370 = pneg %p229
      %p371 = pneg %p253
      %p372 = pneg %p250
      %p373 = pneg %p279
      %p374 = pneg %p276
      %s375 = smul.u32 2, %s22
      %p376 = scmp.lt.s32.totalorder %s375, 3
      %s377 = scalar_select %p376, %s375, 3
      %s378 = smul.addr %s377, 8
      %s379 = scalar_lea.vmem %s11, %s378
      %s380 = smul.u32 2, %s22
      %p381 = scmp.lt.s32.totalorder %s380, 3
      %s382 = scalar_select %p381, %s380, 3
      %s383 = smul.addr %s382, 5
      %s384 = smul.addr %s383, 8
      %s385 = scalar_lea.vmem %s0, %s384
      %s386 = smul.u32 2, %s22
      %s387 = smul.u32 2, %s22
      %p388 = scmp.lt.s32.totalorder %s387, 3
      %s389 = scalar_select %p388, %s387, 3
      %s390 = smul.addr %s389, 8
      %s391 = scalar_lea.vmem %s11, %s390
      %s392 = smul.u32 2, %s22
      %v393 = vld [vmem:[%s385] sm:$0xff]
      %v394 = vld [vmem:[%s385 + $0x8] sm:$0xff]
      %v395 = vld [vmem:[%s385 + $0x10] sm:$0xff]
      %v396 = vld [vmem:[%s385 + $0x18] sm:$0xff]
      %v397 = vld [vmem:[%s385 + $0x20] sm:$0xff]
      %v398 = vld [vmem:[%s385 + $0x28] sm:$0xff]
      %v399 = vld [vmem:[%s385 + $0x30] sm:$0xff]
      %v400 = vld [vmem:[%s385 + $0x38] sm:$0xff]
      %v401 = vld [vmem:[%s385 + $0x40] sm:$0xff]
      %v402 = vld [vmem:[%s385 + $0x48] sm:$0xff]
      %v403 = vld [vmem:[%s1] sm:$0xff]
      %v404 = vld [vmem:[%s1 + $0x8] sm:$0xff]
      %v405 = vld [vmem:[%s1 + $0x10] sm:$0xff]
      %v406 = vld [vmem:[%s1 + $0x18] sm:$0xff]
      %v407 = vld [vmem:[%s1 + $0x20] sm:$0xff]
      %v408 = vld [vmem:[%s1 + $0x28] sm:$0xff]
      %v409 = vld [vmem:[%s1 + $0x30] sm:$0xff]
      %v410 = vld [vmem:[%s1 + $0x38] sm:$0xff]
      %v411 = vld [vmem:[%s1 + $0x40] sm:$0xff]
      %v412 = vld [vmem:[%s1 + $0x48] sm:$0xff]
      %v413 = vld [vmem:[%s1 + $0x50] sm:$0xff]
      %v414 = vld [vmem:[%s1 + $0x58] sm:$0xff]
      %v415 = vld [vmem:[%s1 + $0x60] sm:$0xff]
      %v416 = vld [vmem:[%s1 + $0x68] sm:$0xff]
      %v417 = vld [vmem:[%s1 + $0x70] sm:$0xff]
      %v418 = vld [vmem:[%s1 + $0x78] sm:$0xff]
      %v419 = vld [vmem:[%s1 + $0x80] sm:$0xff]
      %v420 = vld [vmem:[%s1 + $0x88] sm:$0xff]
      %v421 = vld [vmem:[%s1 + $0x90] sm:$0xff]
      %v422 = vld [vmem:[%s1 + $0x98] sm:$0xff]
      %v423 = vld [vmem:[%s1 + $0xa0] sm:$0xff]
      %v424 = vld [vmem:[%s1 + $0xa8] sm:$0xff]
      %v425 = vld [vmem:[%s1 + $0xb0] sm:$0xff]
      %v426 = vld [vmem:[%s1 + $0xb8] sm:$0xff]
      %v427 = vld [vmem:[%s1 + $0xc0] sm:$0xff]
      %v428 = vld [vmem:[%s1 + $0xc8] sm:$0xff]
      %v429 = vld [vmem:[%s1 + $0xd0] sm:$0xff]
      %v430 = vld [vmem:[%s1 + $0xd8] sm:$0xff]
      %v431 = vld [vmem:[%s1 + $0xe0] sm:$0xff]
      %v432 = vld [vmem:[%s1 + $0xe8] sm:$0xff]
      %v433 = vld [vmem:[%s1 + $0xf0] sm:$0xff]
      %v434 = vld [vmem:[%s1 + $0xf8] sm:$0xff]
      %v435 = vld [vmem:[%s1 + $0x100] sm:$0xff]
      %v436 = vld [vmem:[%s1 + $0x108] sm:$0xff]
      %v437 = vld [vmem:[%s1 + $0x110] sm:$0xff]
      %v438 = vld [vmem:[%s1 + $0x118] sm:$0xff]
      %v439 = vld [vmem:[%s1 + $0x120] sm:$0xff]
      %v440 = vld [vmem:[%s1 + $0x128] sm:$0xff]
      %v441 = vld [vmem:[%s1 + $0x130] sm:$0xff]
      %v442 = vld [vmem:[%s1 + $0x138] sm:$0xff]
      %v443 = vld [vmem:[%s1 + $0x140] sm:$0xff]
      %v444 = vld [vmem:[%s1 + $0x148] sm:$0xff]
      %v445 = vld [vmem:[%s1 + $0x150] sm:$0xff]
      %v446 = vld [vmem:[%s1 + $0x158] sm:$0xff]
      %v447 = vld [vmem:[%s1 + $0x160] sm:$0xff]
      %v448 = vld [vmem:[%s1 + $0x168] sm:$0xff]
      %v449 = vld [vmem:[%s1 + $0x170] sm:$0xff]
      %v450 = vld [vmem:[%s1 + $0x178] sm:$0xff]
      %v451 = vld [vmem:[%s1 + $0x180] sm:$0xff]
      %v452 = vld [vmem:[%s1 + $0x188] sm:$0xff]
      %v453 = vld [vmem:[%s1 + $0x190] sm:$0xff]
      %v454 = vld [vmem:[%s1 + $0x198] sm:$0xff]
      %v455 = vld [vmem:[%s1 + $0x1a0] sm:$0xff]
      %v456 = vld [vmem:[%s1 + $0x1a8] sm:$0xff]
      %v457 = vld [vmem:[%s1 + $0x1b0] sm:$0xff]
      %v458 = vld [vmem:[%s1 + $0x1b8] sm:$0xff]
      %v459 = vld [vmem:[%s1 + $0x1c0] sm:$0xff]
      %v460 = vld [vmem:[%s1 + $0x1c8] sm:$0xff]
      %v461 = vld [vmem:[%s1 + $0x1d0] sm:$0xff]
      %v462 = vld [vmem:[%s1 + $0x1d8] sm:$0xff]
      %v463 = vld [vmem:[%s1 + $0x1e0] sm:$0xff]
      %v464 = vld [vmem:[%s1 + $0x1e8] sm:$0xff]
      %v465 = vld [vmem:[%s1 + $0x1f0] sm:$0xff]
      %v466 = vld [vmem:[%s1 + $0x1f8] sm:$0xff]
      %v467 = vld [vmem:[%s1 + $0x200] sm:$0xff]
      %v468 = vld [vmem:[%s1 + $0x208] sm:$0xff]
      %v469 = vld [vmem:[%s1 + $0x210] sm:$0xff]
      %v470 = vld [vmem:[%s1 + $0x218] sm:$0xff]
      %v471 = vld [vmem:[%s1 + $0x220] sm:$0xff]
      %v472 = vld [vmem:[%s1 + $0x228] sm:$0xff]
      %v473 = vld [vmem:[%s1 + $0x230] sm:$0xff]
      %v474 = vld [vmem:[%s1 + $0x238] sm:$0xff]
      %v475 = vld [vmem:[%s1 + $0x240] sm:$0xff]
      %v476 = vld [vmem:[%s1 + $0x248] sm:$0xff]
      %v477 = vld [vmem:[%s1 + $0x250] sm:$0xff]
      %v478 = vld [vmem:[%s1 + $0x258] sm:$0xff]
      %v479 = vld [vmem:[%s1 + $0x260] sm:$0xff]
      %v480 = vld [vmem:[%s1 + $0x268] sm:$0xff]
      %v481 = vld [vmem:[%s1 + $0x270] sm:$0xff]
      %v482 = vld [vmem:[%s1 + $0x278] sm:$0xff]
      %v483 = vld [vmem:[%s1 + $0x280] sm:$0xff]
      %v484 = vld [vmem:[%s1 + $0x288] sm:$0xff]
      %v485 = vld [vmem:[%s1 + $0x290] sm:$0xff]
      %v486 = vld [vmem:[%s1 + $0x298] sm:$0xff]
      %v487 = vld [vmem:[%s1 + $0x2a0] sm:$0xff]
      %v488 = vld [vmem:[%s1 + $0x2a8] sm:$0xff]
      %v489 = vld [vmem:[%s1 + $0x2b0] sm:$0xff]
      %v490 = vld [vmem:[%s1 + $0x2b8] sm:$0xff]
      %v491 = vld [vmem:[%s1 + $0x2c0] sm:$0xff]
      %v492 = vld [vmem:[%s1 + $0x2c8] sm:$0xff]
      %v493 = vld [vmem:[%s1 + $0x2d0] sm:$0xff]
      %v494 = vld [vmem:[%s1 + $0x2d8] sm:$0xff]
      %v495 = vld [vmem:[%s1 + $0x2e0] sm:$0xff]
      %v496 = vld [vmem:[%s1 + $0x2e8] sm:$0xff]
      %v497 = vld [vmem:[%s1 + $0x2f0] sm:$0xff]
      %v498 = vld [vmem:[%s1 + $0x2f8] sm:$0xff]
      %v499 = vld [vmem:[%s1 + $0x300] sm:$0xff]
      %v500 = vld [vmem:[%s1 + $0x308] sm:$0xff]
      %v501 = vld [vmem:[%s1 + $0x310] sm:$0xff]
      %v502 = vld [vmem:[%s1 + $0x318] sm:$0xff]
      %v503 = vld [vmem:[%s1 + $0x320] sm:$0xff]
      %v504 = vld [vmem:[%s1 + $0x328] sm:$0xff]
      %v505 = vld [vmem:[%s1 + $0x330] sm:$0xff]
      %v506 = vld [vmem:[%s1 + $0x338] sm:$0xff]
      %v507 = vld [vmem:[%s1 + $0x340] sm:$0xff]
      %v508 = vld [vmem:[%s1 + $0x348] sm:$0xff]
      %v509 = vld [vmem:[%s1 + $0x350] sm:$0xff]
      %v510 = vld [vmem:[%s1 + $0x358] sm:$0xff]
      %v511 = vld [vmem:[%s1 + $0x360] sm:$0xff]
      %v512 = vld [vmem:[%s1 + $0x368] sm:$0xff]
      %v513 = vld [vmem:[%s1 + $0x370] sm:$0xff]
      %v514 = vld [vmem:[%s1 + $0x378] sm:$0xff]
      %v515 = vld [vmem:[%s1 + $0x380] sm:$0xff]
      %v516 = vld [vmem:[%s1 + $0x388] sm:$0xff]
      %v517 = vld [vmem:[%s1 + $0x390] sm:$0xff]
      %v518 = vld [vmem:[%s1 + $0x398] sm:$0xff]
      %v519 = vld [vmem:[%s1 + $0x3a0] sm:$0xff]
      %v520 = vld [vmem:[%s1 + $0x3a8] sm:$0xff]
      %v521 = vld [vmem:[%s1 + $0x3b0] sm:$0xff]
      %v522 = vld [vmem:[%s1 + $0x3b8] sm:$0xff]
      %v523 = vld [vmem:[%s1 + $0x3c0] sm:$0xff]
      %v524 = vld [vmem:[%s1 + $0x3c8] sm:$0xff]
      %v525 = vld [vmem:[%s1 + $0x3d0] sm:$0xff]
      %v526 = vld [vmem:[%s1 + $0x3d8] sm:$0xff]
      %v527 = vld [vmem:[%s1 + $0x3e0] sm:$0xff]
      %v528 = vld [vmem:[%s1 + $0x3e8] sm:$0xff]
      %v529 = vld [vmem:[%s1 + $0x3f0] sm:$0xff]
      %v530 = vld [vmem:[%s1 + $0x3f8] sm:$0xff]
      %v531 = vld [vmem:[%s1 + $0x400] sm:$0xff]
      %v532 = vld [vmem:[%s1 + $0x408] sm:$0xff]
      %v533 = vld [vmem:[%s1 + $0x410] sm:$0xff]
      %v534 = vld [vmem:[%s1 + $0x418] sm:$0xff]
      %v535 = vld [vmem:[%s1 + $0x420] sm:$0xff]
      %v536 = vld [vmem:[%s1 + $0x428] sm:$0xff]
      %v537 = vld [vmem:[%s1 + $0x430] sm:$0xff]
      %v538 = vld [vmem:[%s1 + $0x438] sm:$0xff]
      %v539 = vld [vmem:[%s1 + $0x440] sm:$0xff]
      %v540 = vld [vmem:[%s1 + $0x448] sm:$0xff]
      %v541 = vld [vmem:[%s1 + $0x450] sm:$0xff]
      %v542 = vld [vmem:[%s1 + $0x458] sm:$0xff]
      %v543 = vld [vmem:[%s1 + $0x460] sm:$0xff]
      %v544 = vld [vmem:[%s1 + $0x468] sm:$0xff]
      %v545 = vld [vmem:[%s1 + $0x470] sm:$0xff]
      %v546 = vld [vmem:[%s1 + $0x478] sm:$0xff]
      %v547 = vld [vmem:[%s1 + $0x480] sm:$0xff]
      %v548 = vld [vmem:[%s1 + $0x488] sm:$0xff]
      %v549 = vld [vmem:[%s1 + $0x490] sm:$0xff]
      %v550 = vld [vmem:[%s1 + $0x498] sm:$0xff]
      %v551 = vld [vmem:[%s1 + $0x4a0] sm:$0xff]
      %v552 = vld [vmem:[%s1 + $0x4a8] sm:$0xff]
      %v553 = vld [vmem:[%s1 + $0x4b0] sm:$0xff]
      %v554 = vld [vmem:[%s1 + $0x4b8] sm:$0xff]
      %v555 = vld [vmem:[%s1 + $0x4c0] sm:$0xff]
      %v556 = vld [vmem:[%s1 + $0x4c8] sm:$0xff]
      %v557 = vld [vmem:[%s1 + $0x4d0] sm:$0xff]
      %v558 = vld [vmem:[%s1 + $0x4d8] sm:$0xff]
      %v559 = vld [vmem:[%s1 + $0x4e0] sm:$0xff]
      %v560 = vld [vmem:[%s1 + $0x4e8] sm:$0xff]
      %v561 = vld [vmem:[%s1 + $0x4f0] sm:$0xff]
      %v562 = vld [vmem:[%s1 + $0x4f8] sm:$0xff]
      %v563 = vld [vmem:[%s1 + $0x500] sm:$0xff]
      %v564 = vld [vmem:[%s1 + $0x508] sm:$0xff]
      %v565 = vld [vmem:[%s1 + $0x510] sm:$0xff]
      %v566 = vld [vmem:[%s1 + $0x518] sm:$0xff]
      %v567 = vld [vmem:[%s1 + $0x520] sm:$0xff]
      %v568 = vld [vmem:[%s1 + $0x528] sm:$0xff]
      %v569 = vld [vmem:[%s1 + $0x530] sm:$0xff]
      %v570 = vld [vmem:[%s1 + $0x538] sm:$0xff]
      %v571 = vld [vmem:[%s1 + $0x540] sm:$0xff]
      %v572 = vld [vmem:[%s1 + $0x548] sm:$0xff]
      %v573 = vld [vmem:[%s1 + $0x550] sm:$0xff]
      %v574 = vld [vmem:[%s1 + $0x558] sm:$0xff]
      %v575 = vld [vmem:[%s1 + $0x560] sm:$0xff]
      %v576 = vld [vmem:[%s1 + $0x568] sm:$0xff]
      %v577 = vld [vmem:[%s1 + $0x570] sm:$0xff]
      %v578 = vld [vmem:[%s1 + $0x578] sm:$0xff]
      %v579 = vld [vmem:[%s1 + $0x580] sm:$0xff]
      %v580 = vld [vmem:[%s1 + $0x588] sm:$0xff]
      %v581 = vld [vmem:[%s1 + $0x590] sm:$0xff]
      %v582 = vld [vmem:[%s1 + $0x598] sm:$0xff]
      %v583 = vld [vmem:[%s1 + $0x5a0] sm:$0xff]
      %v584 = vld [vmem:[%s1 + $0x5a8] sm:$0xff]
      %v585 = vld [vmem:[%s1 + $0x5b0] sm:$0xff]
      %v586 = vld [vmem:[%s1 + $0x5b8] sm:$0xff]
      %v587 = vld [vmem:[%s1 + $0x5c0] sm:$0xff]
      %v588 = vld [vmem:[%s1 + $0x5c8] sm:$0xff]
      %v589 = vld [vmem:[%s1 + $0x5d0] sm:$0xff]
      %v590 = vld [vmem:[%s1 + $0x5d8] sm:$0xff]
      %v591 = vld [vmem:[%s1 + $0x5e0] sm:$0xff]
      %v592 = vld [vmem:[%s1 + $0x5e8] sm:$0xff]
      %v593 = vld [vmem:[%s1 + $0x5f0] sm:$0xff]
      %v594 = vld [vmem:[%s1 + $0x5f8] sm:$0xff]
      %v595 = vld [vmem:[%s1 + $0x600] sm:$0xff]
      %v596 = vld [vmem:[%s1 + $0x608] sm:$0xff]
      %v597 = vld [vmem:[%s1 + $0x610] sm:$0xff]
      %v598 = vld [vmem:[%s1 + $0x618] sm:$0xff]
      %v599 = vld [vmem:[%s1 + $0x620] sm:$0xff]
      %v600 = vld [vmem:[%s1 + $0x628] sm:$0xff]
      %v601 = vld [vmem:[%s1 + $0x630] sm:$0xff]
      %v602 = vld [vmem:[%s1 + $0x638] sm:$0xff]
      %v603 = vld [vmem:[%s1 + $0x640] sm:$0xff]
      %v604 = vld [vmem:[%s1 + $0x648] sm:$0xff]
      %v605 = vld [vmem:[%s1 + $0x650] sm:$0xff]
      %v606 = vld [vmem:[%s1 + $0x658] sm:$0xff]
      %v607 = vld [vmem:[%s1 + $0x660] sm:$0xff]
      %v608 = vld [vmem:[%s1 + $0x668] sm:$0xff]
      %v609 = vld [vmem:[%s1 + $0x670] sm:$0xff]
      %v610 = vld [vmem:[%s1 + $0x678] sm:$0xff]
      %v611 = vld [vmem:[%s1 + $0x680] sm:$0xff]
      %v612 = vld [vmem:[%s1 + $0x688] sm:$0xff]
      %v613 = vld [vmem:[%s1 + $0x690] sm:$0xff]
      %v614 = vld [vmem:[%s1 + $0x698] sm:$0xff]
      %v615 = vld [vmem:[%s1 + $0x6a0] sm:$0xff]
      %v616 = vld [vmem:[%s1 + $0x6a8] sm:$0xff]
      %v617 = vld [vmem:[%s1 + $0x6b0] sm:$0xff]
      %v618 = vld [vmem:[%s1 + $0x6b8] sm:$0xff]
      %v619 = vld [vmem:[%s1 + $0x6c0] sm:$0xff]
      %v620 = vld [vmem:[%s1 + $0x6c8] sm:$0xff]
      %v621 = vld [vmem:[%s1 + $0x6d0] sm:$0xff]
      %v622 = vld [vmem:[%s1 + $0x6d8] sm:$0xff]
      %v623 = vld [vmem:[%s1 + $0x6e0] sm:$0xff]
      %v624 = vld [vmem:[%s1 + $0x6e8] sm:$0xff]
      %v625 = vld [vmem:[%s1 + $0x6f0] sm:$0xff]
      %v626 = vld [vmem:[%s1 + $0x6f8] sm:$0xff]
      %v627 = vld [vmem:[%s1 + $0x700] sm:$0xff]
      %v628 = vld [vmem:[%s1 + $0x708] sm:$0xff]
      %v629 = vld [vmem:[%s1 + $0x710] sm:$0xff]
      %v630 = vld [vmem:[%s1 + $0x718] sm:$0xff]
      %v631 = vld [vmem:[%s1 + $0x720] sm:$0xff]
      %v632 = vld [vmem:[%s1 + $0x728] sm:$0xff]
      %v633 = vld [vmem:[%s1 + $0x730] sm:$0xff]
      %v634 = vld [vmem:[%s1 + $0x738] sm:$0xff]
      %v635 = vld [vmem:[%s1 + $0x740] sm:$0xff]
      %v636 = vld [vmem:[%s1 + $0x748] sm:$0xff]
      %v637 = vld [vmem:[%s1 + $0x750] sm:$0xff]
      %v638 = vld [vmem:[%s1 + $0x758] sm:$0xff]
      %v639 = vld [vmem:[%s1 + $0x760] sm:$0xff]
      %v640 = vld [vmem:[%s1 + $0x768] sm:$0xff]
      %v641 = vld [vmem:[%s1 + $0x770] sm:$0xff]
      %v642 = vld [vmem:[%s1 + $0x778] sm:$0xff]
      %v643 = vld [vmem:[%s1 + $0x780] sm:$0xff]
      %v644 = vld [vmem:[%s1 + $0x788] sm:$0xff]
      %v645 = vld [vmem:[%s1 + $0x790] sm:$0xff]
      %v646 = vld [vmem:[%s1 + $0x798] sm:$0xff]
      %v647 = vld [vmem:[%s1 + $0x7a0] sm:$0xff]
      %v648 = vld [vmem:[%s1 + $0x7a8] sm:$0xff]
      %v649 = vld [vmem:[%s1 + $0x7b0] sm:$0xff]
      %v650 = vld [vmem:[%s1 + $0x7b8] sm:$0xff]
      %v651 = vld [vmem:[%s1 + $0x7c0] sm:$0xff]
      %v652 = vld [vmem:[%s1 + $0x7c8] sm:$0xff]
      %v653 = vld [vmem:[%s1 + $0x7d0] sm:$0xff]
      %v654 = vld [vmem:[%s1 + $0x7d8] sm:$0xff]
      %v655 = vld [vmem:[%s1 + $0x7e0] sm:$0xff]
      %v656 = vld [vmem:[%s1 + $0x7e8] sm:$0xff]
      %v657 = vld [vmem:[%s1 + $0x7f0] sm:$0xff]
      %v658 = vld [vmem:[%s1 + $0x7f8] sm:$0xff]
      %v659 = vld [vmem:[%s1 + $0x800] sm:$0xff]
      %v660 = vld [vmem:[%s1 + $0x808] sm:$0xff]
      %v661 = vld [vmem:[%s1 + $0x810] sm:$0xff]
      %v662 = vld [vmem:[%s1 + $0x818] sm:$0xff]
      %v663 = vld [vmem:[%s1 + $0x820] sm:$0xff]
      %v664 = vld [vmem:[%s1 + $0x828] sm:$0xff]
      %v665 = vld [vmem:[%s1 + $0x830] sm:$0xff]
      %v666 = vld [vmem:[%s1 + $0x838] sm:$0xff]
      %v667 = vld [vmem:[%s1 + $0x840] sm:$0xff]
      %v668 = vld [vmem:[%s1 + $0x848] sm:$0xff]
      %v669 = vld [vmem:[%s1 + $0x850] sm:$0xff]
      %v670 = vld [vmem:[%s1 + $0x858] sm:$0xff]
      %v671 = vld [vmem:[%s1 + $0x860] sm:$0xff]
      %v672 = vld [vmem:[%s1 + $0x868] sm:$0xff]
      %v673 = vld [vmem:[%s1 + $0x870] sm:$0xff]
      %v674 = vld [vmem:[%s1 + $0x878] sm:$0xff]
      %v675 = vld [vmem:[%s1 + $0x880] sm:$0xff]
      %v676 = vld [vmem:[%s1 + $0x888] sm:$0xff]
      %v677 = vld [vmem:[%s1 + $0x890] sm:$0xff]
      %v678 = vld [vmem:[%s1 + $0x898] sm:$0xff]
      %v679 = vld [vmem:[%s1 + $0x8a0] sm:$0xff]
      %v680 = vld [vmem:[%s1 + $0x8a8] sm:$0xff]
      %v681 = vld [vmem:[%s1 + $0x8b0] sm:$0xff]
      %v682 = vld [vmem:[%s1 + $0x8b8] sm:$0xff]
      %v683 = vld [vmem:[%s1 + $0x8c0] sm:$0xff]
      %v684 = vld [vmem:[%s1 + $0x8c8] sm:$0xff]
      %v685 = vld [vmem:[%s1 + $0x8d0] sm:$0xff]
      %v686 = vld [vmem:[%s1 + $0x8d8] sm:$0xff]
      %v687 = vld [vmem:[%s1 + $0x8e0] sm:$0xff]
      %v688 = vld [vmem:[%s1 + $0x8e8] sm:$0xff]
      %v689 = vld [vmem:[%s1 + $0x8f0] sm:$0xff]
      %v690 = vld [vmem:[%s1 + $0x8f8] sm:$0xff]
      %v691 = vld [vmem:[%s1 + $0x900] sm:$0xff]
      %v692 = vld [vmem:[%s1 + $0x908] sm:$0xff]
      %v693 = vld [vmem:[%s1 + $0x910] sm:$0xff]
      %v694 = vld [vmem:[%s1 + $0x918] sm:$0xff]
      %v695 = vld [vmem:[%s1 + $0x920] sm:$0xff]
      %v696 = vld [vmem:[%s1 + $0x928] sm:$0xff]
      %v697 = vld [vmem:[%s1 + $0x930] sm:$0xff]
      %v698 = vld [vmem:[%s1 + $0x938] sm:$0xff]
      %v699 = vld [vmem:[%s1 + $0x940] sm:$0xff]
      %v700 = vld [vmem:[%s1 + $0x948] sm:$0xff]
      %v701 = vld [vmem:[%s1 + $0x950] sm:$0xff]
      %v702 = vld [vmem:[%s1 + $0x958] sm:$0xff]
      %v703 = vld [vmem:[%s1 + $0x960] sm:$0xff]
      %v704 = vld [vmem:[%s1 + $0x968] sm:$0xff]
      %v705 = vld [vmem:[%s1 + $0x970] sm:$0xff]
      %v706 = vld [vmem:[%s1 + $0x978] sm:$0xff]
      %v707 = vld [vmem:[%s1 + $0x980] sm:$0xff]
      %v708 = vld [vmem:[%s1 + $0x988] sm:$0xff]
      %v709 = vld [vmem:[%s1 + $0x990] sm:$0xff]
      %v710 = vld [vmem:[%s1 + $0x998] sm:$0xff]
      %v711 = vld [vmem:[%s1 + $0x9a0] sm:$0xff]
      %v712 = vld [vmem:[%s1 + $0x9a8] sm:$0xff]
      %v713 = vld [vmem:[%s1 + $0x9b0] sm:$0xff]
      %v714 = vld [vmem:[%s1 + $0x9b8] sm:$0xff]
      %v715 = vld [vmem:[%s1 + $0x9c0] sm:$0xff]
      %v716 = vld [vmem:[%s1 + $0x9c8] sm:$0xff]
      %v717 = vld [vmem:[%s1 + $0x9d0] sm:$0xff]
      %v718 = vld [vmem:[%s1 + $0x9d8] sm:$0xff]
      %v719 = vld [vmem:[%s1 + $0x9e0] sm:$0xff]
      %v720 = vld [vmem:[%s1 + $0x9e8] sm:$0xff]
      %v721 = vld [vmem:[%s1 + $0x9f0] sm:$0xff]
      %v722 = vld [vmem:[%s1 + $0x9f8] sm:$0xff]
      %v723 = vld [vmem:[%s2] sm:$0xf]
      %v725 = vlaneseq
      %v726 = vshrl.u32 %v725, 7
      %v727 = vsub.s32 0, %v726
      %v728 = vrot.slane %v723, %v727
      %v729 = vlaneseq
      %v730 = vshrl.u32 %v729, 7
      %v731 = vsub.s32 1, %v730
      %v732 = vrot.slane %v723, %v731
      %v733 = vlaneseq
      %v734 = vshrl.u32 %v733, 7
      %v735 = vsub.s32 2, %v734
      %v736 = vrot.slane %v723, %v735
      %v737 = vlaneseq
      %v738 = vshrl.u32 %v737, 7
      %v739 = vsub.s32 3, %v738
      %v740 = vrot.slane %v723, %v739
      %745 = vmatprep.subr.mxu0 %v464
      %746 = vmatpush1.msra.mxu0 %v463
      %747 = vmatprep.subr.mxu0 %v460
      %748 = vmatpush1.msra.mxu0 %v459
      %749 = vmatprep.subr.mxu0 %v456
      %750 = vmatpush1.msra.mxu0 %v455
      %751 = vmatprep.subr.mxu0 %v452
      %752 = vmatpush1.msra.mxu0 %v451
      %753 = vmatprep.subr.mxu0 %v448
      %754 = vmatpush1.msra.mxu0 %v447
      %755 = vmatprep.subr.mxu0 %v444
      %756 = vmatpush1.msra.mxu0 %v443
      %757 = vmatprep.subr.mxu0 %v440
      %758 = vmatpush1.msra.mxu0 %v439
      %759 = vmatprep.subr.mxu0 %v436
      %760 = vmatpush1.msra.mxu0 %v435
      %761 = vmatprep.subr.mxu0 %v432
      %762 = vmatpush1.msra.mxu0 %v431
      %763 = vmatprep.subr.mxu0 %v428
      %764 = vmatpush1.msra.mxu0 %v427
      %765 = vmatprep.subr.mxu0 %v424
      %766 = vmatpush1.msra.mxu0 %v423
      %767 = vmatprep.subr.mxu0 %v420
      %768 = vmatpush1.msra.mxu0 %v419
      %769 = vmatprep.subr.mxu0 %v416
      %770 = vmatpush1.msra.mxu0 %v415
      %771 = vmatprep.subr.mxu0 %v412
      %772 = vmatpush1.msra.mxu0 %v411
      %773 = vmatprep.subr.mxu0 %v408
      %774 = vmatpush1.msra.mxu0 %v407
      %775 = vmatprep.subr.mxu0 %v404
      %776 = vmatpush1.msra.mxu0 %v403
      %777 = vmatprep.subr.mxu0 %v528
      %778 = vmatpush2.msra.mxu0 %v527
      %779 = vmatprep.subr.mxu0 %v524
      %780 = vmatpush2.msra.mxu0 %v523
      %781 = vmatprep.subr.mxu0 %v520
      %782 = vmatpush2.msra.mxu0 %v519
      %783 = vmatprep.subr.mxu0 %v516
      %784 = vmatpush2.msra.mxu0 %v515
      %785 = vmatprep.subr.mxu0 %v512
      %786 = vmatpush2.msra.mxu0 %v511
      %787 = vmatprep.subr.mxu0 %v508
      %788 = vmatpush2.msra.mxu0 %v507
      %789 = vmatprep.subr.mxu0 %v504
      %790 = vmatpush2.msra.mxu0 %v503
      %791 = vmatprep.subr.mxu0 %v500
      %792 = vmatpush2.msra.mxu0 %v499
      %793 = vmatprep.subr.mxu0 %v496
      %794 = vmatpush2.msra.mxu0 %v495
      %795 = vmatprep.subr.mxu0 %v492
      %796 = vmatpush2.msra.mxu0 %v491
      %797 = vmatprep.subr.mxu0 %v488
      %798 = vmatpush2.msra.mxu0 %v487
      %799 = vmatprep.subr.mxu0 %v484
      %800 = vmatpush2.msra.mxu0 %v483
      %801 = vmatprep.subr.mxu0 %v480
      %802 = vmatpush2.msra.mxu0 %v479
      %803 = vmatprep.subr.mxu0 %v476
      %804 = vmatpush2.msra.mxu0 %v475
      %805 = vmatprep.subr.mxu0 %v472
      %806 = vmatpush2.msra.mxu0 %v471
      %807 = vmatprep.subr.mxu0 %v468
      %808 = vmatpush2.msra.mxu0 %v467
      %809 = vmatprep.mubr.f32.mxu0 %v394
      %810 = vmatmul.mubr.f32.gmra.mxu0 %v393
      %v811 = vpop.f32.mrf.mxu0
      %v812 = vadd.f32 %v728, %v811
      %v813 = vpop.f32.mrf.mxu0
      %v814 = vadd.f32 %v732, %v813
      %815 = vmatprep.mubr.f32.mxu0 %v399
      %816 = vmatmul.mubr.f32.gmra.mxu0 %v398
      %v817 = vpop.f32.mrf.mxu0
      %v818 = vadd.f32 %v728, %v817
      %v819 = vpop.f32.mrf.mxu0
      %v820 = vadd.f32 %v732, %v819
      %821 = vdwg.mxu0
      %822 = vmatprep.subr.mxu0 %v592
      %823 = vmatpush1.msra.mxu0 %v591
      %824 = vmatprep.subr.mxu0 %v588
      %825 = vmatpush1.msra.mxu0 %v587
      %826 = vmatprep.subr.mxu0 %v584
      %827 = vmatpush1.msra.mxu0 %v583
      %828 = vmatprep.subr.mxu0 %v580
      %829 = vmatpush1.msra.mxu0 %v579
      %830 = vmatprep.subr.mxu0 %v576
      %831 = vmatpush1.msra.mxu0 %v575
      %832 = vmatprep.subr.mxu0 %v572
      %833 = vmatpush1.msra.mxu0 %v571
      %834 = vmatprep.subr.mxu0 %v568
      %835 = vmatpush1.msra.mxu0 %v567
      %836 = vmatprep.subr.mxu0 %v564
      %837 = vmatpush1.msra.mxu0 %v563
      %838 = vmatprep.subr.mxu0 %v560
      %839 = vmatpush1.msra.mxu0 %v559
      %840 = vmatprep.subr.mxu0 %v556
      %841 = vmatpush1.msra.mxu0 %v555
      %842 = vmatprep.subr.mxu0 %v552
      %843 = vmatpush1.msra.mxu0 %v551
      %844 = vmatprep.subr.mxu0 %v548
      %845 = vmatpush1.msra.mxu0 %v547
      %846 = vmatprep.subr.mxu0 %v544
      %847 = vmatpush1.msra.mxu0 %v543
      %848 = vmatprep.subr.mxu0 %v540
      %849 = vmatpush1.msra.mxu0 %v539
      %850 = vmatprep.subr.mxu0 %v536
      %851 = vmatpush1.msra.mxu0 %v535
      %852 = vmatprep.subr.mxu0 %v532
      %853 = vmatpush1.msra.mxu0 %v531
      %854 = vmatprep.subr.mxu0 %v656
      %855 = vmatpush2.msra.mxu0 %v655
      %856 = vmatprep.subr.mxu0 %v652
      %857 = vmatpush2.msra.mxu0 %v651
      %858 = vmatprep.subr.mxu0 %v648
      %859 = vmatpush2.msra.mxu0 %v647
      %860 = vmatprep.subr.mxu0 %v644
      %861 = vmatpush2.msra.mxu0 %v643
      %862 = vmatprep.subr.mxu0 %v640
      %863 = vmatpush2.msra.mxu0 %v639
      %864 = vmatprep.subr.mxu0 %v636
      %865 = vmatpush2.msra.mxu0 %v635
      %866 = vmatprep.subr.mxu0 %v632
      %867 = vmatpush2.msra.mxu0 %v631
      %868 = vmatprep.subr.mxu0 %v628
      %869 = vmatpush2.msra.mxu0 %v627
      %870 = vmatprep.subr.mxu0 %v624
      %871 = vmatpush2.msra.mxu0 %v623
      %872 = vmatprep.subr.mxu0 %v620
      %873 = vmatpush2.msra.mxu0 %v619
      %874 = vmatprep.subr.mxu0 %v616
      %875 = vmatpush2.msra.mxu0 %v615
      %876 = vmatprep.subr.mxu0 %v612
      %877 = vmatpush2.msra.mxu0 %v611
      %878 = vmatprep.subr.mxu0 %v608
      %879 = vmatpush2.msra.mxu0 %v607
      %880 = vmatprep.subr.mxu0 %v604
      %881 = vmatpush2.msra.mxu0 %v603
      %882 = vmatprep.subr.mxu0 %v600
      %883 = vmatpush2.msra.mxu0 %v599
      %884 = vmatprep.subr.mxu0 %v596
      %885 = vmatpush2.msra.mxu0 %v595
      %886 = vmatprep.mubr.f32.mxu0 %v396
      %887 = vmatmul.mubr.f32.gmra.mxu0 %v395
      %v888 = vpop.f32.mrf.mxu0
      %v889 = vadd.f32 %v812, %v888
      %v890 = vpop.f32.mrf.mxu0
      %v891 = vadd.f32 %v814, %v890
      %892 = vmatprep.mubr.f32.mxu0 %v401
      %893 = vmatmul.mubr.f32.gmra.mxu0 %v400
      %v894 = vpop.f32.mrf.mxu0
      %v895 = vadd.f32 %v818, %v894
      %v896 = vpop.f32.mrf.mxu0
      %v897 = vadd.f32 %v820, %v896
      %898 = vdwg.mxu0
      %899 = vmatprep.subr.mxu0 %v720
      %900 = vmatpush1.msra.mxu0 %v719
      %901 = vmatprep.subr.mxu0 %v716
      %902 = vmatpush1.msra.mxu0 %v715
      %903 = vmatprep.subr.mxu0 %v712
      %904 = vmatpush1.msra.mxu0 %v711
      %905 = vmatprep.subr.mxu0 %v708
      %906 = vmatpush1.msra.mxu0 %v707
      %907 = vmatprep.subr.mxu0 %v704
      %908 = vmatpush1.msra.mxu0 %v703
      %909 = vmatprep.subr.mxu0 %v700
      %910 = vmatpush1.msra.mxu0 %v699
      %911 = vmatprep.subr.mxu0 %v696
      %912 = vmatpush1.msra.mxu0 %v695
      %913 = vmatprep.subr.mxu0 %v692
      %914 = vmatpush1.msra.mxu0 %v691
      %915 = vmatprep.subr.mxu0 %v688
      %916 = vmatpush1.msra.mxu0 %v687
      %917 = vmatprep.subr.mxu0 %v684
      %918 = vmatpush1.msra.mxu0 %v683
      %919 = vmatprep.subr.mxu0 %v680
      %920 = vmatpush1.msra.mxu0 %v679
      %921 = vmatprep.subr.mxu0 %v676
      %922 = vmatpush1.msra.mxu0 %v675
      %923 = vmatprep.subr.mxu0 %v672
      %924 = vmatpush1.msra.mxu0 %v671
      %925 = vmatprep.subr.mxu0 %v668
      %926 = vmatpush1.msra.mxu0 %v667
      %927 = vmatprep.subr.mxu0 %v664
      %928 = vmatpush1.msra.mxu0 %v663
      %929 = vmatprep.subr.mxu0 %v660
      %930 = vmatpush1.msra.mxu0 %v659
      %931 = vmatprep.subr.mxu0 0.0
      %932 = vmatpush2.msra.mxu0 0.0
      %933 = vmatprep.subr.mxu0 0.0
      %934 = vmatpush2.msra.mxu0 0.0
      %935 = vmatprep.subr.mxu0 0.0
      %936 = vmatpush2.msra.mxu0 0.0
      %937 = vmatprep.subr.mxu0 0.0
      %938 = vmatpush2.msra.mxu0 0.0
      %939 = vmatprep.subr.mxu0 0.0
      %940 = vmatpush2.msra.mxu0 0.0
      %941 = vmatprep.subr.mxu0 0.0
      %942 = vmatpush2.msra.mxu0 0.0
      %943 = vmatprep.subr.mxu0 0.0
      %944 = vmatpush2.msra.mxu0 0.0
      %945 = vmatprep.subr.mxu0 0.0
      %946 = vmatpush2.msra.mxu0 0.0
      %947 = vmatprep.subr.mxu0 0.0
      %948 = vmatpush2.msra.mxu0 0.0
      %949 = vmatprep.subr.mxu0 0.0
      %950 = vmatpush2.msra.mxu0 0.0
      %951 = vmatprep.subr.mxu0 0.0
      %952 = vmatpush2.msra.mxu0 0.0
      %953 = vmatprep.subr.mxu0 0.0
      %954 = vmatpush2.msra.mxu0 0.0
      %955 = vmatprep.subr.mxu0 0.0
      %956 = vmatpush2.msra.mxu0 0.0
      %957 = vmatprep.subr.mxu0 0.0
      %958 = vmatpush2.msra.mxu0 0.0
      %959 = vmatprep.subr.mxu0 0.0
      %960 = vmatpush2.msra.mxu0 0.0
      %961 = vmatprep.subr.mxu0 0.0
      %962 = vmatpush2.msra.mxu0 0.0
      %963 = vmatprep.mubr.f32.mxu0 0.0
      %964 = vmatmul.mubr.f32.gmra.mxu0 %v397
      %v965 = vpop.f32.mrf.mxu0
      %v966 = vadd.f32 %v889, %v965
      %v967 = vpop.f32.mrf.mxu0
      %v968 = vadd.f32 %v891, %v967
      %969 = vmatprep.mubr.f32.mxu0 0.0
      %970 = vmatmul.mubr.f32.gmra.mxu0 %v402
      %v971 = vpop.f32.mrf.mxu0
      %v972 = vadd.f32 %v895, %v971
      %v973 = vpop.f32.mrf.mxu0
      %v974 = vadd.f32 %v897, %v973
      %975 = vdwg.mxu0
      %976 = vmatprep.subr.mxu0 %v466
      %977 = vmatpush1.msra.mxu0 %v465
      %978 = vmatprep.subr.mxu0 %v462
      %979 = vmatpush1.msra.mxu0 %v461
      %980 = vmatprep.subr.mxu0 %v458
      %981 = vmatpush1.msra.mxu0 %v457
      %982 = vmatprep.subr.mxu0 %v454
      %983 = vmatpush1.msra.mxu0 %v453
      %984 = vmatprep.subr.mxu0 %v450
      %985 = vmatpush1.msra.mxu0 %v449
      %986 = vmatprep.subr.mxu0 %v446
      %987 = vmatpush1.msra.mxu0 %v445
      %988 = vmatprep.subr.mxu0 %v442
      %989 = vmatpush1.msra.mxu0 %v441
      %990 = vmatprep.subr.mxu0 %v438
      %991 = vmatpush1.msra.mxu0 %v437
      %992 = vmatprep.subr.mxu0 %v434
      %993 = vmatpush1.msra.mxu0 %v433
      %994 = vmatprep.subr.mxu0 %v430
      %995 = vmatpush1.msra.mxu0 %v429
      %996 = vmatprep.subr.mxu0 %v426
      %997 = vmatpush1.msra.mxu0 %v425
      %998 = vmatprep.subr.mxu0 %v422
      %999 = vmatpush1.msra.mxu0 %v421
      %1000 = vmatprep.subr.mxu0 %v418
      %1001 = vmatpush1.msra.mxu0 %v417
      %1002 = vmatprep.subr.mxu0 %v414
      %1003 = vmatpush1.msra.mxu0 %v413
      %1004 = vmatprep.subr.mxu0 %v410
      %1005 = vmatpush1.msra.mxu0 %v409
      %1006 = vmatprep.subr.mxu0 %v406
      %1007 = vmatpush1.msra.mxu0 %v405
      %1008 = vmatprep.subr.mxu0 %v530
      %1009 = vmatpush2.msra.mxu0 %v529
      %1010 = vmatprep.subr.mxu0 %v526
      %1011 = vmatpush2.msra.mxu0 %v525
      %1012 = vmatprep.subr.mxu0 %v522
      %1013 = vmatpush2.msra.mxu0 %v521
      %1014 = vmatprep.subr.mxu0 %v518
      %1015 = vmatpush2.msra.mxu0 %v517
      %1016 = vmatprep.subr.mxu0 %v514
      %1017 = vmatpush2.msra.mxu0 %v513
      %1018 = vmatprep.subr.mxu0 %v510
      %1019 = vmatpush2.msra.mxu0 %v509
      %1020 = vmatprep.subr.mxu0 %v506
      %1021 = vmatpush2.msra.mxu0 %v505
      %1022 = vmatprep.subr.mxu0 %v502
      %1023 = vmatpush2.msra.mxu0 %v501
      %1024 = vmatprep.subr.mxu0 %v498
      %1025 = vmatpush2.msra.mxu0 %v497
      %1026 = vmatprep.subr.mxu0 %v494
      %1027 = vmatpush2.msra.mxu0 %v493
      %1028 = vmatprep.subr.mxu0 %v490
      %1029 = vmatpush2.msra.mxu0 %v489
      %1030 = vmatprep.subr.mxu0 %v486
      %1031 = vmatpush2.msra.mxu0 %v485
      %1032 = vmatprep.subr.mxu0 %v482
      %1033 = vmatpush2.msra.mxu0 %v481
      %1034 = vmatprep.subr.mxu0 %v478
      %1035 = vmatpush2.msra.mxu0 %v477
      %1036 = vmatprep.subr.mxu0 %v474
      %1037 = vmatpush2.msra.mxu0 %v473
      %1038 = vmatprep.subr.mxu0 %v470
      %1039 = vmatpush2.msra.mxu0 %v469
      %1040 = vmatprep.mubr.f32.mxu0 %v394
      %1041 = vmatmul.mubr.f32.gmra.mxu0 %v393
      %v1042 = vpop.f32.mrf.mxu0
      %v1043 = vadd.f32 %v736, %v1042
      %v1044 = vpop.f32.mrf.mxu0
      %v1045 = vadd.f32 %v740, %v1044
      %1046 = vmatprep.mubr.f32.mxu0 %v399
      %1047 = vmatmul.mubr.f32.gmra.mxu0 %v398
      %v1048 = vpop.f32.mrf.mxu0
      %v1049 = vadd.f32 %v736, %v1048
      %v1050 = vpop.f32.mrf.mxu0
      %v1051 = vadd.f32 %v740, %v1050
      %1052 = vdwg.mxu0
      %1053 = vmatprep.subr.mxu0 %v594
      %1054 = vmatpush1.msra.mxu0 %v593
      %1055 = vmatprep.subr.mxu0 %v590
      %1056 = vmatpush1.msra.mxu0 %v589
      %1057 = vmatprep.subr.mxu0 %v586
      %1058 = vmatpush1.msra.mxu0 %v585
      %1059 = vmatprep.subr.mxu0 %v582
      %1060 = vmatpush1.msra.mxu0 %v581
      %1061 = vmatprep.subr.mxu0 %v578
      %1062 = vmatpush1.msra.mxu0 %v577
      %1063 = vmatprep.subr.mxu0 %v574
      %1064 = vmatpush1.msra.mxu0 %v573
      %1065 = vmatprep.subr.mxu0 %v570
      %1066 = vmatpush1.msra.mxu0 %v569
      %1067 = vmatprep.subr.mxu0 %v566
      %1068 = vmatpush1.msra.mxu0 %v565
      %1069 = vmatprep.subr.mxu0 %v562
      %1070 = vmatpush1.msra.mxu0 %v561
      %1071 = vmatprep.subr.mxu0 %v558
      %1072 = vmatpush1.msra.mxu0 %v557
      %1073 = vmatprep.subr.mxu0 %v554
      %1074 = vmatpush1.msra.mxu0 %v553
      %1075 = vmatprep.subr.mxu0 %v550
      %1076 = vmatpush1.msra.mxu0 %v549
      %1077 = vmatprep.subr.mxu0 %v546
      %1078 = vmatpush1.msra.mxu0 %v545
      %1079 = vmatprep.subr.mxu0 %v542
      %1080 = vmatpush1.msra.mxu0 %v541
      %1081 = vmatprep.subr.mxu0 %v538
      %1082 = vmatpush1.msra.mxu0 %v537
      %1083 = vmatprep.subr.mxu0 %v534
      %1084 = vmatpush1.msra.mxu0 %v533
      %1085 = vmatprep.subr.mxu0 %v658
      %1086 = vmatpush2.msra.mxu0 %v657
      %1087 = vmatprep.subr.mxu0 %v654
      %1088 = vmatpush2.msra.mxu0 %v653
      %1089 = vmatprep.subr.mxu0 %v650
      %1090 = vmatpush2.msra.mxu0 %v649
      %1091 = vmatprep.subr.mxu0 %v646
      %1092 = vmatpush2.msra.mxu0 %v645
      %1093 = vmatprep.subr.mxu0 %v642
      %1094 = vmatpush2.msra.mxu0 %v641
      %1095 = vmatprep.subr.mxu0 %v638
      %1096 = vmatpush2.msra.mxu0 %v637
      %1097 = vmatprep.subr.mxu0 %v634
      %1098 = vmatpush2.msra.mxu0 %v633
      %1099 = vmatprep.subr.mxu0 %v630
      %1100 = vmatpush2.msra.mxu0 %v629
      %1101 = vmatprep.subr.mxu0 %v626
      %1102 = vmatpush2.msra.mxu0 %v625
      %1103 = vmatprep.subr.mxu0 %v622
      %1104 = vmatpush2.msra.mxu0 %v621
      %1105 = vmatprep.subr.mxu0 %v618
      %1106 = vmatpush2.msra.mxu0 %v617
      %1107 = vmatprep.subr.mxu0 %v614
      %1108 = vmatpush2.msra.mxu0 %v613
      %1109 = vmatprep.subr.mxu0 %v610
      %1110 = vmatpush2.msra.mxu0 %v609
      %1111 = vmatprep.subr.mxu0 %v606
      %1112 = vmatpush2.msra.mxu0 %v605
      %1113 = vmatprep.subr.mxu0 %v602
      %1114 = vmatpush2.msra.mxu0 %v601
      %1115 = vmatprep.subr.mxu0 %v598
      %1116 = vmatpush2.msra.mxu0 %v597
      %1117 = vmatprep.mubr.f32.mxu0 %v396
      %1118 = vmatmul.mubr.f32.gmra.mxu0 %v395
      %v1119 = vpop.f32.mrf.mxu0
      %v1120 = vadd.f32 %v1043, %v1119
      %v1121 = vpop.f32.mrf.mxu0
      %v1122 = vadd.f32 %v1045, %v1121
      %1123 = vmatprep.mubr.f32.mxu0 %v401
      %1124 = vmatmul.mubr.f32.gmra.mxu0 %v400
      %v1125 = vpop.f32.mrf.mxu0
      %v1126 = vadd.f32 %v1049, %v1125
      %v1127 = vpop.f32.mrf.mxu0
      %v1128 = vadd.f32 %v1051, %v1127
      %1129 = vdwg.mxu0
      %1130 = vmatprep.subr.mxu0 %v722
      %1131 = vmatpush1.msra.mxu0 %v721
      %1132 = vmatprep.subr.mxu0 %v718
      %1133 = vmatpush1.msra.mxu0 %v717
      %1134 = vmatprep.subr.mxu0 %v714
      %1135 = vmatpush1.msra.mxu0 %v713
      %1136 = vmatprep.subr.mxu0 %v710
      %1137 = vmatpush1.msra.mxu0 %v709
      %1138 = vmatprep.subr.mxu0 %v706
      %1139 = vmatpush1.msra.mxu0 %v705
      %1140 = vmatprep.subr.mxu0 %v702
      %1141 = vmatpush1.msra.mxu0 %v701
      %1142 = vmatprep.subr.mxu0 %v698
      %1143 = vmatpush1.msra.mxu0 %v697
      %1144 = vmatprep.subr.mxu0 %v694
      %1145 = vmatpush1.msra.mxu0 %v693
      %1146 = vmatprep.subr.mxu0 %v690
      %1147 = vmatpush1.msra.mxu0 %v689
      %1148 = vmatprep.subr.mxu0 %v686
      %1149 = vmatpush1.msra.mxu0 %v685
      %1150 = vmatprep.subr.mxu0 %v682
      %1151 = vmatpush1.msra.mxu0 %v681
      %1152 = vmatprep.subr.mxu0 %v678
      %1153 = vmatpush1.msra.mxu0 %v677
      %1154 = vmatprep.subr.mxu0 %v674
      %1155 = vmatpush1.msra.mxu0 %v673
      %1156 = vmatprep.subr.mxu0 %v670
      %1157 = vmatpush1.msra.mxu0 %v669
      %1158 = vmatprep.subr.mxu0 %v666
      %1159 = vmatpush1.msra.mxu0 %v665
      %1160 = vmatprep.subr.mxu0 %v662
      %1161 = vmatpush1.msra.mxu0 %v661
      %1162 = vmatprep.subr.mxu0 0.0
      %1163 = vmatpush2.msra.mxu0 0.0
      %1164 = vmatprep.subr.mxu0 0.0
      %1165 = vmatpush2.msra.mxu0 0.0
      %1166 = vmatprep.subr.mxu0 0.0
      %1167 = vmatpush2.msra.mxu0 0.0
      %1168 = vmatprep.subr.mxu0 0.0
      %1169 = vmatpush2.msra.mxu0 0.0
      %1170 = vmatprep.subr.mxu0 0.0
      %1171 = vmatpush2.msra.mxu0 0.0
      %1172 = vmatprep.subr.mxu0 0.0
      %1173 = vmatpush2.msra.mxu0 0.0
      %1174 = vmatprep.subr.mxu0 0.0
      %1175 = vmatpush2.msra.mxu0 0.0
      %1176 = vmatprep.subr.mxu0 0.0
      %1177 = vmatpush2.msra.mxu0 0.0
      %1178 = vmatprep.subr.mxu0 0.0
      %1179 = vmatpush2.msra.mxu0 0.0
      %1180 = vmatprep.subr.mxu0 0.0
      %1181 = vmatpush2.msra.mxu0 0.0
      %1182 = vmatprep.subr.mxu0 0.0
      %1183 = vmatpush2.msra.mxu0 0.0
      %1184 = vmatprep.subr.mxu0 0.0
      %1185 = vmatpush2.msra.mxu0 0.0
      %1186 = vmatprep.subr.mxu0 0.0
      %1187 = vmatpush2.msra.mxu0 0.0
      %1188 = vmatprep.subr.mxu0 0.0
      %1189 = vmatpush2.msra.mxu0 0.0
      %1190 = vmatprep.subr.mxu0 0.0
      %1191 = vmatpush2.msra.mxu0 0.0
      %1192 = vmatprep.subr.mxu0 0.0
      %1193 = vmatpush2.msra.mxu0 0.0
      %1194 = vmatprep.mubr.f32.mxu0 0.0
      %1195 = vmatmul.mubr.f32.gmra.mxu0 %v397
      %v1196 = vpop.f32.mrf.mxu0
      %v1197 = vadd.f32 %v1120, %v1196
      %v1198 = vpop.f32.mrf.mxu0
      %v1199 = vadd.f32 %v1122, %v1198
      %1200 = vmatprep.mubr.f32.mxu0 0.0
      %1201 = vmatmul.mubr.f32.gmra.mxu0 %v402
      %v1202 = vpop.f32.mrf.mxu0
      %v1203 = vadd.f32 %v1126, %v1202
      %v1204 = vpop.f32.mrf.mxu0
      %v1205 = vadd.f32 %v1128, %v1204
      %1206 = vdwg.mxu0
      %v1207 = vmax.f32 %v966, 0.0
      %v1208 = vmax.f32 %v968, 0.0
      %v1209 = vmax.f32 %v1197, 0.0
      %v1210 = vmax.f32 %v1199, 0.0
      %v1211 = vmax.f32 %v972, 0.0
      %v1212 = vmax.f32 %v974, 0.0
      %v1213 = vmax.f32 %v1203, 0.0
      %v1214 = vmax.f32 %v1205, 0.0
      %v1215 = vld [vmem:[%s3] sm:$0xff]
      %v1216 = vld [vmem:[%s3 + $0x8] sm:$0xff]
      %v1217 = vld [vmem:[%s3 + $0x10] sm:$0xff]
      %v1218 = vld [vmem:[%s3 + $0x18] sm:$0xff]
      %v1219 = vld [vmem:[%s3 + $0x20] sm:$0xff]
      %v1220 = vld [vmem:[%s3 + $0x28] sm:$0xff]
      %v1221 = vld [vmem:[%s3 + $0x30] sm:$0xff]
      %v1222 = vld [vmem:[%s3 + $0x38] sm:$0xff]
      %v1223 = vld [vmem:[%s3 + $0x40] sm:$0xff]
      %v1224 = vld [vmem:[%s3 + $0x48] sm:$0xff]
      %v1225 = vld [vmem:[%s3 + $0x50] sm:$0xff]
      %v1226 = vld [vmem:[%s3 + $0x58] sm:$0xff]
      %v1227 = vld [vmem:[%s3 + $0x60] sm:$0xff]
      %v1228 = vld [vmem:[%s3 + $0x68] sm:$0xff]
      %v1229 = vld [vmem:[%s3 + $0x70] sm:$0xff]
      %v1230 = vld [vmem:[%s3 + $0x78] sm:$0xff]
      %v1231 = vld [vmem:[%s3 + $0x80] sm:$0xff]
      %v1232 = vld [vmem:[%s3 + $0x88] sm:$0xff]
      %v1233 = vld [vmem:[%s3 + $0x90] sm:$0xff]
      %v1234 = vld [vmem:[%s3 + $0x98] sm:$0xff]
      %v1235 = vld [vmem:[%s3 + $0xa0] sm:$0xff]
      %v1236 = vld [vmem:[%s3 + $0xa8] sm:$0xff]
      %v1237 = vld [vmem:[%s3 + $0xb0] sm:$0xff]
      %v1238 = vld [vmem:[%s3 + $0xb8] sm:$0xff]
      %v1239 = vld [vmem:[%s3 + $0xc0] sm:$0xff]
      %v1240 = vld [vmem:[%s3 + $0xc8] sm:$0xff]
      %v1241 = vld [vmem:[%s3 + $0xd0] sm:$0xff]
      %v1242 = vld [vmem:[%s3 + $0xd8] sm:$0xff]
      %v1243 = vld [vmem:[%s3 + $0xe0] sm:$0xff]
      %v1244 = vld [vmem:[%s3 + $0xe8] sm:$0xff]
      %v1245 = vld [vmem:[%s3 + $0xf0] sm:$0xff]
      %v1246 = vld [vmem:[%s3 + $0xf8] sm:$0xff]
      %v1247 = vld [vmem:[%s3 + $0x100] sm:$0xff]
      %v1248 = vld [vmem:[%s3 + $0x108] sm:$0xff]
      %v1249 = vld [vmem:[%s3 + $0x110] sm:$0xff]
      %v1250 = vld [vmem:[%s3 + $0x118] sm:$0xff]
      %v1251 = vld [vmem:[%s3 + $0x120] sm:$0xff]
      %v1252 = vld [vmem:[%s3 + $0x128] sm:$0xff]
      %v1253 = vld [vmem:[%s3 + $0x130] sm:$0xff]
      %v1254 = vld [vmem:[%s3 + $0x138] sm:$0xff]
      %v1255 = vld [vmem:[%s3 + $0x140] sm:$0xff]
      %v1256 = vld [vmem:[%s3 + $0x148] sm:$0xff]
      %v1257 = vld [vmem:[%s3 + $0x150] sm:$0xff]
      %v1258 = vld [vmem:[%s3 + $0x158] sm:$0xff]
      %v1259 = vld [vmem:[%s3 + $0x160] sm:$0xff]
      %v1260 = vld [vmem:[%s3 + $0x168] sm:$0xff]
      %v1261 = vld [vmem:[%s3 + $0x170] sm:$0xff]
      %v1262 = vld [vmem:[%s3 + $0x178] sm:$0xff]
      %v1263 = vld [vmem:[%s3 + $0x180] sm:$0xff]
      %v1264 = vld [vmem:[%s3 + $0x188] sm:$0xff]
      %v1265 = vld [vmem:[%s3 + $0x190] sm:$0xff]
      %v1266 = vld [vmem:[%s3 + $0x198] sm:$0xff]
      %v1267 = vld [vmem:[%s3 + $0x1a0] sm:$0xff]
      %v1268 = vld [vmem:[%s3 + $0x1a8] sm:$0xff]
      %v1269 = vld [vmem:[%s3 + $0x1b0] sm:$0xff]
      %v1270 = vld [vmem:[%s3 + $0x1b8] sm:$0xff]
      %v1271 = vld [vmem:[%s3 + $0x1c0] sm:$0xff]
      %v1272 = vld [vmem:[%s3 + $0x1c8] sm:$0xff]
      %v1273 = vld [vmem:[%s3 + $0x1d0] sm:$0xff]
      %v1274 = vld [vmem:[%s3 + $0x1d8] sm:$0xff]
      %v1275 = vld [vmem:[%s3 + $0x1e0] sm:$0xff]
      %v1276 = vld [vmem:[%s3 + $0x1e8] sm:$0xff]
      %v1277 = vld [vmem:[%s3 + $0x1f0] sm:$0xff]
      %v1278 = vld [vmem:[%s3 + $0x1f8] sm:$0xff]
      %v1279 = vld [vmem:[%s4] sm:$0x1]
      %v1281 = vlaneseq
      %v1282 = vshrl.u32 %v1281, 7
      %v1283 = vsub.s32 0, %v1282
      %v1284 = vrot.slane %v1279, %v1283
      %1286 = vmatprep.subr.mxu0 0.0
      %1287 = vmatpush1.msra.mxu0 %v1230
      %1288 = vmatprep.subr.mxu0 0.0
      %1289 = vmatpush1.msra.mxu0 %v1229
      %1290 = vmatprep.subr.mxu0 0.0
      %1291 = vmatpush1.msra.mxu0 %v1228
      %1292 = vmatprep.subr.mxu0 0.0
      %1293 = vmatpush1.msra.mxu0 %v1227
      %1294 = vmatprep.subr.mxu0 0.0
      %1295 = vmatpush1.msra.mxu0 %v1226
      %1296 = vmatprep.subr.mxu0 0.0
      %1297 = vmatpush1.msra.mxu0 %v1225
      %1298 = vmatprep.subr.mxu0 0.0
      %1299 = vmatpush1.msra.mxu0 %v1224
      %1300 = vmatprep.subr.mxu0 0.0
      %1301 = vmatpush1.msra.mxu0 %v1223
      %1302 = vmatprep.subr.mxu0 0.0
      %1303 = vmatpush1.msra.mxu0 %v1222
      %1304 = vmatprep.subr.mxu0 0.0
      %1305 = vmatpush1.msra.mxu0 %v1221
      %1306 = vmatprep.subr.mxu0 0.0
      %1307 = vmatpush1.msra.mxu0 %v1220
      %1308 = vmatprep.subr.mxu0 0.0
      %1309 = vmatpush1.msra.mxu0 %v1219
      %1310 = vmatprep.subr.mxu0 0.0
      %1311 = vmatpush1.msra.mxu0 %v1218
      %1312 = vmatprep.subr.mxu0 0.0
      %1313 = vmatpush1.msra.mxu0 %v1217
      %1314 = vmatprep.subr.mxu0 0.0
      %1315 = vmatpush1.msra.mxu0 %v1216
      %1316 = vmatprep.subr.mxu0 0.0
      %1317 = vmatpush1.msra.mxu0 %v1215
      %1318 = vmatprep.subr.mxu0 0.0
      %1319 = vmatpush2.msra.mxu0 %v1246
      %1320 = vmatprep.subr.mxu0 0.0
      %1321 = vmatpush2.msra.mxu0 %v1245
      %1322 = vmatprep.subr.mxu0 0.0
      %1323 = vmatpush2.msra.mxu0 %v1244
      %1324 = vmatprep.subr.mxu0 0.0
      %1325 = vmatpush2.msra.mxu0 %v1243
      %1326 = vmatprep.subr.mxu0 0.0
      %1327 = vmatpush2.msra.mxu0 %v1242
      %1328 = vmatprep.subr.mxu0 0.0
      %1329 = vmatpush2.msra.mxu0 %v1241
      %1330 = vmatprep.subr.mxu0 0.0
      %1331 = vmatpush2.msra.mxu0 %v1240
      %1332 = vmatprep.subr.mxu0 0.0
      %1333 = vmatpush2.msra.mxu0 %v1239
      %1334 = vmatprep.subr.mxu0 0.0
      %1335 = vmatpush2.msra.mxu0 %v1238
      %1336 = vmatprep.subr.mxu0 0.0
      %1337 = vmatpush2.msra.mxu0 %v1237
      %1338 = vmatprep.subr.mxu0 0.0
      %1339 = vmatpush2.msra.mxu0 %v1236
      %1340 = vmatprep.subr.mxu0 0.0
      %1341 = vmatpush2.msra.mxu0 %v1235
      %1342 = vmatprep.subr.mxu0 0.0
      %1343 = vmatpush2.msra.mxu0 %v1234
      %1344 = vmatprep.subr.mxu0 0.0
      %1345 = vmatpush2.msra.mxu0 %v1233
      %1346 = vmatprep.subr.mxu0 0.0
      %1347 = vmatpush2.msra.mxu0 %v1232
      %1348 = vmatprep.subr.mxu0 0.0
      %1349 = vmatpush2.msra.mxu0 %v1231
      %1350 = vmatprep.mubr.f32.mxu0 %v1208
      %1351 = vmatmul.mubr.f32.gmra.mxu0 %v1207
      %v1352 = vpop.f32.mrf.mxu0
      %v1353 = vadd.f32 %v1284, %v1352
      %v1354 = vpop.f32.mrf.mxu0
      %1355 = vmatprep.mubr.f32.mxu0 %v1212
      %1356 = vmatmul.mubr.f32.gmra.mxu0 %v1211
      %v1357 = vpop.f32.mrf.mxu0
      %v1358 = vadd.f32 %v1284, %v1357
      %v1359 = vpop.f32.mrf.mxu0
      %1360 = vdwg.mxu0
      %1361 = vmatprep.subr.mxu0 0.0
      %1362 = vmatpush1.msra.mxu0 %v1262
      %1363 = vmatprep.subr.mxu0 0.0
      %1364 = vmatpush1.msra.mxu0 %v1261
      %1365 = vmatprep.subr.mxu0 0.0
      %1366 = vmatpush1.msra.mxu0 %v1260
      %1367 = vmatprep.subr.mxu0 0.0
      %1368 = vmatpush1.msra.mxu0 %v1259
      %1369 = vmatprep.subr.mxu0 0.0
      %1370 = vmatpush1.msra.mxu0 %v1258
      %1371 = vmatprep.subr.mxu0 0.0
      %1372 = vmatpush1.msra.mxu0 %v1257
      %1373 = vmatprep.subr.mxu0 0.0
      %1374 = vmatpush1.msra.mxu0 %v1256
      %1375 = vmatprep.subr.mxu0 0.0
      %1376 = vmatpush1.msra.mxu0 %v1255
      %1377 = vmatprep.subr.mxu0 0.0
      %1378 = vmatpush1.msra.mxu0 %v1254
      %1379 = vmatprep.subr.mxu0 0.0
      %1380 = vmatpush1.msra.mxu0 %v1253
      %1381 = vmatprep.subr.mxu0 0.0
      %1382 = vmatpush1.msra.mxu0 %v1252
      %1383 = vmatprep.subr.mxu0 0.0
      %1384 = vmatpush1.msra.mxu0 %v1251
      %1385 = vmatprep.subr.mxu0 0.0
      %1386 = vmatpush1.msra.mxu0 %v1250
      %1387 = vmatprep.subr.mxu0 0.0
      %1388 = vmatpush1.msra.mxu0 %v1249
      %1389 = vmatprep.subr.mxu0 0.0
      %1390 = vmatpush1.msra.mxu0 %v1248
      %1391 = vmatprep.subr.mxu0 0.0
      %1392 = vmatpush1.msra.mxu0 %v1247
      %1393 = vmatprep.subr.mxu0 0.0
      %1394 = vmatpush2.msra.mxu0 %v1278
      %1395 = vmatprep.subr.mxu0 0.0
      %1396 = vmatpush2.msra.mxu0 %v1277
      %1397 = vmatprep.subr.mxu0 0.0
      %1398 = vmatpush2.msra.mxu0 %v1276
      %1399 = vmatprep.subr.mxu0 0.0
      %1400 = vmatpush2.msra.mxu0 %v1275
      %1401 = vmatprep.subr.mxu0 0.0
      %1402 = vmatpush2.msra.mxu0 %v1274
      %1403 = vmatprep.subr.mxu0 0.0
      %1404 = vmatpush2.msra.mxu0 %v1273
      %1405 = vmatprep.subr.mxu0 0.0
      %1406 = vmatpush2.msra.mxu0 %v1272
      %1407 = vmatprep.subr.mxu0 0.0
      %1408 = vmatpush2.msra.mxu0 %v1271
      %1409 = vmatprep.subr.mxu0 0.0
      %1410 = vmatpush2.msra.mxu0 %v1270
      %1411 = vmatprep.subr.mxu0 0.0
      %1412 = vmatpush2.msra.mxu0 %v1269
      %1413 = vmatprep.subr.mxu0 0.0
      %1414 = vmatpush2.msra.mxu0 %v1268
      %1415 = vmatprep.subr.mxu0 0.0
      %1416 = vmatpush2.msra.mxu0 %v1267
      %1417 = vmatprep.subr.mxu0 0.0
      %1418 = vmatpush2.msra.mxu0 %v1266
      %1419 = vmatprep.subr.mxu0 0.0
      %1420 = vmatpush2.msra.mxu0 %v1265
      %1421 = vmatprep.subr.mxu0 0.0
      %1422 = vmatpush2.msra.mxu0 %v1264
      %1423 = vmatprep.subr.mxu0 0.0
      %1424 = vmatpush2.msra.mxu0 %v1263
      %1425 = vmatprep.mubr.f32.mxu0 %v1210
      %1426 = vmatmul.mubr.f32.gmra.mxu0 %v1209
      %v1427 = vpop.f32.mrf.mxu0
      %v1428 = vadd.f32 %v1353, %v1427
      %v1429 = vpop.f32.mrf.mxu0
      %1430 = vmatprep.mubr.f32.mxu0 %v1214
      %1431 = vmatmul.mubr.f32.gmra.mxu0 %v1213
      %v1432 = vpop.f32.mrf.mxu0
      %v1433 = vadd.f32 %v1358, %v1432
      %v1434 = vpop.f32.mrf.mxu0
      %1435 = vdwg.mxu0
      %v1436 = vmax.f32 %v1428, 0.0
      %v1437 = vmax.f32 %v1433, 0.0
      %v1438 = vld [vmem:[%s5] sm:$0xff]
      %v1439 = vld [vmem:[%s5 + $0x8] sm:$0xff]
      %v1440 = vld [vmem:[%s6] sm:$0xff]
      %v1441 = vld [vmem:[%s6 + $0x8] sm:$0xff]
      %vm1442 = vcmask 130048
      %v1444 = vsel %vm1442, %v1438, 0
      %v1447 = vsel %vm1442, %v1439, 0
      %1449 = vmatprep.subr.mxu0 0.0
      %1450 = vmatpush1.msra.mxu0 0.0
      %1451 = vmatprep.subr.mxu0 0.0
      %1452 = vmatpush1.msra.mxu0 0.0
      %1453 = vmatprep.subr.mxu0 0.0
      %1454 = vmatpush1.msra.mxu0 0.0
      %1455 = vmatprep.subr.mxu0 0.0
      %1456 = vmatpush1.msra.mxu0 0.0
      %1457 = vmatprep.subr.mxu0 0.0
      %1458 = vmatpush1.msra.mxu0 0.0
      %1459 = vmatprep.subr.mxu0 0.0
      %1460 = vmatpush1.msra.mxu0 0.0
      %1461 = vmatprep.subr.mxu0 0.0
      %1462 = vmatpush1.msra.mxu0 0.0
      %1463 = vmatprep.subr.mxu0 0.0
      %1464 = vmatpush1.msra.mxu0 0.0
      %1465 = vmatprep.subr.mxu0 0.0
      %1466 = vmatpush1.msra.mxu0 0.0
      %1467 = vmatprep.subr.mxu0 0.0
      %1468 = vmatpush1.msra.mxu0 0.0
      %1469 = vmatprep.subr.mxu0 0.0
      %1470 = vmatpush1.msra.mxu0 0.0
      %1471 = vmatprep.subr.mxu0 0.0
      %1472 = vmatpush1.msra.mxu0 0.0
      %1473 = vmatprep.subr.mxu0 0.0
      %1474 = vmatpush1.msra.mxu0 0.0
      %1475 = vmatprep.subr.mxu0 0.0
      %1476 = vmatpush1.msra.mxu0 0.0
      %1477 = vmatprep.subr.mxu0 0.0
      %1478 = vmatpush1.msra.mxu0 %v1437
      %1479 = vmatprep.subr.mxu0 0.0
      %1480 = vmatpush1.msra.mxu0 %v1436
      %1481 = vmatprep.subr.mxu0 0.0
      %1482 = vmatpush2.msra.mxu0 0.0
      %1483 = vmatprep.subr.mxu0 0.0
      %1484 = vmatpush2.msra.mxu0 0.0
      %1485 = vmatprep.subr.mxu0 0.0
      %1486 = vmatpush2.msra.mxu0 0.0
      %1487 = vmatprep.subr.mxu0 0.0
      %1488 = vmatpush2.msra.mxu0 0.0
      %1489 = vmatprep.subr.mxu0 0.0
      %1490 = vmatpush2.msra.mxu0 0.0
      %1491 = vmatprep.subr.mxu0 0.0
      %1492 = vmatpush2.msra.mxu0 0.0
      %1493 = vmatprep.subr.mxu0 0.0
      %1494 = vmatpush2.msra.mxu0 0.0
      %1495 = vmatprep.subr.mxu0 0.0
      %1496 = vmatpush2.msra.mxu0 0.0
      %1497 = vmatprep.subr.mxu0 0.0
      %1498 = vmatpush2.msra.mxu0 0.0
      %1499 = vmatprep.subr.mxu0 0.0
      %1500 = vmatpush2.msra.mxu0 0.0
      %1501 = vmatprep.subr.mxu0 0.0
      %1502 = vmatpush2.msra.mxu0 0.0
      %1503 = vmatprep.subr.mxu0 0.0
      %1504 = vmatpush2.msra.mxu0 0.0
      %1505 = vmatprep.subr.mxu0 0.0
      %1506 = vmatpush2.msra.mxu0 0.0
      %1507 = vmatprep.subr.mxu0 0.0
      %1508 = vmatpush2.msra.mxu0 0.0
      %1509 = vmatprep.subr.mxu0 0.0
      %1510 = vmatpush2.msra.mxu0 0.0
      %1511 = vmatprep.subr.mxu0 0.0
      %1512 = vmatpush2.msra.mxu0 0.0
      %1513 = vmatprep.mubr.f32.mxu0 0.0
      %1514 = vmatmul.mubr.f32.gmra.mxu0 %v1444
      %v1515 = vpop.f32.mrf.mxu0
      %v1516 = vadd.f32 0.0, %v1515
      %v1517 = vpop.f32.mrf.mxu0
      %1518 = vmatprep.mubr.f32.mxu0 0.0
      %1519 = vmatmul.mubr.f32.gmra.mxu0 %v1447
      %v1520 = vpop.f32.mrf.mxu0
      %v1521 = vadd.f32 0.0, %v1520
      %v1522 = vpop.f32.mrf.mxu0
      %1523 = vdwg.mxu0
      %v1525 = vsel %vm1442, %v1440, 0
      %v1528 = vsel %vm1442, %v1441, 0
      %1530 = vmatprep.subr.mxu0 0.0
      %1531 = vmatpush1.msra.mxu0 0.0
      %1532 = vmatprep.subr.mxu0 0.0
      %1533 = vmatpush1.msra.mxu0 0.0
      %1534 = vmatprep.subr.mxu0 0.0
      %1535 = vmatpush1.msra.mxu0 0.0
      %1536 = vmatprep.subr.mxu0 0.0
      %1537 = vmatpush1.msra.mxu0 0.0
      %1538 = vmatprep.subr.mxu0 0.0
      %1539 = vmatpush1.msra.mxu0 0.0
      %1540 = vmatprep.subr.mxu0 0.0
      %1541 = vmatpush1.msra.mxu0 0.0
      %1542 = vmatprep.subr.mxu0 0.0
      %1543 = vmatpush1.msra.mxu0 0.0
      %1544 = vmatprep.subr.mxu0 0.0
      %1545 = vmatpush1.msra.mxu0 0.0
      %1546 = vmatprep.subr.mxu0 0.0
      %1547 = vmatpush1.msra.mxu0 0.0
      %1548 = vmatprep.subr.mxu0 0.0
      %1549 = vmatpush1.msra.mxu0 0.0
      %1550 = vmatprep.subr.mxu0 0.0
      %1551 = vmatpush1.msra.mxu0 0.0
      %1552 = vmatprep.subr.mxu0 0.0
      %1553 = vmatpush1.msra.mxu0 0.0
      %1554 = vmatprep.subr.mxu0 0.0
      %1555 = vmatpush1.msra.mxu0 0.0
      %1556 = vmatprep.subr.mxu0 0.0
      %1557 = vmatpush1.msra.mxu0 0.0
      %1558 = vmatprep.subr.mxu0 0.0
      %1559 = vmatpush1.msra.mxu0 %v1437
      %1560 = vmatprep.subr.mxu0 0.0
      %1561 = vmatpush1.msra.mxu0 %v1436
      %1562 = vmatprep.subr.mxu0 0.0
      %1563 = vmatpush2.msra.mxu0 0.0
      %1564 = vmatprep.subr.mxu0 0.0
      %1565 = vmatpush2.msra.mxu0 0.0
      %1566 = vmatprep.subr.mxu0 0.0
      %1567 = vmatpush2.msra.mxu0 0.0
      %1568 = vmatprep.subr.mxu0 0.0
      %1569 = vmatpush2.msra.mxu0 0.0
      %1570 = vmatprep.subr.mxu0 0.0
      %1571 = vmatpush2.msra.mxu0 0.0
      %1572 = vmatprep.subr.mxu0 0.0
      %1573 = vmatpush2.msra.mxu0 0.0
      %1574 = vmatprep.subr.mxu0 0.0
      %1575 = vmatpush2.msra.mxu0 0.0
      %1576 = vmatprep.subr.mxu0 0.0
      %1577 = vmatpush2.msra.mxu0 0.0
      %1578 = vmatprep.subr.mxu0 0.0
      %1579 = vmatpush2.msra.mxu0 0.0
      %1580 = vmatprep.subr.mxu0 0.0
      %1581 = vmatpush2.msra.mxu0 0.0
      %1582 = vmatprep.subr.mxu0 0.0
      %1583 = vmatpush2.msra.mxu0 0.0
      %1584 = vmatprep.subr.mxu0 0.0
      %1585 = vmatpush2.msra.mxu0 0.0
      %1586 = vmatprep.subr.mxu0 0.0
      %1587 = vmatpush2.msra.mxu0 0.0
      %1588 = vmatprep.subr.mxu0 0.0
      %1589 = vmatpush2.msra.mxu0 0.0
      %1590 = vmatprep.subr.mxu0 0.0
      %1591 = vmatpush2.msra.mxu0 0.0
      %1592 = vmatprep.subr.mxu0 0.0
      %1593 = vmatpush2.msra.mxu0 0.0
      %1594 = vmatprep.mubr.f32.mxu0 0.0
      %1595 = vmatmul.mubr.f32.gmra.mxu0 %v1525
      %v1596 = vpop.f32.mrf.mxu0
      %v1597 = vadd.f32 0.0, %v1596
      %v1598 = vpop.f32.mrf.mxu0
      %1599 = vmatprep.mubr.f32.mxu0 0.0
      %1600 = vmatmul.mubr.f32.gmra.mxu0 %v1528
      %v1601 = vpop.f32.mrf.mxu0
      %v1602 = vadd.f32 0.0, %v1601
      %v1603 = vpop.f32.mrf.mxu0
      %1604 = vdwg.mxu0
      %v1605 = vld [vmem:[%s7] sm:$0xff]
      %v1606 = vld [vmem:[%s7 + $0x8] sm:$0xff]
      %v1607 = vld [vmem:[%s7 + $0x10] sm:$0xff]
      %v1608 = vld [vmem:[%s7 + $0x18] sm:$0xff]
      %v1609 = vld [vmem:[%s7 + $0x20] sm:$0xff]
      %v1610 = vld [vmem:[%s7 + $0x28] sm:$0xff]
      %v1611 = vld [vmem:[%s7 + $0x30] sm:$0xff]
      %v1612 = vld [vmem:[%s7 + $0x38] sm:$0xff]
      %v1613 = vld [vmem:[%s7 + $0x40] sm:$0xff]
      %v1614 = vld [vmem:[%s7 + $0x48] sm:$0xff]
      %v1615 = vld [vmem:[%s7 + $0x50] sm:$0xff]
      %v1616 = vld [vmem:[%s7 + $0x58] sm:$0xff]
      %v1617 = vld [vmem:[%s7 + $0x60] sm:$0xff]
      %v1618 = vld [vmem:[%s7 + $0x68] sm:$0xff]
      %v1619 = vld [vmem:[%s7 + $0x70] sm:$0xff]
      %v1620 = vld [vmem:[%s7 + $0x78] sm:$0xff]
      %v1621 = vld [vmem:[%s7 + $0x80] sm:$0xff]
      %v1622 = vld [vmem:[%s7 + $0x88] sm:$0xff]
      %v1623 = vld [vmem:[%s7 + $0x90] sm:$0xff]
      %v1624 = vld [vmem:[%s7 + $0x98] sm:$0xff]
      %v1625 = vld [vmem:[%s7 + $0xa0] sm:$0xff]
      %v1626 = vld [vmem:[%s7 + $0xa8] sm:$0xff]
      %v1627 = vld [vmem:[%s7 + $0xb0] sm:$0xff]
      %v1628 = vld [vmem:[%s7 + $0xb8] sm:$0xff]
      %v1629 = vld [vmem:[%s7 + $0xc0] sm:$0xff]
      %v1630 = vld [vmem:[%s7 + $0xc8] sm:$0xff]
      %v1631 = vld [vmem:[%s7 + $0xd0] sm:$0xff]
      %v1632 = vld [vmem:[%s7 + $0xd8] sm:$0xff]
      %v1633 = vld [vmem:[%s7 + $0xe0] sm:$0xff]
      %v1634 = vld [vmem:[%s7 + $0xe8] sm:$0xff]
      %v1635 = vld [vmem:[%s7 + $0xf0] sm:$0xff]
      %v1636 = vld [vmem:[%s7 + $0xf8] sm:$0xff]
      %v1637 = vld [vmem:[%s7 + $0x100] sm:$0xff]
      %v1638 = vld [vmem:[%s7 + $0x108] sm:$0xff]
      %v1639 = vld [vmem:[%s7 + $0x110] sm:$0xff]
      %v1640 = vld [vmem:[%s7 + $0x118] sm:$0xff]
      %v1641 = vld [vmem:[%s7 + $0x120] sm:$0xff]
      %v1642 = vld [vmem:[%s7 + $0x128] sm:$0xff]
      %v1643 = vld [vmem:[%s7 + $0x130] sm:$0xff]
      %v1644 = vld [vmem:[%s7 + $0x138] sm:$0xff]
      %v1645 = vld [vmem:[%s7 + $0x140] sm:$0xff]
      %v1646 = vld [vmem:[%s7 + $0x148] sm:$0xff]
      %v1647 = vld [vmem:[%s7 + $0x150] sm:$0xff]
      %v1648 = vld [vmem:[%s7 + $0x158] sm:$0xff]
      %v1649 = vld [vmem:[%s7 + $0x160] sm:$0xff]
      %v1650 = vld [vmem:[%s7 + $0x168] sm:$0xff]
      %v1651 = vld [vmem:[%s7 + $0x170] sm:$0xff]
      %v1652 = vld [vmem:[%s7 + $0x178] sm:$0xff]
      %v1653 = vld [vmem:[%s8] sm:$0x1]
      %v1655 = vlaneseq
      %v1656 = vshrl.u32 %v1655, 7
      %v1657 = vsub.s32 0, %v1656
      %v1658 = vrot.slane %v1653, %v1657
      %1660 = vmatprep.subr.mxu0 0.0
      %1661 = vmatpush1.msra.mxu0 %v1620
      %1662 = vmatprep.subr.mxu0 0.0
      %1663 = vmatpush1.msra.mxu0 %v1619
      %1664 = vmatprep.subr.mxu0 0.0
      %1665 = vmatpush1.msra.mxu0 %v1618
      %1666 = vmatprep.subr.mxu0 0.0
      %1667 = vmatpush1.msra.mxu0 %v1617
      %1668 = vmatprep.subr.mxu0 0.0
      %1669 = vmatpush1.msra.mxu0 %v1616
      %1670 = vmatprep.subr.mxu0 0.0
      %1671 = vmatpush1.msra.mxu0 %v1615
      %1672 = vmatprep.subr.mxu0 0.0
      %1673 = vmatpush1.msra.mxu0 %v1614
      %1674 = vmatprep.subr.mxu0 0.0
      %1675 = vmatpush1.msra.mxu0 %v1613
      %1676 = vmatprep.subr.mxu0 0.0
      %1677 = vmatpush1.msra.mxu0 %v1612
      %1678 = vmatprep.subr.mxu0 0.0
      %1679 = vmatpush1.msra.mxu0 %v1611
      %1680 = vmatprep.subr.mxu0 0.0
      %1681 = vmatpush1.msra.mxu0 %v1610
      %1682 = vmatprep.subr.mxu0 0.0
      %1683 = vmatpush1.msra.mxu0 %v1609
      %1684 = vmatprep.subr.mxu0 0.0
      %1685 = vmatpush1.msra.mxu0 %v1608
      %1686 = vmatprep.subr.mxu0 0.0
      %1687 = vmatpush1.msra.mxu0 %v1607
      %1688 = vmatprep.subr.mxu0 0.0
      %1689 = vmatpush1.msra.mxu0 %v1606
      %1690 = vmatprep.subr.mxu0 0.0
      %1691 = vmatpush1.msra.mxu0 %v1605
      %1692 = vmatprep.subr.mxu0 0.0
      %1693 = vmatpush2.msra.mxu0 %v1636
      %1694 = vmatprep.subr.mxu0 0.0
      %1695 = vmatpush2.msra.mxu0 %v1635
      %1696 = vmatprep.subr.mxu0 0.0
      %1697 = vmatpush2.msra.mxu0 %v1634
      %1698 = vmatprep.subr.mxu0 0.0
      %1699 = vmatpush2.msra.mxu0 %v1633
      %1700 = vmatprep.subr.mxu0 0.0
      %1701 = vmatpush2.msra.mxu0 %v1632
      %1702 = vmatprep.subr.mxu0 0.0
      %1703 = vmatpush2.msra.mxu0 %v1631
      %1704 = vmatprep.subr.mxu0 0.0
      %1705 = vmatpush2.msra.mxu0 %v1630
      %1706 = vmatprep.subr.mxu0 0.0
      %1707 = vmatpush2.msra.mxu0 %v1629
      %1708 = vmatprep.subr.mxu0 0.0
      %1709 = vmatpush2.msra.mxu0 %v1628
      %1710 = vmatprep.subr.mxu0 0.0
      %1711 = vmatpush2.msra.mxu0 %v1627
      %1712 = vmatprep.subr.mxu0 0.0
      %1713 = vmatpush2.msra.mxu0 %v1626
      %1714 = vmatprep.subr.mxu0 0.0
      %1715 = vmatpush2.msra.mxu0 %v1625
      %1716 = vmatprep.subr.mxu0 0.0
      %1717 = vmatpush2.msra.mxu0 %v1624
      %1718 = vmatprep.subr.mxu0 0.0
      %1719 = vmatpush2.msra.mxu0 %v1623
      %1720 = vmatprep.subr.mxu0 0.0
      %1721 = vmatpush2.msra.mxu0 %v1622
      %1722 = vmatprep.subr.mxu0 0.0
      %1723 = vmatpush2.msra.mxu0 %v1621
      %1724 = vmatprep.mubr.f32.mxu0 %v1436
      %1725 = vmatmul.mubr.f32.gmra.mxu0 %v1516
      %v1726 = vpop.f32.mrf.mxu0
      %v1727 = vadd.f32 %v1658, %v1726
      %v1728 = vpop.f32.mrf.mxu0
      %1729 = vmatprep.mubr.f32.mxu0 %v1437
      %1730 = vmatmul.mubr.f32.gmra.mxu0 %v1521
      %v1731 = vpop.f32.mrf.mxu0
      %v1732 = vadd.f32 %v1658, %v1731
      %v1733 = vpop.f32.mrf.mxu0
      %1734 = vdwg.mxu0
      %1735 = vmatprep.subr.mxu0 0.0
      %1736 = vmatpush1.msra.mxu0 %v1652
      %1737 = vmatprep.subr.mxu0 0.0
      %1738 = vmatpush1.msra.mxu0 %v1651
      %1739 = vmatprep.subr.mxu0 0.0
      %1740 = vmatpush1.msra.mxu0 %v1650
      %1741 = vmatprep.subr.mxu0 0.0
      %1742 = vmatpush1.msra.mxu0 %v1649
      %1743 = vmatprep.subr.mxu0 0.0
      %1744 = vmatpush1.msra.mxu0 %v1648
      %1745 = vmatprep.subr.mxu0 0.0
      %1746 = vmatpush1.msra.mxu0 %v1647
      %1747 = vmatprep.subr.mxu0 0.0
      %1748 = vmatpush1.msra.mxu0 %v1646
      %1749 = vmatprep.subr.mxu0 0.0
      %1750 = vmatpush1.msra.mxu0 %v1645
      %1751 = vmatprep.subr.mxu0 0.0
      %1752 = vmatpush1.msra.mxu0 %v1644
      %1753 = vmatprep.subr.mxu0 0.0
      %1754 = vmatpush1.msra.mxu0 %v1643
      %1755 = vmatprep.subr.mxu0 0.0
      %1756 = vmatpush1.msra.mxu0 %v1642
      %1757 = vmatprep.subr.mxu0 0.0
      %1758 = vmatpush1.msra.mxu0 %v1641
      %1759 = vmatprep.subr.mxu0 0.0
      %1760 = vmatpush1.msra.mxu0 %v1640
      %1761 = vmatprep.subr.mxu0 0.0
      %1762 = vmatpush1.msra.mxu0 %v1639
      %1763 = vmatprep.subr.mxu0 0.0
      %1764 = vmatpush1.msra.mxu0 %v1638
      %1765 = vmatprep.subr.mxu0 0.0
      %1766 = vmatpush1.msra.mxu0 %v1637
      %1767 = vmatprep.subr.mxu0 0.0
      %1768 = vmatpush2.msra.mxu0 0.0
      %1769 = vmatprep.subr.mxu0 0.0
      %1770 = vmatpush2.msra.mxu0 0.0
      %1771 = vmatprep.subr.mxu0 0.0
      %1772 = vmatpush2.msra.mxu0 0.0
      %1773 = vmatprep.subr.mxu0 0.0
      %1774 = vmatpush2.msra.mxu0 0.0
      %1775 = vmatprep.subr.mxu0 0.0
      %1776 = vmatpush2.msra.mxu0 0.0
      %1777 = vmatprep.subr.mxu0 0.0
      %1778 = vmatpush2.msra.mxu0 0.0
      %1779 = vmatprep.subr.mxu0 0.0
      %1780 = vmatpush2.msra.mxu0 0.0
      %1781 = vmatprep.subr.mxu0 0.0
      %1782 = vmatpush2.msra.mxu0 0.0
      %1783 = vmatprep.subr.mxu0 0.0
      %1784 = vmatpush2.msra.mxu0 0.0
      %1785 = vmatprep.subr.mxu0 0.0
      %1786 = vmatpush2.msra.mxu0 0.0
      %1787 = vmatprep.subr.mxu0 0.0
      %1788 = vmatpush2.msra.mxu0 0.0
      %1789 = vmatprep.subr.mxu0 0.0
      %1790 = vmatpush2.msra.mxu0 0.0
      %1791 = vmatprep.subr.mxu0 0.0
      %1792 = vmatpush2.msra.mxu0 0.0
      %1793 = vmatprep.subr.mxu0 0.0
      %1794 = vmatpush2.msra.mxu0 0.0
      %1795 = vmatprep.subr.mxu0 0.0
      %1796 = vmatpush2.msra.mxu0 0.0
      %1797 = vmatprep.subr.mxu0 0.0
      %1798 = vmatpush2.msra.mxu0 0.0
      %1799 = vmatprep.mubr.f32.mxu0 0.0
      %1800 = vmatmul.mubr.f32.gmra.mxu0 %v1597
      %v1801 = vpop.f32.mrf.mxu0
      %v1802 = vadd.f32 %v1727, %v1801
      %v1803 = vpop.f32.mrf.mxu0
      %1804 = vmatprep.mubr.f32.mxu0 0.0
      %1805 = vmatmul.mubr.f32.gmra.mxu0 %v1602
      %v1806 = vpop.f32.mrf.mxu0
      %v1807 = vadd.f32 %v1732, %v1806
      %v1808 = vpop.f32.mrf.mxu0
      %1809 = vdwg.mxu0
      %v1810 = vadd.f32 %v1802, %v1436
      %v1811 = vadd.f32 %v1807, %v1437
      %v1812 = vmax.f32 %v1810, 0.0
      %v1813 = vmax.f32 %v1811, 0.0
      %1814 = vmatprep.subr.mxu0 0.0
      %1815 = vmatpush1.msra.mxu0 0.0
      %1816 = vmatprep.subr.mxu0 0.0
      %1817 = vmatpush1.msra.mxu0 0.0
      %1818 = vmatprep.subr.mxu0 0.0
      %1819 = vmatpush1.msra.mxu0 0.0
      %1820 = vmatprep.subr.mxu0 0.0
      %1821 = vmatpush1.msra.mxu0 0.0
      %1822 = vmatprep.subr.mxu0 0.0
      %1823 = vmatpush1.msra.mxu0 0.0
      %1824 = vmatprep.subr.mxu0 0.0
      %1825 = vmatpush1.msra.mxu0 0.0
      %1826 = vmatprep.subr.mxu0 0.0
      %1827 = vmatpush1.msra.mxu0 0.0
      %1828 = vmatprep.subr.mxu0 0.0
      %1829 = vmatpush1.msra.mxu0 0.0
      %1830 = vmatprep.subr.mxu0 0.0
      %1831 = vmatpush1.msra.mxu0 0.0
      %1832 = vmatprep.subr.mxu0 0.0
      %1833 = vmatpush1.msra.mxu0 0.0
      %1834 = vmatprep.subr.mxu0 0.0
      %1835 = vmatpush1.msra.mxu0 0.0
      %1836 = vmatprep.subr.mxu0 0.0
      %1837 = vmatpush1.msra.mxu0 0.0
      %1838 = vmatprep.subr.mxu0 0.0
      %1839 = vmatpush1.msra.mxu0 0.0
      %1840 = vmatprep.subr.mxu0 0.0
      %1841 = vmatpush1.msra.mxu0 0.0
      %1842 = vmatprep.subr.mxu0 0.0
      %1843 = vmatpush1.msra.mxu0 %v1813
      %1844 = vmatprep.subr.mxu0 0.0
      %1845 = vmatpush1.msra.mxu0 %v1812
      %1846 = vmatprep.subr.mxu0 0.0
      %1847 = vmatpush2.msra.mxu0 0.0
      %1848 = vmatprep.subr.mxu0 0.0
      %1849 = vmatpush2.msra.mxu0 0.0
      %1850 = vmatprep.subr.mxu0 0.0
      %1851 = vmatpush2.msra.mxu0 0.0
      %1852 = vmatprep.subr.mxu0 0.0
      %1853 = vmatpush2.msra.mxu0 0.0
      %1854 = vmatprep.subr.mxu0 0.0
      %1855 = vmatpush2.msra.mxu0 0.0
      %1856 = vmatprep.subr.mxu0 0.0
      %1857 = vmatpush2.msra.mxu0 0.0
      %1858 = vmatprep.subr.mxu0 0.0
      %1859 = vmatpush2.msra.mxu0 0.0
      %1860 = vmatprep.subr.mxu0 0.0
      %1861 = vmatpush2.msra.mxu0 0.0
      %1862 = vmatprep.subr.mxu0 0.0
      %1863 = vmatpush2.msra.mxu0 0.0
      %1864 = vmatprep.subr.mxu0 0.0
      %1865 = vmatpush2.msra.mxu0 0.0
      %1866 = vmatprep.subr.mxu0 0.0
      %1867 = vmatpush2.msra.mxu0 0.0
      %1868 = vmatprep.subr.mxu0 0.0
      %1869 = vmatpush2.msra.mxu0 0.0
      %1870 = vmatprep.subr.mxu0 0.0
      %1871 = vmatpush2.msra.mxu0 0.0
      %1872 = vmatprep.subr.mxu0 0.0
      %1873 = vmatpush2.msra.mxu0 0.0
      %1874 = vmatprep.subr.mxu0 0.0
      %1875 = vmatpush2.msra.mxu0 0.0
      %1876 = vmatprep.subr.mxu0 0.0
      %1877 = vmatpush2.msra.mxu0 0.0
      %1878 = vmatprep.mubr.f32.mxu0 0.0
      %1879 = vmatmul.mubr.f32.gmra.mxu0 %v1444
      %v1880 = vpop.f32.mrf.mxu0
      %v1881 = vadd.f32 0.0, %v1880
      %v1882 = vpop.f32.mrf.mxu0
      %1883 = vmatprep.mubr.f32.mxu0 0.0
      %1884 = vmatmul.mubr.f32.gmra.mxu0 %v1447
      %v1885 = vpop.f32.mrf.mxu0
      %v1886 = vadd.f32 0.0, %v1885
      %v1887 = vpop.f32.mrf.mxu0
      %1888 = vdwg.mxu0
      %1889 = vmatprep.subr.mxu0 0.0
      %1890 = vmatpush1.msra.mxu0 0.0
      %1891 = vmatprep.subr.mxu0 0.0
      %1892 = vmatpush1.msra.mxu0 0.0
      %1893 = vmatprep.subr.mxu0 0.0
      %1894 = vmatpush1.msra.mxu0 0.0
      %1895 = vmatprep.subr.mxu0 0.0
      %1896 = vmatpush1.msra.mxu0 0.0
      %1897 = vmatprep.subr.mxu0 0.0
      %1898 = vmatpush1.msra.mxu0 0.0
      %1899 = vmatprep.subr.mxu0 0.0
      %1900 = vmatpush1.msra.mxu0 0.0
      %1901 = vmatprep.subr.mxu0 0.0
      %1902 = vmatpush1.msra.mxu0 0.0
      %1903 = vmatprep.subr.mxu0 0.0
      %1904 = vmatpush1.msra.mxu0 0.0
      %1905 = vmatprep.subr.mxu0 0.0
      %1906 = vmatpush1.msra.mxu0 0.0
      %1907 = vmatprep.subr.mxu0 0.0
      %1908 = vmatpush1.msra.mxu0 0.0
      %1909 = vmatprep.subr.mxu0 0.0
      %1910 = vmatpush1.msra.mxu0 0.0
      %1911 = vmatprep.subr.mxu0 0.0
      %1912 = vmatpush1.msra.mxu0 0.0
      %1913 = vmatprep.subr.mxu0 0.0
      %1914 = vmatpush1.msra.mxu0 0.0
      %1915 = vmatprep.subr.mxu0 0.0
      %1916 = vmatpush1.msra.mxu0 0.0
      %1917 = vmatprep.subr.mxu0 0.0
      %1918 = vmatpush1.msra.mxu0 %v1813
      %1919 = vmatprep.subr.mxu0 0.0
      %1920 = vmatpush1.msra.mxu0 %v1812
      %1921 = vmatprep.subr.mxu0 0.0
      %1922 = vmatpush2.msra.mxu0 0.0
      %1923 = vmatprep.subr.mxu0 0.0
      %1924 = vmatpush2.msra.mxu0 0.0
      %1925 = vmatprep.subr.mxu0 0.0
      %1926 = vmatpush2.msra.mxu0 0.0
      %1927 = vmatprep.subr.mxu0 0.0
      %1928 = vmatpush2.msra.mxu0 0.0
      %1929 = vmatprep.subr.mxu0 0.0
      %1930 = vmatpush2.msra.mxu0 0.0
      %1931 = vmatprep.subr.mxu0 0.0
      %1932 = vmatpush2.msra.mxu0 0.0
      %1933 = vmatprep.subr.mxu0 0.0
      %1934 = vmatpush2.msra.mxu0 0.0
      %1935 = vmatprep.subr.mxu0 0.0
      %1936 = vmatpush2.msra.mxu0 0.0
      %1937 = vmatprep.subr.mxu0 0.0
      %1938 = vmatpush2.msra.mxu0 0.0
      %1939 = vmatprep.subr.mxu0 0.0
      %1940 = vmatpush2.msra.mxu0 0.0
      %1941 = vmatprep.subr.mxu0 0.0
      %1942 = vmatpush2.msra.mxu0 0.0
      %1943 = vmatprep.subr.mxu0 0.0
      %1944 = vmatpush2.msra.mxu0 0.0
      %1945 = vmatprep.subr.mxu0 0.0
      %1946 = vmatpush2.msra.mxu0 0.0
      %1947 = vmatprep.subr.mxu0 0.0
      %1948 = vmatpush2.msra.mxu0 0.0
      %1949 = vmatprep.subr.mxu0 0.0
      %1950 = vmatpush2.msra.mxu0 0.0
      %1951 = vmatprep.subr.mxu0 0.0
      %1952 = vmatpush2.msra.mxu0 0.0
      %1953 = vmatprep.mubr.f32.mxu0 0.0
      %1954 = vmatmul.mubr.f32.gmra.mxu0 %v1525
      %v1955 = vpop.f32.mrf.mxu0
      %v1956 = vadd.f32 0.0, %v1955
      %v1957 = vpop.f32.mrf.mxu0
      %1958 = vmatprep.mubr.f32.mxu0 0.0
      %1959 = vmatmul.mubr.f32.gmra.mxu0 %v1528
      %v1960 = vpop.f32.mrf.mxu0
      %v1961 = vadd.f32 0.0, %v1960
      %v1962 = vpop.f32.mrf.mxu0
      %1963 = vdwg.mxu0
      %v1964 = vld [vmem:[%s9] sm:$0xff]
      %v1965 = vld [vmem:[%s9 + $0x8] sm:$0xff]
      %v1966 = vld [vmem:[%s9 + $0x10] sm:$0xff]
      %v1967 = vld [vmem:[%s9 + $0x18] sm:$0xff]
      %v1968 = vld [vmem:[%s9 + $0x20] sm:$0xff]
      %v1969 = vld [vmem:[%s9 + $0x28] sm:$0xff]
      %v1970 = vld [vmem:[%s9 + $0x30] sm:$0xff]
      %v1971 = vld [vmem:[%s9 + $0x38] sm:$0xff]
      %v1972 = vld [vmem:[%s9 + $0x40] sm:$0xff]
      %v1973 = vld [vmem:[%s9 + $0x48] sm:$0xff]
      %v1974 = vld [vmem:[%s9 + $0x50] sm:$0xff]
      %v1975 = vld [vmem:[%s9 + $0x58] sm:$0xff]
      %v1976 = vld [vmem:[%s9 + $0x60] sm:$0xff]
      %v1977 = vld [vmem:[%s9 + $0x68] sm:$0xff]
      %v1978 = vld [vmem:[%s9 + $0x70] sm:$0xff]
      %v1979 = vld [vmem:[%s9 + $0x78] sm:$0xff]
      %v1980 = vld [vmem:[%s9 + $0x80] sm:$0xff]
      %v1981 = vld [vmem:[%s9 + $0x88] sm:$0xff]
      %v1982 = vld [vmem:[%s9 + $0x90] sm:$0xff]
      %v1983 = vld [vmem:[%s9 + $0x98] sm:$0xff]
      %v1984 = vld [vmem:[%s9 + $0xa0] sm:$0xff]
      %v1985 = vld [vmem:[%s9 + $0xa8] sm:$0xff]
      %v1986 = vld [vmem:[%s9 + $0xb0] sm:$0xff]
      %v1987 = vld [vmem:[%s9 + $0xb8] sm:$0xff]
      %v1988 = vld [vmem:[%s9 + $0xc0] sm:$0xff]
      %v1989 = vld [vmem:[%s9 + $0xc8] sm:$0xff]
      %v1990 = vld [vmem:[%s9 + $0xd0] sm:$0xff]
      %v1991 = vld [vmem:[%s9 + $0xd8] sm:$0xff]
      %v1992 = vld [vmem:[%s9 + $0xe0] sm:$0xff]
      %v1993 = vld [vmem:[%s9 + $0xe8] sm:$0xff]
      %v1994 = vld [vmem:[%s9 + $0xf0] sm:$0xff]
      %v1995 = vld [vmem:[%s9 + $0xf8] sm:$0xff]
      %v1996 = vld [vmem:[%s9 + $0x100] sm:$0xff]
      %v1997 = vld [vmem:[%s9 + $0x108] sm:$0xff]
      %v1998 = vld [vmem:[%s9 + $0x110] sm:$0xff]
      %v1999 = vld [vmem:[%s9 + $0x118] sm:$0xff]
      %v2000 = vld [vmem:[%s9 + $0x120] sm:$0xff]
      %v2001 = vld [vmem:[%s9 + $0x128] sm:$0xff]
      %v2002 = vld [vmem:[%s9 + $0x130] sm:$0xff]
      %v2003 = vld [vmem:[%s9 + $0x138] sm:$0xff]
      %v2004 = vld [vmem:[%s9 + $0x140] sm:$0xff]
      %v2005 = vld [vmem:[%s9 + $0x148] sm:$0xff]
      %v2006 = vld [vmem:[%s9 + $0x150] sm:$0xff]
      %v2007 = vld [vmem:[%s9 + $0x158] sm:$0xff]
      %v2008 = vld [vmem:[%s9 + $0x160] sm:$0xff]
      %v2009 = vld [vmem:[%s9 + $0x168] sm:$0xff]
      %v2010 = vld [vmem:[%s9 + $0x170] sm:$0xff]
      %v2011 = vld [vmem:[%s9 + $0x178] sm:$0xff]
      %v2012 = vld [vmem:[%s10] sm:$0x1]
      %v2014 = vlaneseq
      %v2015 = vshrl.u32 %v2014, 7
      %v2016 = vsub.s32 0, %v2015
      %v2017 = vrot.slane %v2012, %v2016
      %2019 = vmatprep.subr.mxu0 0.0
      %2020 = vmatpush1.msra.mxu0 %v1979
      %2021 = vmatprep.subr.mxu0 0.0
      %2022 = vmatpush1.msra.mxu0 %v1978
      %2023 = vmatprep.subr.mxu0 0.0
      %2024 = vmatpush1.msra.mxu0 %v1977
      %2025 = vmatprep.subr.mxu0 0.0
      %2026 = vmatpush1.msra.mxu0 %v1976
      %2027 = vmatprep.subr.mxu0 0.0
      %2028 = vmatpush1.msra.mxu0 %v1975
      %2029 = vmatprep.subr.mxu0 0.0
      %2030 = vmatpush1.msra.mxu0 %v1974
      %2031 = vmatprep.subr.mxu0 0.0
      %2032 = vmatpush1.msra.mxu0 %v1973
      %2033 = vmatprep.subr.mxu0 0.0
      %2034 = vmatpush1.msra.mxu0 %v1972
      %2035 = vmatprep.subr.mxu0 0.0
      %2036 = vmatpush1.msra.mxu0 %v1971
      %2037 = vmatprep.subr.mxu0 0.0
      %2038 = vmatpush1.msra.mxu0 %v1970
      %2039 = vmatprep.subr.mxu0 0.0
      %2040 = vmatpush1.msra.mxu0 %v1969
      %2041 = vmatprep.subr.mxu0 0.0
      %2042 = vmatpush1.msra.mxu0 %v1968
      %2043 = vmatprep.subr.mxu0 0.0
      %2044 = vmatpush1.msra.mxu0 %v1967
      %2045 = vmatprep.subr.mxu0 0.0
      %2046 = vmatpush1.msra.mxu0 %v1966
      %2047 = vmatprep.subr.mxu0 0.0
      %2048 = vmatpush1.msra.mxu0 %v1965
      %2049 = vmatprep.subr.mxu0 0.0
      %2050 = vmatpush1.msra.mxu0 %v1964
      %2051 = vmatprep.subr.mxu0 0.0
      %2052 = vmatpush2.msra.mxu0 %v1995
      %2053 = vmatprep.subr.mxu0 0.0
      %2054 = vmatpush2.msra.mxu0 %v1994
      %2055 = vmatprep.subr.mxu0 0.0
      %2056 = vmatpush2.msra.mxu0 %v1993
      %2057 = vmatprep.subr.mxu0 0.0
      %2058 = vmatpush2.msra.mxu0 %v1992
      %2059 = vmatprep.subr.mxu0 0.0
      %2060 = vmatpush2.msra.mxu0 %v1991
      %2061 = vmatprep.subr.mxu0 0.0
      %2062 = vmatpush2.msra.mxu0 %v1990
      %2063 = vmatprep.subr.mxu0 0.0
      %2064 = vmatpush2.msra.mxu0 %v1989
      %2065 = vmatprep.subr.mxu0 0.0
      %2066 = vmatpush2.msra.mxu0 %v1988
      %2067 = vmatprep.subr.mxu0 0.0
      %2068 = vmatpush2.msra.mxu0 %v1987
      %2069 = vmatprep.subr.mxu0 0.0
      %2070 = vmatpush2.msra.mxu0 %v1986
      %2071 = vmatprep.subr.mxu0 0.0
      %2072 = vmatpush2.msra.mxu0 %v1985
      %2073 = vmatprep.subr.mxu0 0.0
      %2074 = vmatpush2.msra.mxu0 %v1984
      %2075 = vmatprep.subr.mxu0 0.0
      %2076 = vmatpush2.msra.mxu0 %v1983
      %2077 = vmatprep.subr.mxu0 0.0
      %2078 = vmatpush2.msra.mxu0 %v1982
      %2079 = vmatprep.subr.mxu0 0.0
      %2080 = vmatpush2.msra.mxu0 %v1981
      %2081 = vmatprep.subr.mxu0 0.0
      %2082 = vmatpush2.msra.mxu0 %v1980
      %2083 = vmatprep.mubr.f32.mxu0 %v1812
      %2084 = vmatmul.mubr.f32.gmra.mxu0 %v1881
      %v2085 = vpop.f32.mrf.mxu0
      %v2086 = vadd.f32 %v2017, %v2085
      %v2087 = vpop.f32.mrf.mxu0
      %2088 = vmatprep.mubr.f32.mxu0 %v1813
      %2089 = vmatmul.mubr.f32.gmra.mxu0 %v1886
      %v2090 = vpop.f32.mrf.mxu0
      %v2091 = vadd.f32 %v2017, %v2090
      %v2092 = vpop.f32.mrf.mxu0
      %2093 = vdwg.mxu0
      %2094 = vmatprep.subr.mxu0 0.0
      %2095 = vmatpush1.msra.mxu0 %v2011
      %2096 = vmatprep.subr.mxu0 0.0
      %2097 = vmatpush1.msra.mxu0 %v2010
      %2098 = vmatprep.subr.mxu0 0.0
      %2099 = vmatpush1.msra.mxu0 %v2009
      %2100 = vmatprep.subr.mxu0 0.0
      %2101 = vmatpush1.msra.mxu0 %v2008
      %2102 = vmatprep.subr.mxu0 0.0
      %2103 = vmatpush1.msra.mxu0 %v2007
      %2104 = vmatprep.subr.mxu0 0.0
      %2105 = vmatpush1.msra.mxu0 %v2006
      %2106 = vmatprep.subr.mxu0 0.0
      %2107 = vmatpush1.msra.mxu0 %v2005
      %2108 = vmatprep.subr.mxu0 0.0
      %2109 = vmatpush1.msra.mxu0 %v2004
      %2110 = vmatprep.subr.mxu0 0.0
      %2111 = vmatpush1.msra.mxu0 %v2003
      %2112 = vmatprep.subr.mxu0 0.0
      %2113 = vmatpush1.msra.mxu0 %v2002
      %2114 = vmatprep.subr.mxu0 0.0
      %2115 = vmatpush1.msra.mxu0 %v2001
      %2116 = vmatprep.subr.mxu0 0.0
      %2117 = vmatpush1.msra.mxu0 %v2000
      %2118 = vmatprep.subr.mxu0 0.0
      %2119 = vmatpush1.msra.mxu0 %v1999
      %2120 = vmatprep.subr.mxu0 0.0
      %2121 = vmatpush1.msra.mxu0 %v1998
      %2122 = vmatprep.subr.mxu0 0.0
      %2123 = vmatpush1.msra.mxu0 %v1997
      %2124 = vmatprep.subr.mxu0 0.0
      %2125 = vmatpush1.msra.mxu0 %v1996
      %2126 = vmatprep.subr.mxu0 0.0
      %2127 = vmatpush2.msra.mxu0 0.0
      %2128 = vmatprep.subr.mxu0 0.0
      %2129 = vmatpush2.msra.mxu0 0.0
      %2130 = vmatprep.subr.mxu0 0.0
      %2131 = vmatpush2.msra.mxu0 0.0
      %2132 = vmatprep.subr.mxu0 0.0
      %2133 = vmatpush2.msra.mxu0 0.0
      %2134 = vmatprep.subr.mxu0 0.0
      %2135 = vmatpush2.msra.mxu0 0.0
      %2136 = vmatprep.subr.mxu0 0.0
      %2137 = vmatpush2.msra.mxu0 0.0
      %2138 = vmatprep.subr.mxu0 0.0
      %2139 = vmatpush2.msra.mxu0 0.0
      %2140 = vmatprep.subr.mxu0 0.0
      %2141 = vmatpush2.msra.mxu0 0.0
      %2142 = vmatprep.subr.mxu0 0.0
      %2143 = vmatpush2.msra.mxu0 0.0
      %2144 = vmatprep.subr.mxu0 0.0
      %2145 = vmatpush2.msra.mxu0 0.0
      %2146 = vmatprep.subr.mxu0 0.0
      %2147 = vmatpush2.msra.mxu0 0.0
      %2148 = vmatprep.subr.mxu0 0.0
      %2149 = vmatpush2.msra.mxu0 0.0
      %2150 = vmatprep.subr.mxu0 0.0
      %2151 = vmatpush2.msra.mxu0 0.0
      %2152 = vmatprep.subr.mxu0 0.0
      %2153 = vmatpush2.msra.mxu0 0.0
      %2154 = vmatprep.subr.mxu0 0.0
      %2155 = vmatpush2.msra.mxu0 0.0
      %2156 = vmatprep.subr.mxu0 0.0
      %2157 = vmatpush2.msra.mxu0 0.0
      %2158 = vmatprep.mubr.f32.mxu0 0.0
      %2159 = vmatmul.mubr.f32.gmra.mxu0 %v1956
      %v2160 = vpop.f32.mrf.mxu0
      %v2161 = vadd.f32 %v2086, %v2160
      %v2162 = vpop.f32.mrf.mxu0
      %2163 = vmatprep.mubr.f32.mxu0 0.0
      %2164 = vmatmul.mubr.f32.gmra.mxu0 %v1961
      %v2165 = vpop.f32.mrf.mxu0
      %v2166 = vadd.f32 %v2091, %v2165
      %v2167 = vpop.f32.mrf.mxu0
      %2168 = vdwg.mxu0
      %v2169 = vadd.f32 %v2161, %v1812
      %v2170 = vadd.f32 %v2166, %v1813
      %v2171 = vadd.f32 %v2169, %v1436
      %v2172 = vadd.f32 %v2170, %v1437
      %v2173 = vmax.f32 %v2171, 0.0
      %v2174 = vmax.f32 %v2172, 0.0
      %2175 = vst [vmem:[%s391] sm:$0xff] %v2173
      %2176 = vst [vmem:[%s391 + $0x8] sm:$0xff] %v2174
      %s2177 = smul.u32 2, %s22
      %p2178 = scmp.lt.s32.totalorder %s2177, 3
      %s2179 = scalar_select %p2178, %s2177, 3
      %s2180 = smul.addr %s2179, 8
      %s2181 = scalar_lea.vmem %s11, %s2180
      // Predicated region
      $region65: #{mfa_forward.1} parent=63 // pred_check
        %p2182 = pneg %p276
      $region66: #{mfa_forward.1} parent=63 // pred_check_branch
        %2184 = sbr.rel (%p2182) target = $region68
      $region67: #{mfa_forward.1} parent=63 // pred_region
        %s2185 = smul.u32 2, %s22
      $region68: #{mfa_forward.1} parent=63 // pred_fallthru
        _
    $region64: #{mfa_forward.1} parent=5 // pred_fallthru
      _
    %p2186 = scmp.le.s32.totalorder 2, %s17
    // Predicated region
    $region69: #{mfa_forward.1} parent=5 // pred_check
      %p2187 = pneg %p2186
    $region70: #{mfa_forward.1} parent=5 // pred_check_branch
      %2189 = sbr.rel (%p2187) target = $region72
    $region71: #{mfa_forward.1} parent=5 // pred_region
      %s2190 = ssub.s32 %s17, 2
      // Predicated region
      $region73: #{mfa_forward.1} parent=71 // pred_check
        %p2191 = pneg %p282
      $region74: #{mfa_forward.1} parent=71 // pred_check_branch
        %2193 = sbr.rel (%p2191) target = $region76
      $region75: #{mfa_forward.1} parent=71 // pred_region
        %s2194 = smul.u32 2, %s23
        %p2195 = scmp.lt.s32.totalorder %s2194, 3
        %s2196 = scalar_select %p2195, %s2194, 3
        %s2197 = smul.addr %s2196, 8
        %s2198 = scalar_lea.vmem %s11, %s2197
      $region76: #{mfa_forward.1} parent=71 // pred_fallthru
        _
    $region72: #{mfa_forward.1} parent=5 // pred_fallthru
      _
  $region6: #{mfa_forward.1} parent=0 // loop_footer
    %s21 = sadd.s32 1, %s17
  $region7: #{mfa_forward.1} parent=0 // loop_footer_branch
    %16 = sbr.rel target = $region3
  $region8: #{mfa_forward.1} parent=0 // loop_exit
    _

</llo_original>
